<compile_context>
chip_gen: v5e
topology: v5e:2x2
jax: 0.10.0
libtpu: 0.0.40
codegen_flags: <defaults>
</compile_context>

<pallas_src>
import functools

import jax
import jax.numpy as jnp
import numpy as np
from jax.experimental import pallas as pl
from jax.experimental.pallas import tpu as pltpu

BN_EPS = 1e-5


# ---------------------------------------------------------------------------
# The single fused Pallas kernel: all of layer2 for `p` images per grid step
# ---------------------------------------------------------------------------
def _layer2_kernel(p1_ref, w1_ref, b1_ref, w2_ref, b2_ref, w3_ref, b3_ref,
                   w4_ref, b4_ref, o_ref, *, p, hh, ww, c):
    m = p * hh * ww

    # Width-boundary masks for the rolled taps; hoisted (built once, reused 6x).
    w_ids = jax.lax.broadcasted_iota(jnp.int32, (p, hh + 2, ww, c), 2)
    not_w0 = (w_ids != 0).astype(jnp.float32)        # zero the wrapped w == 0 row
    not_wl = (w_ids != ww - 1).astype(jnp.float32)   # zero the wrapped w == ww-1 row
    zrow = jnp.zeros((p, 1, ww, c), jnp.float32)

    def conv3x3(act, w_ref, b_ref):
        """3x3 / stride-1 / pad-1 conv (+ folded-BN bias) as ONE MXU dot.

        act: (m, c) f32 with rows ordered (img, h, w).  The 9 taps come from an
        h-padded copy plus two width-rolled copies (XLU sublane rolls + boundary
        masks); every slice / reshape / concat below is (8,128)-tile aligned, so
        there are no relayout copies.  Taps are concatenated along lanes into an
        (m, 9c) slab and contracted in a single K = 9c matmul (K accumulation
        stays inside the MXU instead of 8 VPU adds + 9 result-FIFO pops).
        """
        a4 = act.reshape(p, hh, ww, c)                          # layout-preserving
        cen = jnp.concatenate([zrow, a4, zrow], axis=1)         # h-pad (leading dim)
        lft = pltpu.roll(cen, shift=1, axis=2) * not_w0         # value at w-1
        rgt = pltpu.roll(cen, shift=ww - 1, axis=2) * not_wl    # value at w+1
        shift = (lft, cen, rgt)                                 # indexed by kw
        slab = jnp.concatenate(
            [shift[kw][:, kh:kh + hh].reshape(m, c)             # leading-dim slices
             for kh in range(3) for kw in range(3)],
            axis=-1).astype(jnp.bfloat16)                       # (m, 9c), cast once
        return jnp.dot(slab, w_ref[...],
                       preferred_element_type=jnp.float32) + b_ref[...]

    # --- Block 0, conv1 (3x3 stride-2) fused with the 1x1 stride-2 downsample:
    #     a single 256-wide matmul over the same stride-2 patches.
    y = jnp.dot(p1_ref[...], w1_ref[...],
                preferred_element_type=jnp.float32) + b1_ref[...]
    y1 = jnp.maximum(y[:, :c], 0.0)      # conv1 -> BN -> ReLU
    identity = y[:, c:]                  # downsample -> BN (no ReLU)

    # --- Block 0, conv2 + BN + residual + ReLU
    out0 = jnp.maximum(conv3x3(y1, w2_ref, b2_ref) + identity, 0.0)
    # --- Block 1, conv1 + BN + ReLU
    z1 = jnp.maximum(conv3x3(out0, w3_ref, b3_ref), 0.0)
    # --- Block 1, conv2 + BN + residual + ReLU
    out1 = jnp.maximum(conv3x3(z1, w4_ref, b4_ref) + out0, 0.0)

    o_ref[...] = out1.astype(o_ref.dtype)


def _layer2_pallas(p1, w1m, b1m, w2, b2, w3, b3, w4, b4, *, n, hh, ww, c, ipb):
    m_img = hh * ww
    m = ipb * m_img                       # matmul M per grid step
    k1 = p1.shape[1]
    kernel = functools.partial(_layer2_kernel, p=ipb, hh=hh, ww=ww, c=c)
    return pl.pallas_call(
        kernel,
        out_shape=jax.ShapeDtypeStruct((n * m_img, c), jnp.float32),
        grid=(n // ipb,),
        in_specs=[
            pl.BlockSpec((m, k1), lambda i: (i, 0)),        # conv1 stride-2 patches
            pl.BlockSpec((k1, 2 * c), lambda i: (0, 0)),    # merged conv1+downsample W
            pl.BlockSpec((1, 2 * c), lambda i: (0, 0)),     # merged folded-BN bias
            pl.BlockSpec((9 * c, c), lambda i: (0, 0)),     # b0 conv2 (9c, c) weights
            pl.BlockSpec((1, c), lambda i: (0, 0)),
            pl.BlockSpec((9 * c, c), lambda i: (0, 0)),     # b1 conv1 (9c, c) weights
            pl.BlockSpec((1, c), lambda i: (0, 0)),
            pl.BlockSpec((9 * c, c), lambda i: (0, 0)),     # b1 conv2 (9c, c) weights
            pl.BlockSpec((1, c), lambda i: (0, 0)),
        ],
        out_specs=pl.BlockSpec((m, c), lambda i: (i, 0)),   # lane-dense (c=128) output
        compiler_params=pltpu.CompilerParams(
            dimension_semantics=("parallel",)),             # image-group axis
    )(p1, w1m, b1m, w2, b2, w3, b3, w4, b4)


# ---------------------------------------------------------------------------
# Trace-time parameter preparation (BN folding into weights / bias)
# ---------------------------------------------------------------------------
def fold_bn(gamma, beta, mean, var):
    scale = gamma / jnp.sqrt(var + BN_EPS)
    bias = beta - mean * scale
    return scale, bias


def _conv_w_to_2d(w_oihw, scale):
    """(Cout,Cin,3,3) -> (9*Cin, Cout) with BN scale folded; K order = (kh, kw, cin)."""
    cout = w_oihw.shape[0]
    w = jnp.transpose(w_oihw, (2, 3, 1, 0)).reshape(-1, cout)
    return w * scale[None, :]


# ---------------------------------------------------------------------------
# Forward pass == FeatureExtractorModified.forward (returns layer2(x))
# ---------------------------------------------------------------------------
def feature_extractor_modified(x_nchw, params):
    # layer3/layer4 are computed-but-unused in the PyTorch forward; omitting them
    # leaves the returned value identical.
    x = jnp.transpose(x_nchw, (0, 2, 3, 1)).astype(jnp.float32)   # NCHW -> NHWC
    n, h, w, cin = x.shape
    ho, wo, c = h // 2, w // 2, 128

    # Images per grid step: fill MXU rows on the single-TC v5e/v6e (M = ipb*64);
    # for large n the grid keeps >1 step so v7x's two TensorCores both get work.
    ipb = 1
    for cand in (4, 2):
        if n % cand == 0:
            ipb = cand
            break

    # Fold BN (eval mode) into per-channel weight scale + bias.
    s1, b1 = fold_bn(*params["b0_bn1"])
    sd, bd = fold_bn(*params["b0_bnd"])
    s2, b2 = fold_bn(*params["b0_bn2"])
    s3, b3 = fold_bn(*params["b1_bn1"])
    s4, b4 = fold_bn(*params["b1_bn2"])

    # conv1 weight merged with the 1x1-stride-2 downsample (exact: its samples equal
    # the centre tap of a 3x3/stride-2/pad-1 conv), BN scale folded in, bf16.
    w1_2d = _conv_w_to_2d(params["b0_w1"], s1)                    # (9*cin, 128)
    wd = params["b0_wd"][:, :, 0, 0]                              # (128, cin)
    wd_3x3 = jnp.zeros((3, 3, cin, c), jnp.float32).at[1, 1].set(wd.T)
    wd_2d = wd_3x3.reshape(9 * cin, c) * sd[None, :]
    w1m = jnp.concatenate([w1_2d, wd_2d], axis=1).astype(jnp.bfloat16)   # (9*cin, 256)
    b1m = jnp.concatenate([b1, bd]).reshape(1, 2 * c).astype(jnp.float32)

    # 3x3 conv weights as (9*c, c) slabs (K order (kh, kw, cin) matches the in-kernel
    # im2col slab), BN scale folded, bf16 for the MXU.
    w2t = _conv_w_to_2d(params["b0_w2"], s2).astype(jnp.bfloat16)
    w3t = _conv_w_to_2d(params["b1_w1"], s3).astype(jnp.bfloat16)
    w4t = _conv_w_to_2d(params["b1_w2"], s4).astype(jnp.bfloat16)
    b2r = b2.reshape(1, c).astype(jnp.float32)
    b3r = b3.reshape(1, c).astype(jnp.float32)
    b4r = b4.reshape(1, c).astype(jnp.float32)

    # im2col only for the single stride-2 conv1: pad + strided slices + lane-dense
    # concat; XLA fuses this into one fusion (~144 KiB) feeding the fused kernel.
    xp = jnp.pad(x, ((0, 0), (1, 1), (1, 1), (0, 0)))
    cols = [xp[:, kh:kh + 2 * ho - 1:2, kw:kw + 2 * wo - 1:2, :]
            for kh in range(3) for kw in range(3)]
    p1 = jnp.concatenate(cols, axis=-1).reshape(n * ho * wo, 9 * cin)
    p1 = p1.astype(jnp.bfloat16)

    out = _layer2_pallas(p1, w1m, b1m, w2t, b2r, w3t, b3r, w4t, b4r,
                         n=n, hh=ho, ww=wo, c=c, ipb=ipb)
    out = out.reshape(n, ho, wo, c)
    return jnp.transpose(out, (0, 3, 1, 2))                       # NHWC -> NCHW


# ---------------------------------------------------------------------------
# Deterministic parameter init (ResNet18 layer2 shapes)
# ---------------------------------------------------------------------------
def init_layer2_params(key):
    ks = list(jax.random.split(key, 32))
    idx = [0]

    def nxt():
        k = ks[idx[0]]
        idx[0] += 1
        return k

    def conv(cout, cin, k):
        return jax.random.normal(nxt(), (cout, cin, k, k), jnp.float32) * 0.05

    def bn(ch):
        g = 1.0 + 0.1 * jax.random.normal(nxt(), (ch,), jnp.float32)
        b = 0.1 * jax.random.normal(nxt(), (ch,), jnp.float32)
        m = 0.1 * jax.random.normal(nxt(), (ch,), jnp.float32)
        v = jnp.abs(1.0 + 0.1 * jax.random.normal(nxt(), (ch,), jnp.float32))
        return g, b, m, v

    p = {}
    # BasicBlock 0 (64 -> 128, stride 2, 1x1 downsample)
    p["b0_w1"] = conv(128, 64, 3);   p["b0_bn1"] = bn(128)
    p["b0_w2"] = conv(128, 128, 3);  p["b0_bn2"] = bn(128)
    p["b0_wd"] = conv(128, 64, 1);   p["b0_bnd"] = bn(128)
    # BasicBlock 1 (128 -> 128, stride 1)
    p["b1_w1"] = conv(128, 128, 3);  p["b1_bn1"] = bn(128)
    p["b1_w2"] = conv(128, 128, 3);  p["b1_bn2"] = bn(128)
    return p


# ---------------------------------------------------------------------------
# Pure-JAX reference (lax conv) for correctness check
# ---------------------------------------------------------------------------
def _ref_conv_bn(x, w_oihw, bn, stride, pad, relu):
    w_hwio = jnp.transpose(w_oihw, (2, 3, 1, 0))
    y = jax.lax.conv_general_dilated(
        x, w_hwio, (stride, stride), [(pad, pad), (pad, pad)],
        dimension_numbers=("NHWC", "HWIO", "NHWC"))
    s, b = fold_bn(*bn)
    y = y * s + b
    return jnp.maximum(y, 0.0) if relu else y


def reference(x_nchw, p):
    x = jnp.transpose(x_nchw, (0, 2, 3, 1)).astype(jnp.float32)
    y1 = _ref_conv_bn(x, p["b0_w1"], p["b0_bn1"], 2, 1, True)
    idn = _ref_conv_bn(x, p["b0_wd"], p["b0_bnd"], 2, 0, False)
    out0 = jnp.maximum(_ref_conv_bn(y1, p["b0_w2"], p["b0_bn2"], 1, 1, False) + idn, 0.0)
    z1 = _ref_conv_bn(out0, p["b1_w1"], p["b1_bn1"], 1, 1, True)
    out1 = jnp.maximum(_ref_conv_bn(z1, p["b1_w2"], p["b1_bn2"], 1, 1, False) + out0, 0.0)
    return jnp.transpose(out1, (0, 3, 1, 2))


if __name__ == "__main__":
    key = jax.random.PRNGKey(0)
    kx, kp = jax.random.split(key)
    # x is the ResNet18 layer1 output feeding layer2: NCHW, 64 channels.
    x = jax.random.normal(kx, (2, 64, 16, 16), jnp.float32)
    params = init_layer2_params(kp)

    out = jax.jit(feature_extractor_modified)(x, params)
    out = jax.block_until_ready(out)
    assert out.shape == (2, 128, 8, 8), out.shape

    ref = reference(x, params)
    np.testing.assert_allclose(np.asarray(out), np.asarray(ref), rtol=5e-2, atol=5e-2)
    print("KERNEL_OK")
</pallas_src>

<mosaic_0001>
module attributes {stable_mosaic.version = 11 : i64} {
  func.func @_layer2_kernel(%arg0: i32, %arg1: memref<128x576xbf16, #tpu.memory_space<vmem>>, %arg2: memref<576x256xbf16, #tpu.memory_space<vmem>>, %arg3: memref<1x256xf32, #tpu.memory_space<vmem>>, %arg4: memref<1152x128xbf16, #tpu.memory_space<vmem>>, %arg5: memref<1x128xf32, #tpu.memory_space<vmem>>, %arg6: memref<1152x128xbf16, #tpu.memory_space<vmem>>, %arg7: memref<1x128xf32, #tpu.memory_space<vmem>>, %arg8: memref<1152x128xbf16, #tpu.memory_space<vmem>>, %arg9: memref<1x128xf32, #tpu.memory_space<vmem>>, %arg10: memref<128x128xf32, #tpu.memory_space<vmem>>) attributes {dimension_semantics = [#tpu.dimension_semantics<parallel>], iteration_bounds = array<i64: 1>, scalar_prefetch = 0 : i64, scratch_operands = 0 : i64, tpu.core_type = #tpu.core_type<tc>, window_params = [{transform_indices = @transform_0, window_bounds = array<i64: 128, 576>}, {pipeline_mode = #tpu.pipeline_mode<synchronous>, transform_indices = @transform_1, window_bounds = array<i64: 576, 256>}, {pipeline_mode = #tpu.pipeline_mode<synchronous>, transform_indices = @transform_2, window_bounds = array<i64: 1, 256>}, {pipeline_mode = #tpu.pipeline_mode<synchronous>, transform_indices = @transform_3, window_bounds = array<i64: 1152, 128>}, {pipeline_mode = #tpu.pipeline_mode<synchronous>, transform_indices = @transform_4, window_bounds = array<i64: 1, 128>}, {pipeline_mode = #tpu.pipeline_mode<synchronous>, transform_indices = @transform_5, window_bounds = array<i64: 1152, 128>}, {pipeline_mode = #tpu.pipeline_mode<synchronous>, transform_indices = @transform_6, window_bounds = array<i64: 1, 128>}, {pipeline_mode = #tpu.pipeline_mode<synchronous>, transform_indices = @transform_7, window_bounds = array<i64: 1152, 128>}, {pipeline_mode = #tpu.pipeline_mode<synchronous>, transform_indices = @transform_8, window_bounds = array<i64: 1, 128>}, {transform_indices = @transform_9, window_bounds = array<i64: 128, 128>}]} {
    %0 = tpu.iota {dimensions = array<i32: 2>} : vector<2x10x8x128xi32>
    %c0_i32 = arith.constant 0 : i32
    %1 = vector.broadcast %c0_i32 : i32 to vector<2x10x8x128xi32>
    %2 = arith.cmpi ne, %0, %1 : vector<2x10x8x128xi32>
    %3 = arith.extui %2 : vector<2x10x8x128xi1> to vector<2x10x8x128xi32>
    %4 = arith.sitofp %3 : vector<2x10x8x128xi32> to vector<2x10x8x128xf32>
    %c7_i32 = arith.constant 7 : i32
    %5 = vector.broadcast %c7_i32 : i32 to vector<2x10x8x128xi32>
    %6 = arith.cmpi ne, %0, %5 : vector<2x10x8x128xi32>
    %7 = arith.extui %6 : vector<2x10x8x128xi1> to vector<2x10x8x128xi32>
    %8 = arith.sitofp %7 : vector<2x10x8x128xi32> to vector<2x10x8x128xf32>
    %cst = arith.constant 0.000000e+00 : f32
    %9 = vector.broadcast %cst : f32 to vector<2x1x8x128xf32>
    %c0 = arith.constant 0 : index
    %c0_0 = arith.constant 0 : index
    %10 = vector.load %arg1[%c0, %c0_0] : memref<128x576xbf16, #tpu.memory_space<vmem>>, vector<128x576xbf16>
    %c0_1 = arith.constant 0 : index
    %c0_2 = arith.constant 0 : index
    %11 = vector.load %arg2[%c0_1, %c0_2] : memref<576x256xbf16, #tpu.memory_space<vmem>>, vector<576x256xbf16>
    %cst_3 = arith.constant dense<0.000000e+00> : vector<128x256xf32>
    %12 = tpu.matmul %10, %11, %cst_3 {dimension_numbers = #tpu.dot_dimension_numbers<[1], [0], [0], [1], [0, 0, 1, 1], [], []>} : vector<128x576xbf16>, vector<576x256xbf16>, vector<128x256xf32> -> vector<128x256xf32>
    %c0_4 = arith.constant 0 : index
    %c0_5 = arith.constant 0 : index
    %13 = vector.load %arg3[%c0_4, %c0_5] : memref<1x256xf32, #tpu.memory_space<vmem>>, vector<1x256xf32>
    %14 = vector.broadcast %13 : vector<1x256xf32> to vector<128x256xf32>
    %15 = arith.addf %12, %14 : vector<128x256xf32>
    %16 = vector.extract_strided_slice %15 {offsets = [0, 0], sizes = [128, 128], strides = [1, 1]} : vector<128x256xf32> to vector<128x128xf32>
    %cst_6 = arith.constant 0.000000e+00 : f32
    %17 = vector.broadcast %cst_6 : f32 to vector<128x128xf32>
    %18 = arith.maximumf %16, %17 : vector<128x128xf32>
    %19 = vector.extract_strided_slice %15 {offsets = [0, 128], sizes = [128, 128], strides = [1, 1]} : vector<128x256xf32> to vector<128x128xf32>
    %20 = vector.shape_cast %18 : vector<128x128xf32> to vector<2x8x8x128xf32>
    %21 = tpu.concatenate %9, %20, %9 in 1 : vector<2x1x8x128xf32>, vector<2x8x8x128xf32>, vector<2x1x8x128xf32> -> vector<2x10x8x128xf32>
    %c1_i32 = arith.constant 1 : i32
    %22 = tpu.dynamic_rotate %21 by %c1_i32 dim 2 : vector<2x10x8x128xf32>, i32 -> vector<2x10x8x128xf32>
    %23 = arith.mulf %22, %4 : vector<2x10x8x128xf32>
    %c7_i32_7 = arith.constant 7 : i32
    %24 = tpu.dynamic_rotate %21 by %c7_i32_7 dim 2 : vector<2x10x8x128xf32>, i32 -> vector<2x10x8x128xf32>
    %25 = arith.mulf %24, %8 : vector<2x10x8x128xf32>
    %26 = vector.extract_strided_slice %23 {offsets = [0, 0, 0, 0], sizes = [2, 8, 8, 128], strides = [1, 1, 1, 1]} : vector<2x10x8x128xf32> to vector<2x8x8x128xf32>
    %27 = vector.shape_cast %26 : vector<2x8x8x128xf32> to vector<128x128xf32>
    %28 = vector.extract_strided_slice %21 {offsets = [0, 0, 0, 0], sizes = [2, 8, 8, 128], strides = [1, 1, 1, 1]} : vector<2x10x8x128xf32> to vector<2x8x8x128xf32>
    %29 = vector.shape_cast %28 : vector<2x8x8x128xf32> to vector<128x128xf32>
    %30 = vector.extract_strided_slice %25 {offsets = [0, 0, 0, 0], sizes = [2, 8, 8, 128], strides = [1, 1, 1, 1]} : vector<2x10x8x128xf32> to vector<2x8x8x128xf32>
    %31 = vector.shape_cast %30 : vector<2x8x8x128xf32> to vector<128x128xf32>
    %32 = vector.extract_strided_slice %23 {offsets = [0, 1, 0, 0], sizes = [2, 8, 8, 128], strides = [1, 1, 1, 1]} : vector<2x10x8x128xf32> to vector<2x8x8x128xf32>
    %33 = vector.shape_cast %32 : vector<2x8x8x128xf32> to vector<128x128xf32>
    %34 = vector.extract_strided_slice %21 {offsets = [0, 1, 0, 0], sizes = [2, 8, 8, 128], strides = [1, 1, 1, 1]} : vector<2x10x8x128xf32> to vector<2x8x8x128xf32>
    %35 = vector.shape_cast %34 : vector<2x8x8x128xf32> to vector<128x128xf32>
    %36 = vector.extract_strided_slice %25 {offsets = [0, 1, 0, 0], sizes = [2, 8, 8, 128], strides = [1, 1, 1, 1]} : vector<2x10x8x128xf32> to vector<2x8x8x128xf32>
    %37 = vector.shape_cast %36 : vector<2x8x8x128xf32> to vector<128x128xf32>
    %38 = vector.extract_strided_slice %23 {offsets = [0, 2, 0, 0], sizes = [2, 8, 8, 128], strides = [1, 1, 1, 1]} : vector<2x10x8x128xf32> to vector<2x8x8x128xf32>
    %39 = vector.shape_cast %38 : vector<2x8x8x128xf32> to vector<128x128xf32>
    %40 = vector.extract_strided_slice %21 {offsets = [0, 2, 0, 0], sizes = [2, 8, 8, 128], strides = [1, 1, 1, 1]} : vector<2x10x8x128xf32> to vector<2x8x8x128xf32>
    %41 = vector.shape_cast %40 : vector<2x8x8x128xf32> to vector<128x128xf32>
    %42 = vector.extract_strided_slice %25 {offsets = [0, 2, 0, 0], sizes = [2, 8, 8, 128], strides = [1, 1, 1, 1]} : vector<2x10x8x128xf32> to vector<2x8x8x128xf32>
    %43 = vector.shape_cast %42 : vector<2x8x8x128xf32> to vector<128x128xf32>
    %44 = tpu.concatenate %27, %29, %31, %33, %35, %37, %39, %41, %43 in 1 : vector<128x128xf32>, vector<128x128xf32>, vector<128x128xf32>, vector<128x128xf32>, vector<128x128xf32>, vector<128x128xf32>, vector<128x128xf32>, vector<128x128xf32>, vector<128x128xf32> -> vector<128x1152xf32>
    %45 = arith.truncf %44 : vector<128x1152xf32> to vector<128x1152xbf16>
    %c0_8 = arith.constant 0 : index
    %c0_9 = arith.constant 0 : index
    %46 = vector.load %arg4[%c0_8, %c0_9] : memref<1152x128xbf16, #tpu.memory_space<vmem>>, vector<1152x128xbf16>
    %cst_10 = arith.constant dense<0.000000e+00> : vector<128x128xf32>
    %47 = tpu.matmul %45, %46, %cst_10 {dimension_numbers = #tpu.dot_dimension_numbers<[1], [0], [0], [1], [0, 0, 1, 1], [], []>} : vector<128x1152xbf16>, vector<1152x128xbf16>, vector<128x128xf32> -> vector<128x128xf32>
    %c0_11 = arith.constant 0 : index
    %c0_12 = arith.constant 0 : index
    %48 = vector.load %arg5[%c0_11, %c0_12] : memref<1x128xf32, #tpu.memory_space<vmem>>, vector<1x128xf32>
    %49 = vector.broadcast %48 : vector<1x128xf32> to vector<128x128xf32>
    %50 = arith.addf %47, %49 : vector<128x128xf32>
    %51 = arith.addf %50, %19 : vector<128x128xf32>
    %cst_13 = arith.constant 0.000000e+00 : f32
    %52 = vector.broadcast %cst_13 : f32 to vector<128x128xf32>
    %53 = arith.maximumf %51, %52 : vector<128x128xf32>
    %54 = vector.shape_cast %53 : vector<128x128xf32> to vector<2x8x8x128xf32>
    %55 = tpu.concatenate %9, %54, %9 in 1 : vector<2x1x8x128xf32>, vector<2x8x8x128xf32>, vector<2x1x8x128xf32> -> vector<2x10x8x128xf32>
    %c1_i32_14 = arith.constant 1 : i32
    %56 = tpu.dynamic_rotate %55 by %c1_i32_14 dim 2 : vector<2x10x8x128xf32>, i32 -> vector<2x10x8x128xf32>
    %57 = arith.mulf %56, %4 : vector<2x10x8x128xf32>
    %c7_i32_15 = arith.constant 7 : i32
    %58 = tpu.dynamic_rotate %55 by %c7_i32_15 dim 2 : vector<2x10x8x128xf32>, i32 -> vector<2x10x8x128xf32>
    %59 = arith.mulf %58, %8 : vector<2x10x8x128xf32>
    %60 = vector.extract_strided_slice %57 {offsets = [0, 0, 0, 0], sizes = [2, 8, 8, 128], strides = [1, 1, 1, 1]} : vector<2x10x8x128xf32> to vector<2x8x8x128xf32>
    %61 = vector.shape_cast %60 : vector<2x8x8x128xf32> to vector<128x128xf32>
    %62 = vector.extract_strided_slice %55 {offsets = [0, 0, 0, 0], sizes = [2, 8, 8, 128], strides = [1, 1, 1, 1]} : vector<2x10x8x128xf32> to vector<2x8x8x128xf32>
    %63 = vector.shape_cast %62 : vector<2x8x8x128xf32> to vector<128x128xf32>
    %64 = vector.extract_strided_slice %59 {offsets = [0, 0, 0, 0], sizes = [2, 8, 8, 128], strides = [1, 1, 1, 1]} : vector<2x10x8x128xf32> to vector<2x8x8x128xf32>
    %65 = vector.shape_cast %64 : vector<2x8x8x128xf32> to vector<128x128xf32>
    %66 = vector.extract_strided_slice %57 {offsets = [0, 1, 0, 0], sizes = [2, 8, 8, 128], strides = [1, 1, 1, 1]} : vector<2x10x8x128xf32> to vector<2x8x8x128xf32>
    %67 = vector.shape_cast %66 : vector<2x8x8x128xf32> to vector<128x128xf32>
    %68 = vector.extract_strided_slice %55 {offsets = [0, 1, 0, 0], sizes = [2, 8, 8, 128], strides = [1, 1, 1, 1]} : vector<2x10x8x128xf32> to vector<2x8x8x128xf32>
    %69 = vector.shape_cast %68 : vector<2x8x8x128xf32> to vector<128x128xf32>
    %70 = vector.extract_strided_slice %59 {offsets = [0, 1, 0, 0], sizes = [2, 8, 8, 128], strides = [1, 1, 1, 1]} : vector<2x10x8x128xf32> to vector<2x8x8x128xf32>
    %71 = vector.shape_cast %70 : vector<2x8x8x128xf32> to vector<128x128xf32>
    %72 = vector.extract_strided_slice %57 {offsets = [0, 2, 0, 0], sizes = [2, 8, 8, 128], strides = [1, 1, 1, 1]} : vector<2x10x8x128xf32> to vector<2x8x8x128xf32>
    %73 = vector.shape_cast %72 : vector<2x8x8x128xf32> to vector<128x128xf32>
    %74 = vector.extract_strided_slice %55 {offsets = [0, 2, 0, 0], sizes = [2, 8, 8, 128], strides = [1, 1, 1, 1]} : vector<2x10x8x128xf32> to vector<2x8x8x128xf32>
    %75 = vector.shape_cast %74 : vector<2x8x8x128xf32> to vector<128x128xf32>
    %76 = vector.extract_strided_slice %59 {offsets = [0, 2, 0, 0], sizes = [2, 8, 8, 128], strides = [1, 1, 1, 1]} : vector<2x10x8x128xf32> to vector<2x8x8x128xf32>
    %77 = vector.shape_cast %76 : vector<2x8x8x128xf32> to vector<128x128xf32>
    %78 = tpu.concatenate %61, %63, %65, %67, %69, %71, %73, %75, %77 in 1 : vector<128x128xf32>, vector<128x128xf32>, vector<128x128xf32>, vector<128x128xf32>, vector<128x128xf32>, vector<128x128xf32>, vector<128x128xf32>, vector<128x128xf32>, vector<128x128xf32> -> vector<128x1152xf32>
    %79 = arith.truncf %78 : vector<128x1152xf32> to vector<128x1152xbf16>
    %c0_16 = arith.constant 0 : index
    %c0_17 = arith.constant 0 : index
    %80 = vector.load %arg6[%c0_16, %c0_17] : memref<1152x128xbf16, #tpu.memory_space<vmem>>, vector<1152x128xbf16>
    %cst_18 = arith.constant dense<0.000000e+00> : vector<128x128xf32>
    %81 = tpu.matmul %79, %80, %cst_18 {dimension_numbers = #tpu.dot_dimension_numbers<[1], [0], [0], [1], [0, 0, 1, 1], [], []>} : vector<128x1152xbf16>, vector<1152x128xbf16>, vector<128x128xf32> -> vector<128x128xf32>
    %c0_19 = arith.constant 0 : index
    %c0_20 = arith.constant 0 : index
    %82 = vector.load %arg7[%c0_19, %c0_20] : memref<1x128xf32, #tpu.memory_space<vmem>>, vector<1x128xf32>
    %83 = vector.broadcast %82 : vector<1x128xf32> to vector<128x128xf32>
    %84 = arith.addf %81, %83 : vector<128x128xf32>
    %cst_21 = arith.constant 0.000000e+00 : f32
    %85 = vector.broadcast %cst_21 : f32 to vector<128x128xf32>
    %86 = arith.maximumf %84, %85 : vector<128x128xf32>
    %87 = vector.shape_cast %86 : vector<128x128xf32> to vector<2x8x8x128xf32>
    %88 = tpu.concatenate %9, %87, %9 in 1 : vector<2x1x8x128xf32>, vector<2x8x8x128xf32>, vector<2x1x8x128xf32> -> vector<2x10x8x128xf32>
    %c1_i32_22 = arith.constant 1 : i32
    %89 = tpu.dynamic_rotate %88 by %c1_i32_22 dim 2 : vector<2x10x8x128xf32>, i32 -> vector<2x10x8x128xf32>
    %90 = arith.mulf %89, %4 : vector<2x10x8x128xf32>
    %c7_i32_23 = arith.constant 7 : i32
    %91 = tpu.dynamic_rotate %88 by %c7_i32_23 dim 2 : vector<2x10x8x128xf32>, i32 -> vector<2x10x8x128xf32>
    %92 = arith.mulf %91, %8 : vector<2x10x8x128xf32>
    %93 = vector.extract_strided_slice %90 {offsets = [0, 0, 0, 0], sizes = [2, 8, 8, 128], strides = [1, 1, 1, 1]} : vector<2x10x8x128xf32> to vector<2x8x8x128xf32>
    %94 = vector.shape_cast %93 : vector<2x8x8x128xf32> to vector<128x128xf32>
    %95 = vector.extract_strided_slice %88 {offsets = [0, 0, 0, 0], sizes = [2, 8, 8, 128], strides = [1, 1, 1, 1]} : vector<2x10x8x128xf32> to vector<2x8x8x128xf32>
    %96 = vector.shape_cast %95 : vector<2x8x8x128xf32> to vector<128x128xf32>
    %97 = vector.extract_strided_slice %92 {offsets = [0, 0, 0, 0], sizes = [2, 8, 8, 128], strides = [1, 1, 1, 1]} : vector<2x10x8x128xf32> to vector<2x8x8x128xf32>
    %98 = vector.shape_cast %97 : vector<2x8x8x128xf32> to vector<128x128xf32>
    %99 = vector.extract_strided_slice %90 {offsets = [0, 1, 0, 0], sizes = [2, 8, 8, 128], strides = [1, 1, 1, 1]} : vector<2x10x8x128xf32> to vector<2x8x8x128xf32>
    %100 = vector.shape_cast %99 : vector<2x8x8x128xf32> to vector<128x128xf32>
    %101 = vector.extract_strided_slice %88 {offsets = [0, 1, 0, 0], sizes = [2, 8, 8, 128], strides = [1, 1, 1, 1]} : vector<2x10x8x128xf32> to vector<2x8x8x128xf32>
    %102 = vector.shape_cast %101 : vector<2x8x8x128xf32> to vector<128x128xf32>
    %103 = vector.extract_strided_slice %92 {offsets = [0, 1, 0, 0], sizes = [2, 8, 8, 128], strides = [1, 1, 1, 1]} : vector<2x10x8x128xf32> to vector<2x8x8x128xf32>
    %104 = vector.shape_cast %103 : vector<2x8x8x128xf32> to vector<128x128xf32>
    %105 = vector.extract_strided_slice %90 {offsets = [0, 2, 0, 0], sizes = [2, 8, 8, 128], strides = [1, 1, 1, 1]} : vector<2x10x8x128xf32> to vector<2x8x8x128xf32>
    %106 = vector.shape_cast %105 : vector<2x8x8x128xf32> to vector<128x128xf32>
    %107 = vector.extract_strided_slice %88 {offsets = [0, 2, 0, 0], sizes = [2, 8, 8, 128], strides = [1, 1, 1, 1]} : vector<2x10x8x128xf32> to vector<2x8x8x128xf32>
    %108 = vector.shape_cast %107 : vector<2x8x8x128xf32> to vector<128x128xf32>
    %109 = vector.extract_strided_slice %92 {offsets = [0, 2, 0, 0], sizes = [2, 8, 8, 128], strides = [1, 1, 1, 1]} : vector<2x10x8x128xf32> to vector<2x8x8x128xf32>
    %110 = vector.shape_cast %109 : vector<2x8x8x128xf32> to vector<128x128xf32>
    %111 = tpu.concatenate %94, %96, %98, %100, %102, %104, %106, %108, %110 in 1 : vector<128x128xf32>, vector<128x128xf32>, vector<128x128xf32>, vector<128x128xf32>, vector<128x128xf32>, vector<128x128xf32>, vector<128x128xf32>, vector<128x128xf32>, vector<128x128xf32> -> vector<128x1152xf32>
    %112 = arith.truncf %111 : vector<128x1152xf32> to vector<128x1152xbf16>
    %c0_24 = arith.constant 0 : index
    %c0_25 = arith.constant 0 : index
    %113 = vector.load %arg8[%c0_24, %c0_25] : memref<1152x128xbf16, #tpu.memory_space<vmem>>, vector<1152x128xbf16>
    %cst_26 = arith.constant dense<0.000000e+00> : vector<128x128xf32>
    %114 = tpu.matmul %112, %113, %cst_26 {dimension_numbers = #tpu.dot_dimension_numbers<[1], [0], [0], [1], [0, 0, 1, 1], [], []>} : vector<128x1152xbf16>, vector<1152x128xbf16>, vector<128x128xf32> -> vector<128x128xf32>
    %c0_27 = arith.constant 0 : index
    %c0_28 = arith.constant 0 : index
    %115 = vector.load %arg9[%c0_27, %c0_28] : memref<1x128xf32, #tpu.memory_space<vmem>>, vector<1x128xf32>
    %116 = vector.broadcast %115 : vector<1x128xf32> to vector<128x128xf32>
    %117 = arith.addf %114, %116 : vector<128x128xf32>
    %118 = arith.addf %117, %53 : vector<128x128xf32>
    %cst_29 = arith.constant 0.000000e+00 : f32
    %119 = vector.broadcast %cst_29 : f32 to vector<128x128xf32>
    %120 = arith.maximumf %118, %119 : vector<128x128xf32>
    %c0_30 = arith.constant 0 : index
    %c0_31 = arith.constant 0 : index
    %121 = vector.load %arg10[%c0_30, %c0_31] : memref<128x128xf32, #tpu.memory_space<vmem>>, vector<128x128xf32>
    tpu.vector_store %arg10[%c0_30, %c0_31], %120 {strides = array<i32>} : memref<128x128xf32, #tpu.memory_space<vmem>>, vector<128x128xf32>,
    return
  }
  func.func @transform_0(%arg0: i32) -> (i32, i32) {
    %c0_i32 = arith.constant 0 : i32
    %c0_i32_0 = arith.constant 0 : i32
    return %arg0, %c0_i32 : i32, i32
  }
  func.func @transform_1(%arg0: i32) -> (i32, i32) {
    %c0_i32 = arith.constant 0 : i32
    %c0_i32_0 = arith.constant 0 : i32
    %c0_i32_1 = arith.constant 0 : i32
    return %c0_i32, %c0_i32_0 : i32, i32
  }
  func.func @transform_2(%arg0: i32) -> (i32, i32) {
    %c0_i32 = arith.constant 0 : i32
    %c0_i32_0 = arith.constant 0 : i32
    %c0_i32_1 = arith.constant 0 : i32
    return %c0_i32, %c0_i32_0 : i32, i32
  }
  func.func @transform_3(%arg0: i32) -> (i32, i32) {
    %c0_i32 = arith.constant 0 : i32
    %c0_i32_0 = arith.constant 0 : i32
    %c0_i32_1 = arith.constant 0 : i32
    return %c0_i32, %c0_i32_0 : i32, i32
  }
  func.func @transform_4(%arg0: i32) -> (i32, i32) {
    %c0_i32 = arith.constant 0 : i32
    %c0_i32_0 = arith.constant 0 : i32
    %c0_i32_1 = arith.constant 0 : i32
    return %c0_i32, %c0_i32_0 : i32, i32
  }
  func.func @transform_5(%arg0: i32) -> (i32, i32) {
    %c0_i32 = arith.constant 0 : i32
    %c0_i32_0 = arith.constant 0 : i32
    %c0_i32_1 = arith.constant 0 : i32
    return %c0_i32, %c0_i32_0 : i32, i32
  }
  func.func @transform_6(%arg0: i32) -> (i32, i32) {
    %c0_i32 = arith.constant 0 : i32
    %c0_i32_0 = arith.constant 0 : i32
    %c0_i32_1 = arith.constant 0 : i32
    return %c0_i32, %c0_i32_0 : i32, i32
  }
  func.func @transform_7(%arg0: i32) -> (i32, i32) {
    %c0_i32 = arith.constant 0 : i32
    %c0_i32_0 = arith.constant 0 : i32
    %c0_i32_1 = arith.constant 0 : i32
    return %c0_i32, %c0_i32_0 : i32, i32
  }
  func.func @transform_8(%arg0: i32) -> (i32, i32) {
    %c0_i32 = arith.constant 0 : i32
    %c0_i32_0 = arith.constant 0 : i32
    %c0_i32_1 = arith.constant 0 : i32
    return %c0_i32, %c0_i32_0 : i32, i32
  }
  func.func @transform_9(%arg0: i32) -> (i32, i32) {
    %c0_i32 = arith.constant 0 : i32
    %c0_i32_0 = arith.constant 0 : i32
    return %arg0, %c0_i32 : i32, i32
  }
}

</mosaic_0001>

<llo_original>
// kernel: feature_extractor_modified.1
$region0: #{feature_extractor_modified.1}
  #allocation0 [shape = 'u32[]', space=smem, size = 0x4, offset = 0x4, fixed_abs, tag = 'smem constant byte address 0x4 - core index']
  #allocation1 [shape = 'u32[72,128]{1,0:T(1,128)}', space=vmem, size = 0x9000, scoped, tag = 'internal scratch']
  %s0 = inlined_call_operand.vmem [shape: bf16[128,576], index: 0, kind: input, shape index: {}]
  %s1 = inlined_call_operand.vmem [shape: bf16[576,256], index: 1, kind: input, shape index: {}]
  %s2 = inlined_call_operand.vmem [shape: f32[1,256], index: 2, kind: input, shape index: {}]
  %s3 = inlined_call_operand.vmem [shape: bf16[1152,128], index: 3, kind: input, shape index: {}]
  %s4 = inlined_call_operand.vmem [shape: f32[1,128], index: 4, kind: input, shape index: {}]
  %s5 = inlined_call_operand.vmem [shape: bf16[1152,128], index: 5, kind: input, shape index: {}]
  %s6 = inlined_call_operand.vmem [shape: f32[1,128], index: 6, kind: input, shape index: {}]
  %s7 = inlined_call_operand.vmem [shape: bf16[1152,128], index: 7, kind: input, shape index: {}]
  %s8 = inlined_call_operand.vmem [shape: f32[1,128], index: 8, kind: input, shape index: {}]
  %s9 = inlined_call_operand.hbm [shape: f32[128,128], index: 9, kind: output, shape index: {}]
  %s10 = sld [smem:[#allocation0]]
  $region46: #{feature_extractor_modified.1} parent=0
    _
  %s12 = ssub.s32 1, %s10
  %s13 = scalar_select 0, %s12, %s10
  $region1: #{feature_extractor_modified.1} parent=0
    #allocation2 [shape = 'u8[65536]{0}', space=vmem, size = 0x10000, scoped, tag = 'output window, operand 0, single buffered']
    #allocation3 [shape = 's32[1]{0}', space=sflag, size = 0x4, scoped, tag = 'scoped memory for feature_extractor_modified.1']
    %14 = vsyncpa [#allocation3], 0
    // Predicated region
    $region2: #{feature_extractor_modified.1} parent=1 // pred_check
      _
    $region3: #{feature_extractor_modified.1} parent=1 // pred_check_branch
      %16 = sbr.rel (0) target = $region5
    $region4: #{feature_extractor_modified.1} parent=1 // pred_region
      _
    $region5: #{feature_extractor_modified.1} parent=1 // pred_fallthru
      _
    // Predicated region
    $region6: #{feature_extractor_modified.1} parent=1 // pred_check
      _
    $region7: #{feature_extractor_modified.1} parent=1 // pred_check_branch
      %18 = sbr.rel (0) target = $region9
    $region8: #{feature_extractor_modified.1} parent=1 // pred_region
      _
    $region9: #{feature_extractor_modified.1} parent=1 // pred_fallthru
      _
    // Predicated region
    $region10: #{feature_extractor_modified.1} parent=1 // pred_check
      _
    $region11: #{feature_extractor_modified.1} parent=1 // pred_check_branch
      %20 = sbr.rel (0) target = $region13
    $region12: #{feature_extractor_modified.1} parent=1 // pred_region
      _
    $region13: #{feature_extractor_modified.1} parent=1 // pred_fallthru
      _
    // Predicated region
    $region14: #{feature_extractor_modified.1} parent=1 // pred_check
      _
    $region15: #{feature_extractor_modified.1} parent=1 // pred_check_branch
      %22 = sbr.rel (0) target = $region17
    $region16: #{feature_extractor_modified.1} parent=1 // pred_region
      _
    $region17: #{feature_extractor_modified.1} parent=1 // pred_fallthru
      _
    // Predicated region
    $region18: #{feature_extractor_modified.1} parent=1 // pred_check
      _
    $region19: #{feature_extractor_modified.1} parent=1 // pred_check_branch
      %24 = sbr.rel (0) target = $region21
    $region20: #{feature_extractor_modified.1} parent=1 // pred_region
      _
    $region21: #{feature_extractor_modified.1} parent=1 // pred_fallthru
      _
    // Predicated region
    $region22: #{feature_extractor_modified.1} parent=1 // pred_check
      _
    $region23: #{feature_extractor_modified.1} parent=1 // pred_check_branch
      %26 = sbr.rel (0) target = $region25
    $region24: #{feature_extractor_modified.1} parent=1 // pred_region
      _
    $region25: #{feature_extractor_modified.1} parent=1 // pred_fallthru
      _
    // Predicated region
    $region26: #{feature_extractor_modified.1} parent=1 // pred_check
      _
    $region27: #{feature_extractor_modified.1} parent=1 // pred_check_branch
      %28 = sbr.rel (0) target = $region29
    $region28: #{feature_extractor_modified.1} parent=1 // pred_region
      _
    $region29: #{feature_extractor_modified.1} parent=1 // pred_fallthru
      _
    // Predicated region
    $region30: #{feature_extractor_modified.1} parent=1 // pred_check
      _
    $region31: #{feature_extractor_modified.1} parent=1 // pred_check_branch
      %30 = sbr.rel (0) target = $region33
    $region32: #{feature_extractor_modified.1} parent=1 // pred_region
      _
    $region33: #{feature_extractor_modified.1} parent=1 // pred_fallthru
      _
    // Predicated region
    $region34: #{feature_extractor_modified.1} parent=1 // pred_check
      _
    $region35: #{feature_extractor_modified.1} parent=1 // pred_check_branch
      %32 = sbr.rel (0) target = $region37
    $region36: #{feature_extractor_modified.1} parent=1 // pred_region
      _
    $region37: #{feature_extractor_modified.1} parent=1 // pred_fallthru
      _
    %v34 = vlaneseq
    %v35 = vshrl.u32 %v34, 7
    %vm36 = vcmp.ne.s32.totalorder %v35, 0
    %v37 = vsel %vm36, 1, 0
    %v38 = vcvt.s32.f32 %v37
    %vm39 = vcmp.ne.s32.totalorder %v35, 7
    %v40 = vsel %vm39, 1, 0
    %v41 = vcvt.s32.f32 %v40
    %v42 = vld [vmem:[%s0] sm:$0xff]
    %v43 = vld [vmem:[%s0 + $0x8] sm:$0xff]
    %v44 = vld [vmem:[%s0 + $0x10] sm:$0xf]
    %v45 = vld [vmem:[%s0 + $0x14] sm:$0xff]
    %v46 = vld [vmem:[%s0 + $0x1c] sm:$0xff]
    %v47 = vld [vmem:[%s0 + $0x24] sm:$0xf]
    %v48 = vld [vmem:[%s0 + $0x28] sm:$0xff]
    %v49 = vld [vmem:[%s0 + $0x30] sm:$0xff]
    %v50 = vld [vmem:[%s0 + $0x38] sm:$0xf]
    %v51 = vld [vmem:[%s0 + $0x3c] sm:$0xff]
    %v52 = vld [vmem:[%s0 + $0x44] sm:$0xff]
    %v53 = vld [vmem:[%s0 + $0x4c] sm:$0xf]
    %v54 = vld [vmem:[%s0 + $0x50] sm:$0xff]
    %v55 = vld [vmem:[%s0 + $0x58] sm:$0xff]
    %v56 = vld [vmem:[%s0 + $0x60] sm:$0xf]
    %v57 = vld [vmem:[%s0 + $0x64] sm:$0xff]
    %v58 = vld [vmem:[%s0 + $0x6c] sm:$0xff]
    %v59 = vld [vmem:[%s0 + $0x74] sm:$0xf]
    %v60 = vld [vmem:[%s0 + $0x78] sm:$0xff]
    %v61 = vld [vmem:[%s0 + $0x80] sm:$0xff]
    %v62 = vld [vmem:[%s0 + $0x88] sm:$0xf]
    %v63 = vld [vmem:[%s0 + $0x8c] sm:$0xff]
    %v64 = vld [vmem:[%s0 + $0x94] sm:$0xff]
    %v65 = vld [vmem:[%s0 + $0x9c] sm:$0xf]
    %v66 = vld [vmem:[%s0 + $0xa0] sm:$0xff]
    %v67 = vld [vmem:[%s0 + $0xa8] sm:$0xff]
    %v68 = vld [vmem:[%s0 + $0xb0] sm:$0xf]
    %v69 = vld [vmem:[%s0 + $0xb4] sm:$0xff]
    %v70 = vld [vmem:[%s0 + $0xbc] sm:$0xff]
    %v71 = vld [vmem:[%s0 + $0xc4] sm:$0xf]
    %v72 = vld [vmem:[%s0 + $0xc8] sm:$0xff]
    %v73 = vld [vmem:[%s0 + $0xd0] sm:$0xff]
    %v74 = vld [vmem:[%s0 + $0xd8] sm:$0xf]
    %v75 = vld [vmem:[%s0 + $0xdc] sm:$0xff]
    %v76 = vld [vmem:[%s0 + $0xe4] sm:$0xff]
    %v77 = vld [vmem:[%s0 + $0xec] sm:$0xf]
    %v78 = vld [vmem:[%s0 + $0xf0] sm:$0xff]
    %v79 = vld [vmem:[%s0 + $0xf8] sm:$0xff]
    %v80 = vld [vmem:[%s0 + $0x100] sm:$0xf]
    %v81 = vld [vmem:[%s0 + $0x104] sm:$0xff]
    %v82 = vld [vmem:[%s0 + $0x10c] sm:$0xff]
    %v83 = vld [vmem:[%s0 + $0x114] sm:$0xf]
    %v84 = vld [vmem:[%s0 + $0x118] sm:$0xff]
    %v85 = vld [vmem:[%s0 + $0x120] sm:$0xff]
    %v86 = vld [vmem:[%s0 + $0x128] sm:$0xf]
    %v87 = vld [vmem:[%s0 + $0x12c] sm:$0xff]
    %v88 = vld [vmem:[%s0 + $0x134] sm:$0xff]
    %v89 = vld [vmem:[%s0 + $0x13c] sm:$0xf]
    %v90 = vld [vmem:[%s1] sm:$0xff]
    %v91 = vld [vmem:[%s1 + $0x8] sm:$0xff]
    %v92 = vld [vmem:[%s1 + $0x10] sm:$0xff]
    %v93 = vld [vmem:[%s1 + $0x18] sm:$0xff]
    %v94 = vld [vmem:[%s1 + $0x20] sm:$0xff]
    %v95 = vld [vmem:[%s1 + $0x28] sm:$0xff]
    %v96 = vld [vmem:[%s1 + $0x30] sm:$0xff]
    %v97 = vld [vmem:[%s1 + $0x38] sm:$0xff]
    %v98 = vld [vmem:[%s1 + $0x40] sm:$0xff]
    %v99 = vld [vmem:[%s1 + $0x48] sm:$0xff]
    %v100 = vld [vmem:[%s1 + $0x50] sm:$0xff]
    %v101 = vld [vmem:[%s1 + $0x58] sm:$0xff]
    %v102 = vld [vmem:[%s1 + $0x60] sm:$0xff]
    %v103 = vld [vmem:[%s1 + $0x68] sm:$0xff]
    %v104 = vld [vmem:[%s1 + $0x70] sm:$0xff]
    %v105 = vld [vmem:[%s1 + $0x78] sm:$0xff]
    %v106 = vld [vmem:[%s1 + $0x80] sm:$0xff]
    %v107 = vld [vmem:[%s1 + $0x88] sm:$0xff]
    %v108 = vld [vmem:[%s1 + $0x90] sm:$0xff]
    %v109 = vld [vmem:[%s1 + $0x98] sm:$0xff]
    %v110 = vld [vmem:[%s1 + $0xa0] sm:$0xff]
    %v111 = vld [vmem:[%s1 + $0xa8] sm:$0xff]
    %v112 = vld [vmem:[%s1 + $0xb0] sm:$0xff]
    %v113 = vld [vmem:[%s1 + $0xb8] sm:$0xff]
    %v114 = vld [vmem:[%s1 + $0xc0] sm:$0xff]
    %v115 = vld [vmem:[%s1 + $0xc8] sm:$0xff]
    %v116 = vld [vmem:[%s1 + $0xd0] sm:$0xff]
    %v117 = vld [vmem:[%s1 + $0xd8] sm:$0xff]
    %v118 = vld [vmem:[%s1 + $0xe0] sm:$0xff]
    %v119 = vld [vmem:[%s1 + $0xe8] sm:$0xff]
    %v120 = vld [vmem:[%s1 + $0xf0] sm:$0xff]
    %v121 = vld [vmem:[%s1 + $0xf8] sm:$0xff]
    %v122 = vld [vmem:[%s1 + $0x100] sm:$0xff]
    %v123 = vld [vmem:[%s1 + $0x108] sm:$0xff]
    %v124 = vld [vmem:[%s1 + $0x110] sm:$0xff]
    %v125 = vld [vmem:[%s1 + $0x118] sm:$0xff]
    %v126 = vld [vmem:[%s1 + $0x120] sm:$0xff]
    %v127 = vld [vmem:[%s1 + $0x128] sm:$0xff]
    %v128 = vld [vmem:[%s1 + $0x130] sm:$0xff]
    %v129 = vld [vmem:[%s1 + $0x138] sm:$0xff]
    %v130 = vld [vmem:[%s1 + $0x140] sm:$0xff]
    %v131 = vld [vmem:[%s1 + $0x148] sm:$0xff]
    %v132 = vld [vmem:[%s1 + $0x150] sm:$0xff]
    %v133 = vld [vmem:[%s1 + $0x158] sm:$0xff]
    %v134 = vld [vmem:[%s1 + $0x160] sm:$0xff]
    %v135 = vld [vmem:[%s1 + $0x168] sm:$0xff]
    %v136 = vld [vmem:[%s1 + $0x170] sm:$0xff]
    %v137 = vld [vmem:[%s1 + $0x178] sm:$0xff]
    %v138 = vld [vmem:[%s1 + $0x180] sm:$0xff]
    %v139 = vld [vmem:[%s1 + $0x188] sm:$0xff]
    %v140 = vld [vmem:[%s1 + $0x190] sm:$0xff]
    %v141 = vld [vmem:[%s1 + $0x198] sm:$0xff]
    %v142 = vld [vmem:[%s1 + $0x1a0] sm:$0xff]
    %v143 = vld [vmem:[%s1 + $0x1a8] sm:$0xff]
    %v144 = vld [vmem:[%s1 + $0x1b0] sm:$0xff]
    %v145 = vld [vmem:[%s1 + $0x1b8] sm:$0xff]
    %v146 = vld [vmem:[%s1 + $0x1c0] sm:$0xff]
    %v147 = vld [vmem:[%s1 + $0x1c8] sm:$0xff]
    %v148 = vld [vmem:[%s1 + $0x1d0] sm:$0xff]
    %v149 = vld [vmem:[%s1 + $0x1d8] sm:$0xff]
    %v150 = vld [vmem:[%s1 + $0x1e0] sm:$0xff]
    %v151 = vld [vmem:[%s1 + $0x1e8] sm:$0xff]
    %v152 = vld [vmem:[%s1 + $0x1f0] sm:$0xff]
    %v153 = vld [vmem:[%s1 + $0x1f8] sm:$0xff]
    %v154 = vld [vmem:[%s1 + $0x200] sm:$0xff]
    %v155 = vld [vmem:[%s1 + $0x208] sm:$0xff]
    %v156 = vld [vmem:[%s1 + $0x210] sm:$0xff]
    %v157 = vld [vmem:[%s1 + $0x218] sm:$0xff]
    %v158 = vld [vmem:[%s1 + $0x220] sm:$0xff]
    %v159 = vld [vmem:[%s1 + $0x228] sm:$0xff]
    %v160 = vld [vmem:[%s1 + $0x230] sm:$0xff]
    %v161 = vld [vmem:[%s1 + $0x238] sm:$0xff]
    %v162 = vld [vmem:[%s2] sm:$0x3]
    %v164 = vperm.slane %v162, 0
    %v165 = vperm.slane %v162, 1
    %v216 = vunpack.c.l.b16 %v42
    %v217 = vunpack.c.h.b16 %v42
    %v218 = vunpack.c.l.b16 %v43
    %v219 = vunpack.c.h.b16 %v43
    %v220 = vunpack.c.l.b16 %v44
    %v221 = vunpack.c.l.b16 %v45
    %v222 = vunpack.c.h.b16 %v45
    %v223 = vunpack.c.l.b16 %v46
    %v224 = vunpack.c.h.b16 %v46
    %v225 = vunpack.c.l.b16 %v47
    %v226 = vunpack.c.l.b16 %v48
    %v227 = vunpack.c.h.b16 %v48
    %v228 = vunpack.c.l.b16 %v49
    %v229 = vunpack.c.h.b16 %v49
    %v230 = vunpack.c.l.b16 %v50
    %v231 = vunpack.c.l.b16 %v51
    %v232 = vunpack.c.h.b16 %v51
    %v233 = vunpack.c.l.b16 %v52
    %v234 = vunpack.c.h.b16 %v52
    %v235 = vunpack.c.l.b16 %v53
    %v236 = vunpack.c.l.b16 %v54
    %v237 = vunpack.c.h.b16 %v54
    %v238 = vunpack.c.l.b16 %v55
    %v239 = vunpack.c.h.b16 %v55
    %v240 = vunpack.c.l.b16 %v56
    %v241 = vunpack.c.l.b16 %v57
    %v242 = vunpack.c.h.b16 %v57
    %v243 = vunpack.c.l.b16 %v58
    %v244 = vunpack.c.h.b16 %v58
    %v245 = vunpack.c.l.b16 %v59
    %v246 = vunpack.c.l.b16 %v60
    %v247 = vunpack.c.h.b16 %v60
    %v248 = vunpack.c.l.b16 %v61
    %v249 = vunpack.c.h.b16 %v61
    %v250 = vunpack.c.l.b16 %v62
    %v251 = vunpack.c.l.b16 %v63
    %v252 = vunpack.c.h.b16 %v63
    %v253 = vunpack.c.l.b16 %v64
    %v254 = vunpack.c.h.b16 %v64
    %v255 = vunpack.c.l.b16 %v65
    %v256 = vunpack.c.l.b16 %v66
    %v257 = vunpack.c.h.b16 %v66
    %v258 = vunpack.c.l.b16 %v67
    %v259 = vunpack.c.h.b16 %v67
    %v260 = vunpack.c.l.b16 %v68
    %v261 = vunpack.c.l.b16 %v69
    %v262 = vunpack.c.h.b16 %v69
    %v263 = vunpack.c.l.b16 %v70
    %v264 = vunpack.c.h.b16 %v70
    %v265 = vunpack.c.l.b16 %v71
    %v266 = vunpack.c.l.b16 %v72
    %v267 = vunpack.c.h.b16 %v72
    %v268 = vunpack.c.l.b16 %v73
    %v269 = vunpack.c.h.b16 %v73
    %v270 = vunpack.c.l.b16 %v74
    %v271 = vunpack.c.l.b16 %v75
    %v272 = vunpack.c.h.b16 %v75
    %v273 = vunpack.c.l.b16 %v76
    %v274 = vunpack.c.h.b16 %v76
    %v275 = vunpack.c.l.b16 %v77
    %v276 = vunpack.c.l.b16 %v78
    %v277 = vunpack.c.h.b16 %v78
    %v278 = vunpack.c.l.b16 %v79
    %v279 = vunpack.c.h.b16 %v79
    %v280 = vunpack.c.l.b16 %v80
    %v281 = vunpack.c.l.b16 %v81
    %v282 = vunpack.c.h.b16 %v81
    %v283 = vunpack.c.l.b16 %v82
    %v284 = vunpack.c.h.b16 %v82
    %v285 = vunpack.c.l.b16 %v83
    %v286 = vunpack.c.l.b16 %v84
    %v287 = vunpack.c.h.b16 %v84
    %v288 = vunpack.c.l.b16 %v85
    %v289 = vunpack.c.h.b16 %v85
    %v290 = vunpack.c.l.b16 %v86
    %v291 = vunpack.c.l.b16 %v87
    %v292 = vunpack.c.h.b16 %v87
    %v293 = vunpack.c.l.b16 %v88
    %v294 = vunpack.c.h.b16 %v88
    %v295 = vunpack.c.l.b16 %v89
    %v296 = vpack.c.b16 %v221, %v216
    %v297 = vpack.c.b16 %v222, %v217
    %v298 = vpack.c.b16 %v223, %v218
    %v299 = vpack.c.b16 %v224, %v219
    %v300 = vpack.c.b16 %v225, %v220
    %v301 = vpack.c.b16 %v231, %v226
    %v302 = vpack.c.b16 %v232, %v227
    %v303 = vpack.c.b16 %v233, %v228
    %v304 = vpack.c.b16 %v234, %v229
    %v305 = vpack.c.b16 %v235, %v230
    %v306 = vpack.c.b16 %v241, %v236
    %v307 = vpack.c.b16 %v242, %v237
    %v308 = vpack.c.b16 %v243, %v238
    %v309 = vpack.c.b16 %v244, %v239
    %v310 = vpack.c.b16 %v245, %v240
    %v311 = vpack.c.b16 %v251, %v246
    %v312 = vpack.c.b16 %v252, %v247
    %v313 = vpack.c.b16 %v253, %v248
    %v314 = vpack.c.b16 %v254, %v249
    %v315 = vpack.c.b16 %v255, %v250
    %v316 = vpack.c.b16 %v261, %v256
    %v317 = vpack.c.b16 %v262, %v257
    %v318 = vpack.c.b16 %v263, %v258
    %v319 = vpack.c.b16 %v264, %v259
    %v320 = vpack.c.b16 %v265, %v260
    %v321 = vpack.c.b16 %v271, %v266
    %v322 = vpack.c.b16 %v272, %v267
    %v323 = vpack.c.b16 %v273, %v268
    %v324 = vpack.c.b16 %v274, %v269
    %v325 = vpack.c.b16 %v275, %v270
    %v326 = vpack.c.b16 %v281, %v276
    %v327 = vpack.c.b16 %v282, %v277
    %v328 = vpack.c.b16 %v283, %v278
    %v329 = vpack.c.b16 %v284, %v279
    %v330 = vpack.c.b16 %v285, %v280
    %v331 = vpack.c.b16 %v291, %v286
    %v332 = vpack.c.b16 %v292, %v287
    %v333 = vpack.c.b16 %v293, %v288
    %v334 = vpack.c.b16 %v294, %v289
    %v335 = vpack.c.b16 %v295, %v290
    %v440 = vunpack.c.l.b16 %v90
    %v441 = vunpack.c.h.b16 %v90
    %v442 = vunpack.c.l.b16 %v91
    %v443 = vunpack.c.h.b16 %v91
    %v444 = vunpack.c.l.b16 %v92
    %v445 = vunpack.c.h.b16 %v92
    %v446 = vunpack.c.l.b16 %v93
    %v447 = vunpack.c.h.b16 %v93
    %v448 = vunpack.c.l.b16 %v94
    %v449 = vunpack.c.h.b16 %v94
    %v450 = vunpack.c.l.b16 %v95
    %v451 = vunpack.c.h.b16 %v95
    %v452 = vunpack.c.l.b16 %v96
    %v453 = vunpack.c.h.b16 %v96
    %v454 = vunpack.c.l.b16 %v97
    %v455 = vunpack.c.h.b16 %v97
    %v456 = vunpack.c.l.b16 %v98
    %v457 = vunpack.c.h.b16 %v98
    %v458 = vunpack.c.l.b16 %v99
    %v459 = vunpack.c.h.b16 %v99
    %v460 = vunpack.c.l.b16 %v100
    %v461 = vunpack.c.h.b16 %v100
    %v462 = vunpack.c.l.b16 %v101
    %v463 = vunpack.c.h.b16 %v101
    %v464 = vunpack.c.l.b16 %v102
    %v465 = vunpack.c.h.b16 %v102
    %v466 = vunpack.c.l.b16 %v103
    %v467 = vunpack.c.h.b16 %v103
    %v468 = vunpack.c.l.b16 %v104
    %v469 = vunpack.c.h.b16 %v104
    %v470 = vunpack.c.l.b16 %v105
    %v471 = vunpack.c.h.b16 %v105
    %v472 = vunpack.c.l.b16 %v106
    %v473 = vunpack.c.h.b16 %v106
    %v474 = vunpack.c.l.b16 %v107
    %v475 = vunpack.c.h.b16 %v107
    %v476 = vunpack.c.l.b16 %v108
    %v477 = vunpack.c.h.b16 %v108
    %v478 = vunpack.c.l.b16 %v109
    %v479 = vunpack.c.h.b16 %v109
    %v480 = vunpack.c.l.b16 %v110
    %v481 = vunpack.c.h.b16 %v110
    %v482 = vunpack.c.l.b16 %v111
    %v483 = vunpack.c.h.b16 %v111
    %v484 = vunpack.c.l.b16 %v112
    %v485 = vunpack.c.h.b16 %v112
    %v486 = vunpack.c.l.b16 %v113
    %v487 = vunpack.c.h.b16 %v113
    %v488 = vunpack.c.l.b16 %v114
    %v489 = vunpack.c.h.b16 %v114
    %v490 = vunpack.c.l.b16 %v115
    %v491 = vunpack.c.h.b16 %v115
    %v492 = vunpack.c.l.b16 %v116
    %v493 = vunpack.c.h.b16 %v116
    %v494 = vunpack.c.l.b16 %v117
    %v495 = vunpack.c.h.b16 %v117
    %v496 = vunpack.c.l.b16 %v118
    %v497 = vunpack.c.h.b16 %v118
    %v498 = vunpack.c.l.b16 %v119
    %v499 = vunpack.c.h.b16 %v119
    %v500 = vunpack.c.l.b16 %v120
    %v501 = vunpack.c.h.b16 %v120
    %v502 = vunpack.c.l.b16 %v121
    %v503 = vunpack.c.h.b16 %v121
    %v504 = vunpack.c.l.b16 %v122
    %v505 = vunpack.c.h.b16 %v122
    %v506 = vunpack.c.l.b16 %v123
    %v507 = vunpack.c.h.b16 %v123
    %v508 = vunpack.c.l.b16 %v124
    %v509 = vunpack.c.h.b16 %v124
    %v510 = vunpack.c.l.b16 %v125
    %v511 = vunpack.c.h.b16 %v125
    %v512 = vunpack.c.l.b16 %v126
    %v513 = vunpack.c.h.b16 %v126
    %v514 = vunpack.c.l.b16 %v127
    %v515 = vunpack.c.h.b16 %v127
    %v516 = vunpack.c.l.b16 %v128
    %v517 = vunpack.c.h.b16 %v128
    %v518 = vunpack.c.l.b16 %v129
    %v519 = vunpack.c.h.b16 %v129
    %v520 = vunpack.c.l.b16 %v130
    %v521 = vunpack.c.h.b16 %v130
    %v522 = vunpack.c.l.b16 %v131
    %v523 = vunpack.c.h.b16 %v131
    %v524 = vunpack.c.l.b16 %v132
    %v525 = vunpack.c.h.b16 %v132
    %v526 = vunpack.c.l.b16 %v133
    %v527 = vunpack.c.h.b16 %v133
    %v528 = vunpack.c.l.b16 %v134
    %v529 = vunpack.c.h.b16 %v134
    %v530 = vunpack.c.l.b16 %v135
    %v531 = vunpack.c.h.b16 %v135
    %v532 = vunpack.c.l.b16 %v136
    %v533 = vunpack.c.h.b16 %v136
    %v534 = vunpack.c.l.b16 %v137
    %v535 = vunpack.c.h.b16 %v137
    %v536 = vunpack.c.l.b16 %v138
    %v537 = vunpack.c.h.b16 %v138
    %v538 = vunpack.c.l.b16 %v139
    %v539 = vunpack.c.h.b16 %v139
    %v540 = vunpack.c.l.b16 %v140
    %v541 = vunpack.c.h.b16 %v140
    %v542 = vunpack.c.l.b16 %v141
    %v543 = vunpack.c.h.b16 %v141
    %v544 = vunpack.c.l.b16 %v142
    %v545 = vunpack.c.h.b16 %v142
    %v546 = vunpack.c.l.b16 %v143
    %v547 = vunpack.c.h.b16 %v143
    %v548 = vunpack.c.l.b16 %v144
    %v549 = vunpack.c.h.b16 %v144
    %v550 = vunpack.c.l.b16 %v145
    %v551 = vunpack.c.h.b16 %v145
    %v552 = vunpack.c.l.b16 %v146
    %v553 = vunpack.c.h.b16 %v146
    %v554 = vunpack.c.l.b16 %v147
    %v555 = vunpack.c.h.b16 %v147
    %v556 = vunpack.c.l.b16 %v148
    %v557 = vunpack.c.h.b16 %v148
    %v558 = vunpack.c.l.b16 %v149
    %v559 = vunpack.c.h.b16 %v149
    %v560 = vunpack.c.l.b16 %v150
    %v561 = vunpack.c.h.b16 %v150
    %v562 = vunpack.c.l.b16 %v151
    %v563 = vunpack.c.h.b16 %v151
    %v564 = vunpack.c.l.b16 %v152
    %v565 = vunpack.c.h.b16 %v152
    %v566 = vunpack.c.l.b16 %v153
    %v567 = vunpack.c.h.b16 %v153
    %v568 = vunpack.c.l.b16 %v154
    %v569 = vunpack.c.h.b16 %v154
    %v570 = vunpack.c.l.b16 %v155
    %v571 = vunpack.c.h.b16 %v155
    %v572 = vunpack.c.l.b16 %v156
    %v573 = vunpack.c.h.b16 %v156
    %v574 = vunpack.c.l.b16 %v157
    %v575 = vunpack.c.h.b16 %v157
    %v576 = vunpack.c.l.b16 %v158
    %v577 = vunpack.c.h.b16 %v158
    %v578 = vunpack.c.l.b16 %v159
    %v579 = vunpack.c.h.b16 %v159
    %v580 = vunpack.c.l.b16 %v160
    %v581 = vunpack.c.h.b16 %v160
    %v582 = vunpack.c.l.b16 %v161
    %v583 = vunpack.c.h.b16 %v161
    %v584 = vpack.c.b16 %v442, %v440
    %v585 = vpack.c.b16 %v443, %v441
    %v586 = vpack.c.b16 %v446, %v444
    %v587 = vpack.c.b16 %v447, %v445
    %v588 = vpack.c.b16 %v450, %v448
    %v589 = vpack.c.b16 %v451, %v449
    %v590 = vpack.c.b16 %v454, %v452
    %v591 = vpack.c.b16 %v455, %v453
    %v592 = vpack.c.b16 %v458, %v456
    %v593 = vpack.c.b16 %v459, %v457
    %v594 = vpack.c.b16 %v462, %v460
    %v595 = vpack.c.b16 %v463, %v461
    %v596 = vpack.c.b16 %v466, %v464
    %v597 = vpack.c.b16 %v467, %v465
    %v598 = vpack.c.b16 %v470, %v468
    %v599 = vpack.c.b16 %v471, %v469
    %v600 = vpack.c.b16 %v474, %v472
    %v601 = vpack.c.b16 %v475, %v473
    %v602 = vpack.c.b16 %v478, %v476
    %v603 = vpack.c.b16 %v479, %v477
    %v604 = vpack.c.b16 %v482, %v480
    %v605 = vpack.c.b16 %v483, %v481
    %v606 = vpack.c.b16 %v486, %v484
    %v607 = vpack.c.b16 %v487, %v485
    %v608 = vpack.c.b16 %v490, %v488
    %v609 = vpack.c.b16 %v491, %v489
    %v610 = vpack.c.b16 %v494, %v492
    %v611 = vpack.c.b16 %v495, %v493
    %v612 = vpack.c.b16 %v498, %v496
    %v613 = vpack.c.b16 %v499, %v497
    %v614 = vpack.c.b16 %v502, %v500
    %v615 = vpack.c.b16 %v503, %v501
    %v616 = vpack.c.b16 %v506, %v504
    %v617 = vpack.c.b16 %v507, %v505
    %v618 = vpack.c.b16 %v510, %v508
    %v619 = vpack.c.b16 %v511, %v509
    %v620 = vpack.c.b16 %v514, %v512
    %v621 = vpack.c.b16 %v515, %v513
    %v622 = vpack.c.b16 %v518, %v516
    %v623 = vpack.c.b16 %v519, %v517
    %v624 = vpack.c.b16 %v522, %v520
    %v625 = vpack.c.b16 %v523, %v521
    %v626 = vpack.c.b16 %v526, %v524
    %v627 = vpack.c.b16 %v527, %v525
    %v628 = vpack.c.b16 %v530, %v528
    %v629 = vpack.c.b16 %v531, %v529
    %v630 = vpack.c.b16 %v534, %v532
    %v631 = vpack.c.b16 %v535, %v533
    %v632 = vpack.c.b16 %v538, %v536
    %v633 = vpack.c.b16 %v539, %v537
    %v634 = vpack.c.b16 %v542, %v540
    %v635 = vpack.c.b16 %v543, %v541
    %v636 = vpack.c.b16 %v546, %v544
    %v637 = vpack.c.b16 %v547, %v545
    %v638 = vpack.c.b16 %v550, %v548
    %v639 = vpack.c.b16 %v551, %v549
    %v640 = vpack.c.b16 %v554, %v552
    %v641 = vpack.c.b16 %v555, %v553
    %v642 = vpack.c.b16 %v558, %v556
    %v643 = vpack.c.b16 %v559, %v557
    %v644 = vpack.c.b16 %v562, %v560
    %v645 = vpack.c.b16 %v563, %v561
    %v646 = vpack.c.b16 %v566, %v564
    %v647 = vpack.c.b16 %v567, %v565
    %v648 = vpack.c.b16 %v570, %v568
    %v649 = vpack.c.b16 %v571, %v569
    %v650 = vpack.c.b16 %v574, %v572
    %v651 = vpack.c.b16 %v575, %v573
    %v652 = vpack.c.b16 %v578, %v576
    %v653 = vpack.c.b16 %v579, %v577
    %v654 = vpack.c.b16 %v582, %v580
    %v655 = vpack.c.b16 %v583, %v581
    %vm728 = vcmask 523264
    %v730 = vsel %vm728, %v300, 0
    %v733 = vsel %vm728, %v305, 0
    %v736 = vsel %vm728, %v310, 0
    %v739 = vsel %vm728, %v315, 0
    %v742 = vsel %vm728, %v320, 0
    %v745 = vsel %vm728, %v325, 0
    %v748 = vsel %vm728, %v330, 0
    %v751 = vsel %vm728, %v335, 0
    %753 = vmatpush.bf16.msra.mxu0 %v598
    %754 = vmatpush.bf16.msra.mxu0 %v596
    %755 = vmatpush.bf16.msra.mxu0 %v594
    %756 = vmatpush.bf16.msra.mxu0 %v592
    %757 = vmatpush.bf16.msra.mxu0 %v590
    %758 = vmatpush.bf16.msra.mxu0 %v588
    %759 = vmatpush.bf16.msra.mxu0 %v586
    %760 = vmatpush.bf16.msra.mxu0 %v584
    %761 = vmatmul.bf16.gmra.mxu0 %v296
    %v762 = vpop.f32.mrf.mxu0
    %v763 = vadd.f32 %v164, %v762
    %v764 = vpop.f32.mrf.mxu0
    %v765 = vadd.f32 %v164, %v764
    %766 = vmatmul.bf16.gmra.mxu0 %v301
    %v767 = vpop.f32.mrf.mxu0
    %v768 = vadd.f32 %v164, %v767
    %v769 = vpop.f32.mrf.mxu0
    %v770 = vadd.f32 %v164, %v769
    %771 = vmatmul.bf16.gmra.mxu0 %v306
    %v772 = vpop.f32.mrf.mxu0
    %v773 = vadd.f32 %v164, %v772
    %v774 = vpop.f32.mrf.mxu0
    %v775 = vadd.f32 %v164, %v774
    %776 = vmatmul.bf16.gmra.mxu0 %v311
    %v777 = vpop.f32.mrf.mxu0
    %v778 = vadd.f32 %v164, %v777
    %v779 = vpop.f32.mrf.mxu0
    %v780 = vadd.f32 %v164, %v779
    %781 = vmatmul.bf16.gmra.mxu0 %v316
    %v782 = vpop.f32.mrf.mxu0
    %v783 = vadd.f32 %v164, %v782
    %v784 = vpop.f32.mrf.mxu0
    %v785 = vadd.f32 %v164, %v784
    %786 = vmatmul.bf16.gmra.mxu0 %v321
    %v787 = vpop.f32.mrf.mxu0
    %v788 = vadd.f32 %v164, %v787
    %v789 = vpop.f32.mrf.mxu0
    %v790 = vadd.f32 %v164, %v789
    %791 = vmatmul.bf16.gmra.mxu0 %v326
    %v792 = vpop.f32.mrf.mxu0
    %v793 = vadd.f32 %v164, %v792
    %v794 = vpop.f32.mrf.mxu0
    %v795 = vadd.f32 %v164, %v794
    %796 = vmatmul.bf16.gmra.mxu0 %v331
    %v797 = vpop.f32.mrf.mxu0
    %v798 = vadd.f32 %v164, %v797
    %v799 = vpop.f32.mrf.mxu0
    %v800 = vadd.f32 %v164, %v799
    %801 = vdwg.mxu0
    %802 = vmatpush.bf16.msra.mxu0 %v614
    %803 = vmatpush.bf16.msra.mxu0 %v612
    %804 = vmatpush.bf16.msra.mxu0 %v610
    %805 = vmatpush.bf16.msra.mxu0 %v608
    %806 = vmatpush.bf16.msra.mxu0 %v606
    %807 = vmatpush.bf16.msra.mxu0 %v604
    %808 = vmatpush.bf16.msra.mxu0 %v602
    %809 = vmatpush.bf16.msra.mxu0 %v600
    %810 = vmatmul.bf16.gmra.mxu0 %v297
    %v811 = vpop.f32.mrf.mxu0
    %v812 = vadd.f32 %v763, %v811
    %v813 = vpop.f32.mrf.mxu0
    %v814 = vadd.f32 %v765, %v813
    %815 = vmatmul.bf16.gmra.mxu0 %v302
    %v816 = vpop.f32.mrf.mxu0
    %v817 = vadd.f32 %v768, %v816
    %v818 = vpop.f32.mrf.mxu0
    %v819 = vadd.f32 %v770, %v818
    %820 = vmatmul.bf16.gmra.mxu0 %v307
    %v821 = vpop.f32.mrf.mxu0
    %v822 = vadd.f32 %v773, %v821
    %v823 = vpop.f32.mrf.mxu0
    %v824 = vadd.f32 %v775, %v823
    %825 = vmatmul.bf16.gmra.mxu0 %v312
    %v826 = vpop.f32.mrf.mxu0
    %v827 = vadd.f32 %v778, %v826
    %v828 = vpop.f32.mrf.mxu0
    %v829 = vadd.f32 %v780, %v828
    %830 = vmatmul.bf16.gmra.mxu0 %v317
    %v831 = vpop.f32.mrf.mxu0
    %v832 = vadd.f32 %v783, %v831
    %v833 = vpop.f32.mrf.mxu0
    %v834 = vadd.f32 %v785, %v833
    %835 = vmatmul.bf16.gmra.mxu0 %v322
    %v836 = vpop.f32.mrf.mxu0
    %v837 = vadd.f32 %v788, %v836
    %v838 = vpop.f32.mrf.mxu0
    %v839 = vadd.f32 %v790, %v838
    %840 = vmatmul.bf16.gmra.mxu0 %v327
    %v841 = vpop.f32.mrf.mxu0
    %v842 = vadd.f32 %v793, %v841
    %v843 = vpop.f32.mrf.mxu0
    %v844 = vadd.f32 %v795, %v843
    %845 = vmatmul.bf16.gmra.mxu0 %v332
    %v846 = vpop.f32.mrf.mxu0
    %v847 = vadd.f32 %v798, %v846
    %v848 = vpop.f32.mrf.mxu0
    %v849 = vadd.f32 %v800, %v848
    %850 = vdwg.mxu0
    %851 = vmatpush.bf16.msra.mxu0 %v630
    %852 = vmatpush.bf16.msra.mxu0 %v628
    %853 = vmatpush.bf16.msra.mxu0 %v626
    %854 = vmatpush.bf16.msra.mxu0 %v624
    %855 = vmatpush.bf16.msra.mxu0 %v622
    %856 = vmatpush.bf16.msra.mxu0 %v620
    %857 = vmatpush.bf16.msra.mxu0 %v618
    %858 = vmatpush.bf16.msra.mxu0 %v616
    %859 = vmatmul.bf16.gmra.mxu0 %v298
    %v860 = vpop.f32.mrf.mxu0
    %v861 = vadd.f32 %v812, %v860
    %v862 = vpop.f32.mrf.mxu0
    %v863 = vadd.f32 %v814, %v862
    %864 = vmatmul.bf16.gmra.mxu0 %v303
    %v865 = vpop.f32.mrf.mxu0
    %v866 = vadd.f32 %v817, %v865
    %v867 = vpop.f32.mrf.mxu0
    %v868 = vadd.f32 %v819, %v867
    %869 = vmatmul.bf16.gmra.mxu0 %v308
    %v870 = vpop.f32.mrf.mxu0
    %v871 = vadd.f32 %v822, %v870
    %v872 = vpop.f32.mrf.mxu0
    %v873 = vadd.f32 %v824, %v872
    %874 = vmatmul.bf16.gmra.mxu0 %v313
    %v875 = vpop.f32.mrf.mxu0
    %v876 = vadd.f32 %v827, %v875
    %v877 = vpop.f32.mrf.mxu0
    %v878 = vadd.f32 %v829, %v877
    %879 = vmatmul.bf16.gmra.mxu0 %v318
    %v880 = vpop.f32.mrf.mxu0
    %v881 = vadd.f32 %v832, %v880
    %v882 = vpop.f32.mrf.mxu0
    %v883 = vadd.f32 %v834, %v882
    %884 = vmatmul.bf16.gmra.mxu0 %v323
    %v885 = vpop.f32.mrf.mxu0
    %v886 = vadd.f32 %v837, %v885
    %v887 = vpop.f32.mrf.mxu0
    %v888 = vadd.f32 %v839, %v887
    %889 = vmatmul.bf16.gmra.mxu0 %v328
    %v890 = vpop.f32.mrf.mxu0
    %v891 = vadd.f32 %v842, %v890
    %v892 = vpop.f32.mrf.mxu0
    %v893 = vadd.f32 %v844, %v892
    %894 = vmatmul.bf16.gmra.mxu0 %v333
    %v895 = vpop.f32.mrf.mxu0
    %v896 = vadd.f32 %v847, %v895
    %v897 = vpop.f32.mrf.mxu0
    %v898 = vadd.f32 %v849, %v897
    %899 = vdwg.mxu0
    %900 = vmatpush.bf16.msra.mxu0 %v646
    %901 = vmatpush.bf16.msra.mxu0 %v644
    %902 = vmatpush.bf16.msra.mxu0 %v642
    %903 = vmatpush.bf16.msra.mxu0 %v640
    %904 = vmatpush.bf16.msra.mxu0 %v638
    %905 = vmatpush.bf16.msra.mxu0 %v636
    %906 = vmatpush.bf16.msra.mxu0 %v634
    %907 = vmatpush.bf16.msra.mxu0 %v632
    %908 = vmatmul.bf16.gmra.mxu0 %v299
    %v909 = vpop.f32.mrf.mxu0
    %v910 = vadd.f32 %v861, %v909
    %v911 = vpop.f32.mrf.mxu0
    %v912 = vadd.f32 %v863, %v911
    %913 = vmatmul.bf16.gmra.mxu0 %v304
    %v914 = vpop.f32.mrf.mxu0
    %v915 = vadd.f32 %v866, %v914
    %v916 = vpop.f32.mrf.mxu0
    %v917 = vadd.f32 %v868, %v916
    %918 = vmatmul.bf16.gmra.mxu0 %v309
    %v919 = vpop.f32.mrf.mxu0
    %v920 = vadd.f32 %v871, %v919
    %v921 = vpop.f32.mrf.mxu0
    %v922 = vadd.f32 %v873, %v921
    %923 = vmatmul.bf16.gmra.mxu0 %v314
    %v924 = vpop.f32.mrf.mxu0
    %v925 = vadd.f32 %v876, %v924
    %v926 = vpop.f32.mrf.mxu0
    %v927 = vadd.f32 %v878, %v926
    %928 = vmatmul.bf16.gmra.mxu0 %v319
    %v929 = vpop.f32.mrf.mxu0
    %v930 = vadd.f32 %v881, %v929
    %v931 = vpop.f32.mrf.mxu0
    %v932 = vadd.f32 %v883, %v931
    %933 = vmatmul.bf16.gmra.mxu0 %v324
    %v934 = vpop.f32.mrf.mxu0
    %v935 = vadd.f32 %v886, %v934
    %v936 = vpop.f32.mrf.mxu0
    %v937 = vadd.f32 %v888, %v936
    %938 = vmatmul.bf16.gmra.mxu0 %v329
    %v939 = vpop.f32.mrf.mxu0
    %v940 = vadd.f32 %v891, %v939
    %v941 = vpop.f32.mrf.mxu0
    %v942 = vadd.f32 %v893, %v941
    %943 = vmatmul.bf16.gmra.mxu0 %v334
    %v944 = vpop.f32.mrf.mxu0
    %v945 = vadd.f32 %v896, %v944
    %v946 = vpop.f32.mrf.mxu0
    %v947 = vadd.f32 %v898, %v946
    %948 = vdwg.mxu0
    %949 = vmatpush.bf16.msra.mxu0 0
    %950 = vmatpush.bf16.msra.mxu0 0
    %951 = vmatpush.bf16.msra.mxu0 0
    %952 = vmatpush.bf16.msra.mxu0 0
    %953 = vmatpush.bf16.msra.mxu0 %v654
    %954 = vmatpush.bf16.msra.mxu0 %v652
    %955 = vmatpush.bf16.msra.mxu0 %v650
    %956 = vmatpush.bf16.msra.mxu0 %v648
    %957 = vmatmul.bf16.gmra.mxu0 %v730
    %v958 = vpop.f32.mrf.mxu0
    %v959 = vadd.f32 %v910, %v958
    %v960 = vpop.f32.mrf.mxu0
    %v961 = vadd.f32 %v912, %v960
    %962 = vmatmul.bf16.gmra.mxu0 %v733
    %v963 = vpop.f32.mrf.mxu0
    %v964 = vadd.f32 %v915, %v963
    %v965 = vpop.f32.mrf.mxu0
    %v966 = vadd.f32 %v917, %v965
    %967 = vmatmul.bf16.gmra.mxu0 %v736
    %v968 = vpop.f32.mrf.mxu0
    %v969 = vadd.f32 %v920, %v968
    %v970 = vpop.f32.mrf.mxu0
    %v971 = vadd.f32 %v922, %v970
    %972 = vmatmul.bf16.gmra.mxu0 %v739
    %v973 = vpop.f32.mrf.mxu0
    %v974 = vadd.f32 %v925, %v973
    %v975 = vpop.f32.mrf.mxu0
    %v976 = vadd.f32 %v927, %v975
    %977 = vmatmul.bf16.gmra.mxu0 %v742
    %v978 = vpop.f32.mrf.mxu0
    %v979 = vadd.f32 %v930, %v978
    %v980 = vpop.f32.mrf.mxu0
    %v981 = vadd.f32 %v932, %v980
    %982 = vmatmul.bf16.gmra.mxu0 %v745
    %v983 = vpop.f32.mrf.mxu0
    %v984 = vadd.f32 %v935, %v983
    %v985 = vpop.f32.mrf.mxu0
    %v986 = vadd.f32 %v937, %v985
    %987 = vmatmul.bf16.gmra.mxu0 %v748
    %v988 = vpop.f32.mrf.mxu0
    %v989 = vadd.f32 %v940, %v988
    %v990 = vpop.f32.mrf.mxu0
    %v991 = vadd.f32 %v942, %v990
    %992 = vmatmul.bf16.gmra.mxu0 %v751
    %v993 = vpop.f32.mrf.mxu0
    %v994 = vadd.f32 %v945, %v993
    %v995 = vpop.f32.mrf.mxu0
    %v996 = vadd.f32 %v947, %v995
    %997 = vdwg.mxu0
    %998 = vmatpush.bf16.msra.mxu0 %v599
    %999 = vmatpush.bf16.msra.mxu0 %v597
    %1000 = vmatpush.bf16.msra.mxu0 %v595
    %1001 = vmatpush.bf16.msra.mxu0 %v593
    %1002 = vmatpush.bf16.msra.mxu0 %v591
    %1003 = vmatpush.bf16.msra.mxu0 %v589
    %1004 = vmatpush.bf16.msra.mxu0 %v587
    %1005 = vmatpush.bf16.msra.mxu0 %v585
    %1006 = vmatmul.bf16.gmra.mxu0 %v296
    %v1007 = vpop.f32.mrf.mxu0
    %v1008 = vadd.f32 %v165, %v1007
    %v1009 = vpop.f32.mrf.mxu0
    %v1010 = vadd.f32 %v165, %v1009
    %1011 = vmatmul.bf16.gmra.mxu0 %v301
    %v1012 = vpop.f32.mrf.mxu0
    %v1013 = vadd.f32 %v165, %v1012
    %v1014 = vpop.f32.mrf.mxu0
    %v1015 = vadd.f32 %v165, %v1014
    %1016 = vmatmul.bf16.gmra.mxu0 %v306
    %v1017 = vpop.f32.mrf.mxu0
    %v1018 = vadd.f32 %v165, %v1017
    %v1019 = vpop.f32.mrf.mxu0
    %v1020 = vadd.f32 %v165, %v1019
    %1021 = vmatmul.bf16.gmra.mxu0 %v311
    %v1022 = vpop.f32.mrf.mxu0
    %v1023 = vadd.f32 %v165, %v1022
    %v1024 = vpop.f32.mrf.mxu0
    %v1025 = vadd.f32 %v165, %v1024
    %1026 = vmatmul.bf16.gmra.mxu0 %v316
    %v1027 = vpop.f32.mrf.mxu0
    %v1028 = vadd.f32 %v165, %v1027
    %v1029 = vpop.f32.mrf.mxu0
    %v1030 = vadd.f32 %v165, %v1029
    %1031 = vmatmul.bf16.gmra.mxu0 %v321
    %v1032 = vpop.f32.mrf.mxu0
    %v1033 = vadd.f32 %v165, %v1032
    %v1034 = vpop.f32.mrf.mxu0
    %v1035 = vadd.f32 %v165, %v1034
    %1036 = vmatmul.bf16.gmra.mxu0 %v326
    %v1037 = vpop.f32.mrf.mxu0
    %v1038 = vadd.f32 %v165, %v1037
    %v1039 = vpop.f32.mrf.mxu0
    %v1040 = vadd.f32 %v165, %v1039
    %1041 = vmatmul.bf16.gmra.mxu0 %v331
    %v1042 = vpop.f32.mrf.mxu0
    %v1043 = vadd.f32 %v165, %v1042
    %v1044 = vpop.f32.mrf.mxu0
    %v1045 = vadd.f32 %v165, %v1044
    %1046 = vdwg.mxu0
    %1047 = vmatpush.bf16.msra.mxu0 %v615
    %1048 = vmatpush.bf16.msra.mxu0 %v613
    %1049 = vmatpush.bf16.msra.mxu0 %v611
    %1050 = vmatpush.bf16.msra.mxu0 %v609
    %1051 = vmatpush.bf16.msra.mxu0 %v607
    %1052 = vmatpush.bf16.msra.mxu0 %v605
    %1053 = vmatpush.bf16.msra.mxu0 %v603
    %1054 = vmatpush.bf16.msra.mxu0 %v601
    %1055 = vmatmul.bf16.gmra.mxu0 %v297
    %v1056 = vpop.f32.mrf.mxu0
    %v1057 = vadd.f32 %v1008, %v1056
    %v1058 = vpop.f32.mrf.mxu0
    %v1059 = vadd.f32 %v1010, %v1058
    %1060 = vmatmul.bf16.gmra.mxu0 %v302
    %v1061 = vpop.f32.mrf.mxu0
    %v1062 = vadd.f32 %v1013, %v1061
    %v1063 = vpop.f32.mrf.mxu0
    %v1064 = vadd.f32 %v1015, %v1063
    %1065 = vmatmul.bf16.gmra.mxu0 %v307
    %v1066 = vpop.f32.mrf.mxu0
    %v1067 = vadd.f32 %v1018, %v1066
    %v1068 = vpop.f32.mrf.mxu0
    %v1069 = vadd.f32 %v1020, %v1068
    %1070 = vmatmul.bf16.gmra.mxu0 %v312
    %v1071 = vpop.f32.mrf.mxu0
    %v1072 = vadd.f32 %v1023, %v1071
    %v1073 = vpop.f32.mrf.mxu0
    %v1074 = vadd.f32 %v1025, %v1073
    %1075 = vmatmul.bf16.gmra.mxu0 %v317
    %v1076 = vpop.f32.mrf.mxu0
    %v1077 = vadd.f32 %v1028, %v1076
    %v1078 = vpop.f32.mrf.mxu0
    %v1079 = vadd.f32 %v1030, %v1078
    %1080 = vmatmul.bf16.gmra.mxu0 %v322
    %v1081 = vpop.f32.mrf.mxu0
    %v1082 = vadd.f32 %v1033, %v1081
    %v1083 = vpop.f32.mrf.mxu0
    %v1084 = vadd.f32 %v1035, %v1083
    %1085 = vmatmul.bf16.gmra.mxu0 %v327
    %v1086 = vpop.f32.mrf.mxu0
    %v1087 = vadd.f32 %v1038, %v1086
    %v1088 = vpop.f32.mrf.mxu0
    %v1089 = vadd.f32 %v1040, %v1088
    %1090 = vmatmul.bf16.gmra.mxu0 %v332
    %v1091 = vpop.f32.mrf.mxu0
    %v1092 = vadd.f32 %v1043, %v1091
    %v1093 = vpop.f32.mrf.mxu0
    %v1094 = vadd.f32 %v1045, %v1093
    %1095 = vdwg.mxu0
    %1096 = vmatpush.bf16.msra.mxu0 %v631
    %1097 = vmatpush.bf16.msra.mxu0 %v629
    %1098 = vmatpush.bf16.msra.mxu0 %v627
    %1099 = vmatpush.bf16.msra.mxu0 %v625
    %1100 = vmatpush.bf16.msra.mxu0 %v623
    %1101 = vmatpush.bf16.msra.mxu0 %v621
    %1102 = vmatpush.bf16.msra.mxu0 %v619
    %1103 = vmatpush.bf16.msra.mxu0 %v617
    %1104 = vmatmul.bf16.gmra.mxu0 %v298
    %v1105 = vpop.f32.mrf.mxu0
    %v1106 = vadd.f32 %v1057, %v1105
    %v1107 = vpop.f32.mrf.mxu0
    %v1108 = vadd.f32 %v1059, %v1107
    %1109 = vmatmul.bf16.gmra.mxu0 %v303
    %v1110 = vpop.f32.mrf.mxu0
    %v1111 = vadd.f32 %v1062, %v1110
    %v1112 = vpop.f32.mrf.mxu0
    %v1113 = vadd.f32 %v1064, %v1112
    %1114 = vmatmul.bf16.gmra.mxu0 %v308
    %v1115 = vpop.f32.mrf.mxu0
    %v1116 = vadd.f32 %v1067, %v1115
    %v1117 = vpop.f32.mrf.mxu0
    %v1118 = vadd.f32 %v1069, %v1117
    %1119 = vmatmul.bf16.gmra.mxu0 %v313
    %v1120 = vpop.f32.mrf.mxu0
    %v1121 = vadd.f32 %v1072, %v1120
    %v1122 = vpop.f32.mrf.mxu0
    %v1123 = vadd.f32 %v1074, %v1122
    %1124 = vmatmul.bf16.gmra.mxu0 %v318
    %v1125 = vpop.f32.mrf.mxu0
    %v1126 = vadd.f32 %v1077, %v1125
    %v1127 = vpop.f32.mrf.mxu0
    %v1128 = vadd.f32 %v1079, %v1127
    %1129 = vmatmul.bf16.gmra.mxu0 %v323
    %v1130 = vpop.f32.mrf.mxu0
    %v1131 = vadd.f32 %v1082, %v1130
    %v1132 = vpop.f32.mrf.mxu0
    %v1133 = vadd.f32 %v1084, %v1132
    %1134 = vmatmul.bf16.gmra.mxu0 %v328
    %v1135 = vpop.f32.mrf.mxu0
    %v1136 = vadd.f32 %v1087, %v1135
    %v1137 = vpop.f32.mrf.mxu0
    %v1138 = vadd.f32 %v1089, %v1137
    %1139 = vmatmul.bf16.gmra.mxu0 %v333
    %v1140 = vpop.f32.mrf.mxu0
    %v1141 = vadd.f32 %v1092, %v1140
    %v1142 = vpop.f32.mrf.mxu0
    %v1143 = vadd.f32 %v1094, %v1142
    %1144 = vdwg.mxu0
    %1145 = vmatpush.bf16.msra.mxu0 %v647
    %1146 = vmatpush.bf16.msra.mxu0 %v645
    %1147 = vmatpush.bf16.msra.mxu0 %v643
    %1148 = vmatpush.bf16.msra.mxu0 %v641
    %1149 = vmatpush.bf16.msra.mxu0 %v639
    %1150 = vmatpush.bf16.msra.mxu0 %v637
    %1151 = vmatpush.bf16.msra.mxu0 %v635
    %1152 = vmatpush.bf16.msra.mxu0 %v633
    %1153 = vmatmul.bf16.gmra.mxu0 %v299
    %v1154 = vpop.f32.mrf.mxu0
    %v1155 = vadd.f32 %v1106, %v1154
    %v1156 = vpop.f32.mrf.mxu0
    %v1157 = vadd.f32 %v1108, %v1156
    %1158 = vmatmul.bf16.gmra.mxu0 %v304
    %v1159 = vpop.f32.mrf.mxu0
    %v1160 = vadd.f32 %v1111, %v1159
    %v1161 = vpop.f32.mrf.mxu0
    %v1162 = vadd.f32 %v1113, %v1161
    %1163 = vmatmul.bf16.gmra.mxu0 %v309
    %v1164 = vpop.f32.mrf.mxu0
    %v1165 = vadd.f32 %v1116, %v1164
    %v1166 = vpop.f32.mrf.mxu0
    %v1167 = vadd.f32 %v1118, %v1166
    %1168 = vmatmul.bf16.gmra.mxu0 %v314
    %v1169 = vpop.f32.mrf.mxu0
    %v1170 = vadd.f32 %v1121, %v1169
    %v1171 = vpop.f32.mrf.mxu0
    %v1172 = vadd.f32 %v1123, %v1171
    %1173 = vmatmul.bf16.gmra.mxu0 %v319
    %v1174 = vpop.f32.mrf.mxu0
    %v1175 = vadd.f32 %v1126, %v1174
    %v1176 = vpop.f32.mrf.mxu0
    %v1177 = vadd.f32 %v1128, %v1176
    %1178 = vmatmul.bf16.gmra.mxu0 %v324
    %v1179 = vpop.f32.mrf.mxu0
    %v1180 = vadd.f32 %v1131, %v1179
    %v1181 = vpop.f32.mrf.mxu0
    %v1182 = vadd.f32 %v1133, %v1181
    %1183 = vmatmul.bf16.gmra.mxu0 %v329
    %v1184 = vpop.f32.mrf.mxu0
    %v1185 = vadd.f32 %v1136, %v1184
    %v1186 = vpop.f32.mrf.mxu0
    %v1187 = vadd.f32 %v1138, %v1186
    %1188 = vmatmul.bf16.gmra.mxu0 %v334
    %v1189 = vpop.f32.mrf.mxu0
    %v1190 = vadd.f32 %v1141, %v1189
    %v1191 = vpop.f32.mrf.mxu0
    %v1192 = vadd.f32 %v1143, %v1191
    %1193 = vdwg.mxu0
    %1194 = vmatpush.bf16.msra.mxu0 0
    %1195 = vmatpush.bf16.msra.mxu0 0
    %1196 = vmatpush.bf16.msra.mxu0 0
    %1197 = vmatpush.bf16.msra.mxu0 0
    %1198 = vmatpush.bf16.msra.mxu0 %v655
    %1199 = vmatpush.bf16.msra.mxu0 %v653
    %1200 = vmatpush.bf16.msra.mxu0 %v651
    %1201 = vmatpush.bf16.msra.mxu0 %v649
    %1202 = vmatmul.bf16.gmra.mxu0 %v730
    %v1203 = vpop.f32.mrf.mxu0
    %v1204 = vadd.f32 %v1155, %v1203
    %v1205 = vpop.f32.mrf.mxu0
    %v1206 = vadd.f32 %v1157, %v1205
    %1207 = vmatmul.bf16.gmra.mxu0 %v733
    %v1208 = vpop.f32.mrf.mxu0
    %v1209 = vadd.f32 %v1160, %v1208
    %v1210 = vpop.f32.mrf.mxu0
    %v1211 = vadd.f32 %v1162, %v1210
    %1212 = vmatmul.bf16.gmra.mxu0 %v736
    %v1213 = vpop.f32.mrf.mxu0
    %v1214 = vadd.f32 %v1165, %v1213
    %v1215 = vpop.f32.mrf.mxu0
    %v1216 = vadd.f32 %v1167, %v1215
    %1217 = vmatmul.bf16.gmra.mxu0 %v739
    %v1218 = vpop.f32.mrf.mxu0
    %v1219 = vadd.f32 %v1170, %v1218
    %v1220 = vpop.f32.mrf.mxu0
    %v1221 = vadd.f32 %v1172, %v1220
    %1222 = vmatmul.bf16.gmra.mxu0 %v742
    %v1223 = vpop.f32.mrf.mxu0
    %v1224 = vadd.f32 %v1175, %v1223
    %v1225 = vpop.f32.mrf.mxu0
    %v1226 = vadd.f32 %v1177, %v1225
    %1227 = vmatmul.bf16.gmra.mxu0 %v745
    %v1228 = vpop.f32.mrf.mxu0
    %v1229 = vadd.f32 %v1180, %v1228
    %v1230 = vpop.f32.mrf.mxu0
    %v1231 = vadd.f32 %v1182, %v1230
    %1232 = vmatmul.bf16.gmra.mxu0 %v748
    %v1233 = vpop.f32.mrf.mxu0
    %v1234 = vadd.f32 %v1185, %v1233
    %v1235 = vpop.f32.mrf.mxu0
    %v1236 = vadd.f32 %v1187, %v1235
    %1237 = vmatmul.bf16.gmra.mxu0 %v751
    %v1238 = vpop.f32.mrf.mxu0
    %v1239 = vadd.f32 %v1190, %v1238
    %v1240 = vpop.f32.mrf.mxu0
    %v1241 = vadd.f32 %v1192, %v1240
    %1242 = vdwg.mxu0
    %v1243 = vmax.f32 %v959, 0.0
    %v1244 = vmax.f32 %v961, 0.0
    %v1245 = vmax.f32 %v964, 0.0
    %v1246 = vmax.f32 %v966, 0.0
    %v1247 = vmax.f32 %v969, 0.0
    %v1248 = vmax.f32 %v971, 0.0
    %v1249 = vmax.f32 %v974, 0.0
    %v1250 = vmax.f32 %v976, 0.0
    %v1251 = vmax.f32 %v979, 0.0
    %v1252 = vmax.f32 %v981, 0.0
    %v1253 = vmax.f32 %v984, 0.0
    %v1254 = vmax.f32 %v986, 0.0
    %v1255 = vmax.f32 %v989, 0.0
    %v1256 = vmax.f32 %v991, 0.0
    %v1257 = vmax.f32 %v994, 0.0
    %v1258 = vmax.f32 %v996, 0.0
    %v1259 = vrot.slane %v1243, 7
    %v1260 = vrot.slane %v1244, 7
    %v1261 = vrot.slane %v1245, 7
    %v1262 = vrot.slane %v1246, 7
    %v1263 = vrot.slane %v1247, 7
    %v1264 = vrot.slane %v1248, 7
    %v1265 = vrot.slane %v1249, 7
    %v1266 = vrot.slane %v1250, 7
    %v1267 = vrot.slane %v1251, 7
    %v1268 = vrot.slane %v1252, 7
    %v1269 = vrot.slane %v1253, 7
    %v1270 = vrot.slane %v1254, 7
    %v1271 = vrot.slane %v1255, 7
    %v1272 = vrot.slane %v1256, 7
    %v1273 = vrot.slane %v1257, 7
    %v1274 = vrot.slane %v1258, 7
    %v1275 = vmul.f32 0.0, %v38
    %v1276 = vmul.f32 %v1259, %v38
    %v1277 = vmul.f32 %v1260, %v38
    %v1278 = vmul.f32 %v1261, %v38
    %v1279 = vmul.f32 %v1262, %v38
    %v1280 = vmul.f32 %v1263, %v38
    %v1281 = vmul.f32 %v1264, %v38
    %v1282 = vmul.f32 %v1265, %v38
    %v1283 = vmul.f32 %v1266, %v38
    %v1284 = vmul.f32 %v1267, %v38
    %v1285 = vmul.f32 %v1268, %v38
    %v1286 = vmul.f32 %v1269, %v38
    %v1287 = vmul.f32 %v1270, %v38
    %v1288 = vmul.f32 %v1271, %v38
    %v1289 = vmul.f32 %v1272, %v38
    %v1290 = vmul.f32 %v1273, %v38
    %v1291 = vmul.f32 %v1274, %v38
    %v1292 = vrot.slane %v1243, 1
    %v1293 = vrot.slane %v1244, 1
    %v1294 = vrot.slane %v1245, 1
    %v1295 = vrot.slane %v1246, 1
    %v1296 = vrot.slane %v1247, 1
    %v1297 = vrot.slane %v1248, 1
    %v1298 = vrot.slane %v1249, 1
    %v1299 = vrot.slane %v1250, 1
    %v1300 = vrot.slane %v1251, 1
    %v1301 = vrot.slane %v1252, 1
    %v1302 = vrot.slane %v1253, 1
    %v1303 = vrot.slane %v1254, 1
    %v1304 = vrot.slane %v1255, 1
    %v1305 = vrot.slane %v1256, 1
    %v1306 = vrot.slane %v1257, 1
    %v1307 = vrot.slane %v1258, 1
    %v1308 = vmul.f32 0.0, %v41
    %v1309 = vmul.f32 %v1292, %v41
    %v1310 = vmul.f32 %v1293, %v41
    %v1311 = vmul.f32 %v1294, %v41
    %v1312 = vmul.f32 %v1295, %v41
    %v1313 = vmul.f32 %v1296, %v41
    %v1314 = vmul.f32 %v1297, %v41
    %v1315 = vmul.f32 %v1298, %v41
    %v1316 = vmul.f32 %v1299, %v41
    %v1317 = vmul.f32 %v1300, %v41
    %v1318 = vmul.f32 %v1301, %v41
    %v1319 = vmul.f32 %v1302, %v41
    %v1320 = vmul.f32 %v1303, %v41
    %v1321 = vmul.f32 %v1304, %v41
    %v1322 = vmul.f32 %v1305, %v41
    %v1323 = vmul.f32 %v1306, %v41
    %v1324 = vmul.f32 %v1307, %v41
    %v1325 = vpack.c.bf16 %v1276, %v1275
    %v1326 = vpack.c.bf16 %v1243, 0.0
    %v1327 = vpack.c.bf16 %v1309, %v1308
    %v1328 = vpack.c.bf16 %v1277, %v1276
    %v1329 = vpack.c.bf16 %v1244, %v1243
    %v1330 = vpack.c.bf16 %v1310, %v1309
    %v1331 = vpack.c.bf16 %v1278, %v1277
    %v1332 = vpack.c.bf16 %v1245, %v1244
    %v1333 = vpack.c.bf16 %v1311, %v1310
    %v1334 = vpack.c.bf16 %v1279, %v1278
    %v1335 = vpack.c.bf16 %v1246, %v1245
    %v1336 = vpack.c.bf16 %v1312, %v1311
    %v1337 = vpack.c.bf16 %v1280, %v1279
    %v1338 = vpack.c.bf16 %v1247, %v1246
    %v1339 = vpack.c.bf16 %v1313, %v1312
    %v1340 = vpack.c.bf16 %v1281, %v1280
    %v1341 = vpack.c.bf16 %v1248, %v1247
    %v1342 = vpack.c.bf16 %v1314, %v1313
    %v1343 = vpack.c.bf16 %v1282, %v1281
    %v1344 = vpack.c.bf16 %v1249, %v1248
    %v1345 = vpack.c.bf16 %v1315, %v1314
    %v1346 = vpack.c.bf16 %v1283, %v1282
    %v1347 = vpack.c.bf16 %v1250, %v1249
    %v1348 = vpack.c.bf16 %v1316, %v1315
    %v1349 = vpack.c.bf16 %v1275, %v1283
    %v1350 = vpack.c.bf16 0.0, %v1250
    %v1351 = vpack.c.bf16 %v1308, %v1316
    %v1352 = vpack.c.bf16 %v1284, %v1275
    %v1353 = vpack.c.bf16 %v1251, 0.0
    %v1354 = vpack.c.bf16 %v1317, %v1308
    %v1355 = vpack.c.bf16 %v1285, %v1284
    %v1356 = vpack.c.bf16 %v1252, %v1251
    %v1357 = vpack.c.bf16 %v1318, %v1317
    %v1358 = vpack.c.bf16 %v1286, %v1285
    %v1359 = vpack.c.bf16 %v1253, %v1252
    %v1360 = vpack.c.bf16 %v1319, %v1318
    %v1361 = vpack.c.bf16 %v1287, %v1286
    %v1362 = vpack.c.bf16 %v1254, %v1253
    %v1363 = vpack.c.bf16 %v1320, %v1319
    %v1364 = vpack.c.bf16 %v1288, %v1287
    %v1365 = vpack.c.bf16 %v1255, %v1254
    %v1366 = vpack.c.bf16 %v1321, %v1320
    %v1367 = vpack.c.bf16 %v1289, %v1288
    %v1368 = vpack.c.bf16 %v1256, %v1255
    %v1369 = vpack.c.bf16 %v1322, %v1321
    %v1370 = vpack.c.bf16 %v1290, %v1289
    %v1371 = vpack.c.bf16 %v1257, %v1256
    %v1372 = vpack.c.bf16 %v1323, %v1322
    %v1373 = vpack.c.bf16 %v1291, %v1290
    %v1374 = vpack.c.bf16 %v1258, %v1257
    %v1375 = vpack.c.bf16 %v1324, %v1323
    %v1376 = vpack.c.bf16 %v1275, %v1291
    %v1377 = vpack.c.bf16 0.0, %v1258
    %v1378 = vpack.c.bf16 %v1308, %v1324
    %v1379 = vld [vmem:[%s3] sm:$0xf]
    %v1380 = vld [vmem:[%s3 + $0x4] sm:$0xf]
    %v1381 = vld [vmem:[%s3 + $0x8] sm:$0xf]
    %v1382 = vld [vmem:[%s3 + $0xc] sm:$0xf]
    %v1383 = vld [vmem:[%s3 + $0x10] sm:$0xf]
    %v1384 = vld [vmem:[%s3 + $0x14] sm:$0xf]
    %v1385 = vld [vmem:[%s3 + $0x18] sm:$0xf]
    %v1386 = vld [vmem:[%s3 + $0x1c] sm:$0xf]
    %v1387 = vld [vmem:[%s3 + $0x20] sm:$0xf]
    %v1388 = vld [vmem:[%s3 + $0x24] sm:$0xf]
    %v1389 = vld [vmem:[%s3 + $0x28] sm:$0xf]
    %v1390 = vld [vmem:[%s3 + $0x2c] sm:$0xf]
    %v1391 = vld [vmem:[%s3 + $0x30] sm:$0xf]
    %v1392 = vld [vmem:[%s3 + $0x34] sm:$0xf]
    %v1393 = vld [vmem:[%s3 + $0x38] sm:$0xf]
    %v1394 = vld [vmem:[%s3 + $0x3c] sm:$0xf]
    %v1395 = vld [vmem:[%s3 + $0x40] sm:$0xf]
    %v1396 = vld [vmem:[%s3 + $0x44] sm:$0xf]
    %v1397 = vld [vmem:[%s3 + $0x48] sm:$0xf]
    %v1398 = vld [vmem:[%s3 + $0x4c] sm:$0xf]
    %v1399 = vld [vmem:[%s3 + $0x50] sm:$0xf]
    %v1400 = vld [vmem:[%s3 + $0x54] sm:$0xf]
    %v1401 = vld [vmem:[%s3 + $0x58] sm:$0xf]
    %v1402 = vld [vmem:[%s3 + $0x5c] sm:$0xf]
    %v1403 = vld [vmem:[%s3 + $0x60] sm:$0xf]
    %v1404 = vld [vmem:[%s3 + $0x64] sm:$0xf]
    %v1405 = vld [vmem:[%s3 + $0x68] sm:$0xf]
    %v1406 = vld [vmem:[%s3 + $0x6c] sm:$0xf]
    %v1407 = vld [vmem:[%s3 + $0x70] sm:$0xf]
    %v1408 = vld [vmem:[%s3 + $0x74] sm:$0xf]
    %v1409 = vld [vmem:[%s3 + $0x78] sm:$0xf]
    %v1410 = vld [vmem:[%s3 + $0x7c] sm:$0xf]
    %v1411 = vld [vmem:[%s3 + $0x80] sm:$0xf]
    %v1412 = vld [vmem:[%s3 + $0x84] sm:$0xf]
    %v1413 = vld [vmem:[%s3 + $0x88] sm:$0xf]
    %v1414 = vld [vmem:[%s3 + $0x8c] sm:$0xf]
    %v1415 = vld [vmem:[%s3 + $0x90] sm:$0xf]
    %v1416 = vld [vmem:[%s3 + $0x94] sm:$0xf]
    %v1417 = vld [vmem:[%s3 + $0x98] sm:$0xf]
    %v1418 = vld [vmem:[%s3 + $0x9c] sm:$0xf]
    %v1419 = vld [vmem:[%s3 + $0xa0] sm:$0xf]
    %v1420 = vld [vmem:[%s3 + $0xa4] sm:$0xf]
    %v1421 = vld [vmem:[%s3 + $0xa8] sm:$0xf]
    %v1422 = vld [vmem:[%s3 + $0xac] sm:$0xf]
    %v1423 = vld [vmem:[%s3 + $0xb0] sm:$0xf]
    %v1424 = vld [vmem:[%s3 + $0xb4] sm:$0xf]
    %v1425 = vld [vmem:[%s3 + $0xb8] sm:$0xf]
    %v1426 = vld [vmem:[%s3 + $0xbc] sm:$0xf]
    %v1427 = vld [vmem:[%s3 + $0xc0] sm:$0xf]
    %v1428 = vld [vmem:[%s3 + $0xc4] sm:$0xf]
    %v1429 = vld [vmem:[%s3 + $0xc8] sm:$0xf]
    %v1430 = vld [vmem:[%s3 + $0xcc] sm:$0xf]
    %v1431 = vld [vmem:[%s3 + $0xd0] sm:$0xf]
    %v1432 = vld [vmem:[%s3 + $0xd4] sm:$0xf]
    %v1433 = vld [vmem:[%s3 + $0xd8] sm:$0xf]
    %v1434 = vld [vmem:[%s3 + $0xdc] sm:$0xf]
    %v1435 = vld [vmem:[%s3 + $0xe0] sm:$0xf]
    %v1436 = vld [vmem:[%s3 + $0xe4] sm:$0xf]
    %v1437 = vld [vmem:[%s3 + $0xe8] sm:$0xf]
    %v1438 = vld [vmem:[%s3 + $0xec] sm:$0xf]
    %v1439 = vld [vmem:[%s3 + $0xf0] sm:$0xf]
    %v1440 = vld [vmem:[%s3 + $0xf4] sm:$0xf]
    %v1441 = vld [vmem:[%s3 + $0xf8] sm:$0xf]
    %v1442 = vld [vmem:[%s3 + $0xfc] sm:$0xf]
    %v1443 = vld [vmem:[%s3 + $0x100] sm:$0xf]
    %v1444 = vld [vmem:[%s3 + $0x104] sm:$0xf]
    %v1445 = vld [vmem:[%s3 + $0x108] sm:$0xf]
    %v1446 = vld [vmem:[%s3 + $0x10c] sm:$0xf]
    %v1447 = vld [vmem:[%s3 + $0x110] sm:$0xf]
    %v1448 = vld [vmem:[%s3 + $0x114] sm:$0xf]
    %v1449 = vld [vmem:[%s3 + $0x118] sm:$0xf]
    %v1450 = vld [vmem:[%s3 + $0x11c] sm:$0xf]
    %v1451 = vld [vmem:[%s3 + $0x120] sm:$0xf]
    %v1452 = vld [vmem:[%s3 + $0x124] sm:$0xf]
    %v1453 = vld [vmem:[%s3 + $0x128] sm:$0xf]
    %v1454 = vld [vmem:[%s3 + $0x12c] sm:$0xf]
    %v1455 = vld [vmem:[%s3 + $0x130] sm:$0xf]
    %v1456 = vld [vmem:[%s3 + $0x134] sm:$0xf]
    %v1457 = vld [vmem:[%s3 + $0x138] sm:$0xf]
    %v1458 = vld [vmem:[%s3 + $0x13c] sm:$0xf]
    %v1459 = vld [vmem:[%s3 + $0x140] sm:$0xf]
    %v1460 = vld [vmem:[%s3 + $0x144] sm:$0xf]
    %v1461 = vld [vmem:[%s3 + $0x148] sm:$0xf]
    %v1462 = vld [vmem:[%s3 + $0x14c] sm:$0xf]
    %v1463 = vld [vmem:[%s3 + $0x150] sm:$0xf]
    %v1464 = vld [vmem:[%s3 + $0x154] sm:$0xf]
    %v1465 = vld [vmem:[%s3 + $0x158] sm:$0xf]
    %v1466 = vld [vmem:[%s3 + $0x15c] sm:$0xf]
    %v1467 = vld [vmem:[%s3 + $0x160] sm:$0xf]
    %v1468 = vld [vmem:[%s3 + $0x164] sm:$0xf]
    %v1469 = vld [vmem:[%s3 + $0x168] sm:$0xf]
    %v1470 = vld [vmem:[%s3 + $0x16c] sm:$0xf]
    %v1471 = vld [vmem:[%s3 + $0x170] sm:$0xf]
    %v1472 = vld [vmem:[%s3 + $0x174] sm:$0xf]
    %v1473 = vld [vmem:[%s3 + $0x178] sm:$0xf]
    %v1474 = vld [vmem:[%s3 + $0x17c] sm:$0xf]
    %v1475 = vld [vmem:[%s3 + $0x180] sm:$0xf]
    %v1476 = vld [vmem:[%s3 + $0x184] sm:$0xf]
    %v1477 = vld [vmem:[%s3 + $0x188] sm:$0xf]
    %v1478 = vld [vmem:[%s3 + $0x18c] sm:$0xf]
    %v1479 = vld [vmem:[%s3 + $0x190] sm:$0xf]
    %v1480 = vld [vmem:[%s3 + $0x194] sm:$0xf]
    %v1481 = vld [vmem:[%s3 + $0x198] sm:$0xf]
    %v1482 = vld [vmem:[%s3 + $0x19c] sm:$0xf]
    %v1483 = vld [vmem:[%s3 + $0x1a0] sm:$0xf]
    %v1484 = vld [vmem:[%s3 + $0x1a4] sm:$0xf]
    %v1485 = vld [vmem:[%s3 + $0x1a8] sm:$0xf]
    %v1486 = vld [vmem:[%s3 + $0x1ac] sm:$0xf]
    %v1487 = vld [vmem:[%s3 + $0x1b0] sm:$0xf]
    %v1488 = vld [vmem:[%s3 + $0x1b4] sm:$0xf]
    %v1489 = vld [vmem:[%s3 + $0x1b8] sm:$0xf]
    %v1490 = vld [vmem:[%s3 + $0x1bc] sm:$0xf]
    %v1491 = vld [vmem:[%s3 + $0x1c0] sm:$0xf]
    %v1492 = vld [vmem:[%s3 + $0x1c4] sm:$0xf]
    %v1493 = vld [vmem:[%s3 + $0x1c8] sm:$0xf]
    %v1494 = vld [vmem:[%s3 + $0x1cc] sm:$0xf]
    %v1495 = vld [vmem:[%s3 + $0x1d0] sm:$0xf]
    %v1496 = vld [vmem:[%s3 + $0x1d4] sm:$0xf]
    %v1497 = vld [vmem:[%s3 + $0x1d8] sm:$0xf]
    %v1498 = vld [vmem:[%s3 + $0x1dc] sm:$0xf]
    %v1499 = vld [vmem:[%s3 + $0x1e0] sm:$0xf]
    %v1500 = vld [vmem:[%s3 + $0x1e4] sm:$0xf]
    %v1501 = vld [vmem:[%s3 + $0x1e8] sm:$0xf]
    %v1502 = vld [vmem:[%s3 + $0x1ec] sm:$0xf]
    %v1503 = vld [vmem:[%s3 + $0x1f0] sm:$0xf]
    %v1504 = vld [vmem:[%s3 + $0x1f4] sm:$0xf]
    %v1505 = vld [vmem:[%s3 + $0x1f8] sm:$0xf]
    %v1506 = vld [vmem:[%s3 + $0x1fc] sm:$0xf]
    %v1507 = vld [vmem:[%s3 + $0x200] sm:$0xf]
    %v1508 = vld [vmem:[%s3 + $0x204] sm:$0xf]
    %v1509 = vld [vmem:[%s3 + $0x208] sm:$0xf]
    %v1510 = vld [vmem:[%s3 + $0x20c] sm:$0xf]
    %v1511 = vld [vmem:[%s3 + $0x210] sm:$0xf]
    %v1512 = vld [vmem:[%s3 + $0x214] sm:$0xf]
    %v1513 = vld [vmem:[%s3 + $0x218] sm:$0xf]
    %v1514 = vld [vmem:[%s3 + $0x21c] sm:$0xf]
    %v1515 = vld [vmem:[%s3 + $0x220] sm:$0xf]
    %v1516 = vld [vmem:[%s3 + $0x224] sm:$0xf]
    %v1517 = vld [vmem:[%s3 + $0x228] sm:$0xf]
    %v1518 = vld [vmem:[%s3 + $0x22c] sm:$0xf]
    %v1519 = vld [vmem:[%s3 + $0x230] sm:$0xf]
    %v1520 = vld [vmem:[%s3 + $0x234] sm:$0xf]
    %v1521 = vld [vmem:[%s3 + $0x238] sm:$0xf]
    %v1522 = vld [vmem:[%s3 + $0x23c] sm:$0xf]
    %v1523 = vld [vmem:[%s4] sm:$0x1]
    %v1525 = vperm.slane %v1523, 0
    %v1671 = vunpack.c.l.b16 %v1379
    %v1672 = vunpack.c.l.b16 %v1380
    %v1673 = vunpack.c.l.b16 %v1381
    %v1674 = vunpack.c.l.b16 %v1382
    %v1675 = vunpack.c.l.b16 %v1383
    %v1676 = vunpack.c.l.b16 %v1384
    %v1677 = vunpack.c.l.b16 %v1385
    %v1678 = vunpack.c.l.b16 %v1386
    %v1679 = vunpack.c.l.b16 %v1387
    %v1680 = vunpack.c.l.b16 %v1388
    %v1681 = vunpack.c.l.b16 %v1389
    %v1682 = vunpack.c.l.b16 %v1390
    %v1683 = vunpack.c.l.b16 %v1391
    %v1684 = vunpack.c.l.b16 %v1392
    %v1685 = vunpack.c.l.b16 %v1393
    %v1686 = vunpack.c.l.b16 %v1394
    %v1687 = vunpack.c.l.b16 %v1395
    %v1688 = vunpack.c.l.b16 %v1396
    %v1689 = vunpack.c.l.b16 %v1397
    %v1690 = vunpack.c.l.b16 %v1398
    %v1691 = vunpack.c.l.b16 %v1399
    %v1692 = vunpack.c.l.b16 %v1400
    %v1693 = vunpack.c.l.b16 %v1401
    %v1694 = vunpack.c.l.b16 %v1402
    %v1695 = vunpack.c.l.b16 %v1403
    %v1696 = vunpack.c.l.b16 %v1404
    %v1697 = vunpack.c.l.b16 %v1405
    %v1698 = vunpack.c.l.b16 %v1406
    %v1699 = vunpack.c.l.b16 %v1407
    %v1700 = vunpack.c.l.b16 %v1408
    %v1701 = vunpack.c.l.b16 %v1409
    %v1702 = vunpack.c.l.b16 %v1410
    %v1703 = vunpack.c.l.b16 %v1411
    %v1704 = vunpack.c.l.b16 %v1412
    %v1705 = vunpack.c.l.b16 %v1413
    %v1706 = vunpack.c.l.b16 %v1414
    %v1707 = vunpack.c.l.b16 %v1415
    %v1708 = vunpack.c.l.b16 %v1416
    %v1709 = vunpack.c.l.b16 %v1417
    %v1710 = vunpack.c.l.b16 %v1418
    %v1711 = vunpack.c.l.b16 %v1419
    %v1712 = vunpack.c.l.b16 %v1420
    %v1713 = vunpack.c.l.b16 %v1421
    %v1714 = vunpack.c.l.b16 %v1422
    %v1715 = vunpack.c.l.b16 %v1423
    %v1716 = vunpack.c.l.b16 %v1424
    %v1717 = vunpack.c.l.b16 %v1425
    %v1718 = vunpack.c.l.b16 %v1426
    %v1719 = vunpack.c.l.b16 %v1427
    %v1720 = vunpack.c.l.b16 %v1428
    %v1721 = vunpack.c.l.b16 %v1429
    %v1722 = vunpack.c.l.b16 %v1430
    %v1723 = vunpack.c.l.b16 %v1431
    %v1724 = vunpack.c.l.b16 %v1432
    %v1725 = vunpack.c.l.b16 %v1433
    %v1726 = vunpack.c.l.b16 %v1434
    %v1727 = vunpack.c.l.b16 %v1435
    %v1728 = vunpack.c.l.b16 %v1436
    %v1729 = vunpack.c.l.b16 %v1437
    %v1730 = vunpack.c.l.b16 %v1438
    %v1731 = vunpack.c.l.b16 %v1439
    %v1732 = vunpack.c.l.b16 %v1440
    %v1733 = vunpack.c.l.b16 %v1441
    %v1734 = vunpack.c.l.b16 %v1442
    %v1735 = vunpack.c.l.b16 %v1443
    %v1736 = vunpack.c.l.b16 %v1444
    %v1737 = vunpack.c.l.b16 %v1445
    %v1738 = vunpack.c.l.b16 %v1446
    %v1739 = vunpack.c.l.b16 %v1447
    %v1740 = vunpack.c.l.b16 %v1448
    %v1741 = vunpack.c.l.b16 %v1449
    %v1742 = vunpack.c.l.b16 %v1450
    %v1743 = vunpack.c.l.b16 %v1451
    %v1744 = vunpack.c.l.b16 %v1452
    %v1745 = vunpack.c.l.b16 %v1453
    %v1746 = vunpack.c.l.b16 %v1454
    %v1747 = vunpack.c.l.b16 %v1455
    %v1748 = vunpack.c.l.b16 %v1456
    %v1749 = vunpack.c.l.b16 %v1457
    %v1750 = vunpack.c.l.b16 %v1458
    %v1751 = vunpack.c.l.b16 %v1459
    %v1752 = vunpack.c.l.b16 %v1460
    %v1753 = vunpack.c.l.b16 %v1461
    %v1754 = vunpack.c.l.b16 %v1462
    %v1755 = vunpack.c.l.b16 %v1463
    %v1756 = vunpack.c.l.b16 %v1464
    %v1757 = vunpack.c.l.b16 %v1465
    %v1758 = vunpack.c.l.b16 %v1466
    %v1759 = vunpack.c.l.b16 %v1467
    %v1760 = vunpack.c.l.b16 %v1468
    %v1761 = vunpack.c.l.b16 %v1469
    %v1762 = vunpack.c.l.b16 %v1470
    %v1763 = vunpack.c.l.b16 %v1471
    %v1764 = vunpack.c.l.b16 %v1472
    %v1765 = vunpack.c.l.b16 %v1473
    %v1766 = vunpack.c.l.b16 %v1474
    %v1767 = vunpack.c.l.b16 %v1475
    %v1768 = vunpack.c.l.b16 %v1476
    %v1769 = vunpack.c.l.b16 %v1477
    %v1770 = vunpack.c.l.b16 %v1478
    %v1771 = vunpack.c.l.b16 %v1479
    %v1772 = vunpack.c.l.b16 %v1480
    %v1773 = vunpack.c.l.b16 %v1481
    %v1774 = vunpack.c.l.b16 %v1482
    %v1775 = vunpack.c.l.b16 %v1483
    %v1776 = vunpack.c.l.b16 %v1484
    %v1777 = vunpack.c.l.b16 %v1485
    %v1778 = vunpack.c.l.b16 %v1486
    %v1779 = vunpack.c.l.b16 %v1487
    %v1780 = vunpack.c.l.b16 %v1488
    %v1781 = vunpack.c.l.b16 %v1489
    %v1782 = vunpack.c.l.b16 %v1490
    %v1783 = vunpack.c.l.b16 %v1491
    %v1784 = vunpack.c.l.b16 %v1492
    %v1785 = vunpack.c.l.b16 %v1493
    %v1786 = vunpack.c.l.b16 %v1494
    %v1787 = vunpack.c.l.b16 %v1495
    %v1788 = vunpack.c.l.b16 %v1496
    %v1789 = vunpack.c.l.b16 %v1497
    %v1790 = vunpack.c.l.b16 %v1498
    %v1791 = vunpack.c.l.b16 %v1499
    %v1792 = vunpack.c.l.b16 %v1500
    %v1793 = vunpack.c.l.b16 %v1501
    %v1794 = vunpack.c.l.b16 %v1502
    %v1795 = vunpack.c.l.b16 %v1503
    %v1796 = vunpack.c.l.b16 %v1504
    %v1797 = vunpack.c.l.b16 %v1505
    %v1798 = vunpack.c.l.b16 %v1506
    %v1799 = vunpack.c.l.b16 %v1507
    %v1800 = vunpack.c.l.b16 %v1508
    %v1801 = vunpack.c.l.b16 %v1509
    %v1802 = vunpack.c.l.b16 %v1510
    %v1803 = vunpack.c.l.b16 %v1511
    %v1804 = vunpack.c.l.b16 %v1512
    %v1805 = vunpack.c.l.b16 %v1513
    %v1806 = vunpack.c.l.b16 %v1514
    %v1807 = vunpack.c.l.b16 %v1515
    %v1808 = vunpack.c.l.b16 %v1516
    %v1809 = vunpack.c.l.b16 %v1517
    %v1810 = vunpack.c.l.b16 %v1518
    %v1811 = vunpack.c.l.b16 %v1519
    %v1812 = vunpack.c.l.b16 %v1520
    %v1813 = vunpack.c.l.b16 %v1521
    %v1814 = vunpack.c.l.b16 %v1522
    %v1815 = vpack.c.b16 %v1672, %v1671
    %v1816 = vpack.c.b16 %v1674, %v1673
    %v1817 = vpack.c.b16 %v1676, %v1675
    %v1818 = vpack.c.b16 %v1678, %v1677
    %v1819 = vpack.c.b16 %v1680, %v1679
    %v1820 = vpack.c.b16 %v1682, %v1681
    %v1821 = vpack.c.b16 %v1684, %v1683
    %v1822 = vpack.c.b16 %v1686, %v1685
    %v1823 = vpack.c.b16 %v1688, %v1687
    %v1824 = vpack.c.b16 %v1690, %v1689
    %v1825 = vpack.c.b16 %v1692, %v1691
    %v1826 = vpack.c.b16 %v1694, %v1693
    %v1827 = vpack.c.b16 %v1696, %v1695
    %v1828 = vpack.c.b16 %v1698, %v1697
    %v1829 = vpack.c.b16 %v1700, %v1699
    %v1830 = vpack.c.b16 %v1702, %v1701
    %v1831 = vpack.c.b16 %v1704, %v1703
    %v1832 = vpack.c.b16 %v1706, %v1705
    %v1833 = vpack.c.b16 %v1708, %v1707
    %v1834 = vpack.c.b16 %v1710, %v1709
    %v1835 = vpack.c.b16 %v1712, %v1711
    %v1836 = vpack.c.b16 %v1714, %v1713
    %v1837 = vpack.c.b16 %v1716, %v1715
    %v1838 = vpack.c.b16 %v1718, %v1717
    %v1839 = vpack.c.b16 %v1720, %v1719
    %v1840 = vpack.c.b16 %v1722, %v1721
    %v1841 = vpack.c.b16 %v1724, %v1723
    %v1842 = vpack.c.b16 %v1726, %v1725
    %v1843 = vpack.c.b16 %v1728, %v1727
    %v1844 = vpack.c.b16 %v1730, %v1729
    %v1845 = vpack.c.b16 %v1732, %v1731
    %v1846 = vpack.c.b16 %v1734, %v1733
    %v1847 = vpack.c.b16 %v1736, %v1735
    %v1848 = vpack.c.b16 %v1738, %v1737
    %v1849 = vpack.c.b16 %v1740, %v1739
    %v1850 = vpack.c.b16 %v1742, %v1741
    %v1851 = vpack.c.b16 %v1744, %v1743
    %v1852 = vpack.c.b16 %v1746, %v1745
    %v1853 = vpack.c.b16 %v1748, %v1747
    %v1854 = vpack.c.b16 %v1750, %v1749
    %v1855 = vpack.c.b16 %v1752, %v1751
    %v1856 = vpack.c.b16 %v1754, %v1753
    %v1857 = vpack.c.b16 %v1756, %v1755
    %v1858 = vpack.c.b16 %v1758, %v1757
    %v1859 = vpack.c.b16 %v1760, %v1759
    %v1860 = vpack.c.b16 %v1762, %v1761
    %v1861 = vpack.c.b16 %v1764, %v1763
    %v1862 = vpack.c.b16 %v1766, %v1765
    %v1863 = vpack.c.b16 %v1768, %v1767
    %v1864 = vpack.c.b16 %v1770, %v1769
    %v1865 = vpack.c.b16 %v1772, %v1771
    %v1866 = vpack.c.b16 %v1774, %v1773
    %v1867 = vpack.c.b16 %v1776, %v1775
    %v1868 = vpack.c.b16 %v1778, %v1777
    %v1869 = vpack.c.b16 %v1780, %v1779
    %v1870 = vpack.c.b16 %v1782, %v1781
    %v1871 = vpack.c.b16 %v1784, %v1783
    %v1872 = vpack.c.b16 %v1786, %v1785
    %v1873 = vpack.c.b16 %v1788, %v1787
    %v1874 = vpack.c.b16 %v1790, %v1789
    %v1875 = vpack.c.b16 %v1792, %v1791
    %v1876 = vpack.c.b16 %v1794, %v1793
    %v1877 = vpack.c.b16 %v1796, %v1795
    %v1878 = vpack.c.b16 %v1798, %v1797
    %v1879 = vpack.c.b16 %v1800, %v1799
    %v1880 = vpack.c.b16 %v1802, %v1801
    %v1881 = vpack.c.b16 %v1804, %v1803
    %v1882 = vpack.c.b16 %v1806, %v1805
    %v1883 = vpack.c.b16 %v1808, %v1807
    %v1884 = vpack.c.b16 %v1810, %v1809
    %v1885 = vpack.c.b16 %v1812, %v1811
    %v1886 = vpack.c.b16 %v1814, %v1813
    %1959 = vmatpush.bf16.msra.mxu0 %v1822
    %1960 = vmatpush.bf16.msra.mxu0 %v1821
    %1961 = vmatpush.bf16.msra.mxu0 %v1820
    %1962 = vmatpush.bf16.msra.mxu0 %v1819
    %1963 = vmatpush.bf16.msra.mxu0 %v1818
    %1964 = vmatpush.bf16.msra.mxu0 %v1817
    %1965 = vmatpush.bf16.msra.mxu0 %v1816
    %1966 = vmatpush.bf16.msra.mxu0 %v1815
    %1967 = vmatmul.bf16.gmra.mxu0 %v1325
    %v1968 = vpop.f32.mrf.mxu0
    %v1969 = vadd.f32 %v1525, %v1968
    %v1970 = vpop.f32.mrf.mxu0
    %v1971 = vadd.f32 %v1525, %v1970
    %1972 = vmatmul.bf16.gmra.mxu0 %v1331
    %v1973 = vpop.f32.mrf.mxu0
    %v1974 = vadd.f32 %v1525, %v1973
    %v1975 = vpop.f32.mrf.mxu0
    %v1976 = vadd.f32 %v1525, %v1975
    %1977 = vmatmul.bf16.gmra.mxu0 %v1337
    %v1978 = vpop.f32.mrf.mxu0
    %v1979 = vadd.f32 %v1525, %v1978
    %v1980 = vpop.f32.mrf.mxu0
    %v1981 = vadd.f32 %v1525, %v1980
    %1982 = vmatmul.bf16.gmra.mxu0 %v1343
    %v1983 = vpop.f32.mrf.mxu0
    %v1984 = vadd.f32 %v1525, %v1983
    %v1985 = vpop.f32.mrf.mxu0
    %v1986 = vadd.f32 %v1525, %v1985
    %1987 = vmatmul.bf16.gmra.mxu0 %v1352
    %v1988 = vpop.f32.mrf.mxu0
    %v1989 = vadd.f32 %v1525, %v1988
    %v1990 = vpop.f32.mrf.mxu0
    %v1991 = vadd.f32 %v1525, %v1990
    %1992 = vmatmul.bf16.gmra.mxu0 %v1358
    %v1993 = vpop.f32.mrf.mxu0
    %v1994 = vadd.f32 %v1525, %v1993
    %v1995 = vpop.f32.mrf.mxu0
    %v1996 = vadd.f32 %v1525, %v1995
    %1997 = vmatmul.bf16.gmra.mxu0 %v1364
    %v1998 = vpop.f32.mrf.mxu0
    %v1999 = vadd.f32 %v1525, %v1998
    %v2000 = vpop.f32.mrf.mxu0
    %v2001 = vadd.f32 %v1525, %v2000
    %2002 = vmatmul.bf16.gmra.mxu0 %v1370
    %v2003 = vpop.f32.mrf.mxu0
    %v2004 = vadd.f32 %v1525, %v2003
    %v2005 = vpop.f32.mrf.mxu0
    %v2006 = vadd.f32 %v1525, %v2005
    %2007 = vdwg.mxu0
    %2008 = vmatpush.bf16.msra.mxu0 %v1830
    %2009 = vmatpush.bf16.msra.mxu0 %v1829
    %2010 = vmatpush.bf16.msra.mxu0 %v1828
    %2011 = vmatpush.bf16.msra.mxu0 %v1827
    %2012 = vmatpush.bf16.msra.mxu0 %v1826
    %2013 = vmatpush.bf16.msra.mxu0 %v1825
    %2014 = vmatpush.bf16.msra.mxu0 %v1824
    %2015 = vmatpush.bf16.msra.mxu0 %v1823
    %2016 = vmatmul.bf16.gmra.mxu0 %v1326
    %v2017 = vpop.f32.mrf.mxu0
    %v2018 = vadd.f32 %v1969, %v2017
    %v2019 = vpop.f32.mrf.mxu0
    %v2020 = vadd.f32 %v1971, %v2019
    %2021 = vmatmul.bf16.gmra.mxu0 %v1332
    %v2022 = vpop.f32.mrf.mxu0
    %v2023 = vadd.f32 %v1974, %v2022
    %v2024 = vpop.f32.mrf.mxu0
    %v2025 = vadd.f32 %v1976, %v2024
    %2026 = vmatmul.bf16.gmra.mxu0 %v1338
    %v2027 = vpop.f32.mrf.mxu0
    %v2028 = vadd.f32 %v1979, %v2027
    %v2029 = vpop.f32.mrf.mxu0
    %v2030 = vadd.f32 %v1981, %v2029
    %2031 = vmatmul.bf16.gmra.mxu0 %v1344
    %v2032 = vpop.f32.mrf.mxu0
    %v2033 = vadd.f32 %v1984, %v2032
    %v2034 = vpop.f32.mrf.mxu0
    %v2035 = vadd.f32 %v1986, %v2034
    %2036 = vmatmul.bf16.gmra.mxu0 %v1353
    %v2037 = vpop.f32.mrf.mxu0
    %v2038 = vadd.f32 %v1989, %v2037
    %v2039 = vpop.f32.mrf.mxu0
    %v2040 = vadd.f32 %v1991, %v2039
    %2041 = vmatmul.bf16.gmra.mxu0 %v1359
    %v2042 = vpop.f32.mrf.mxu0
    %v2043 = vadd.f32 %v1994, %v2042
    %v2044 = vpop.f32.mrf.mxu0
    %v2045 = vadd.f32 %v1996, %v2044
    %2046 = vmatmul.bf16.gmra.mxu0 %v1365
    %v2047 = vpop.f32.mrf.mxu0
    %v2048 = vadd.f32 %v1999, %v2047
    %v2049 = vpop.f32.mrf.mxu0
    %v2050 = vadd.f32 %v2001, %v2049
    %2051 = vmatmul.bf16.gmra.mxu0 %v1371
    %v2052 = vpop.f32.mrf.mxu0
    %v2053 = vadd.f32 %v2004, %v2052
    %v2054 = vpop.f32.mrf.mxu0
    %v2055 = vadd.f32 %v2006, %v2054
    %2056 = vdwg.mxu0
    %2057 = vmatpush.bf16.msra.mxu0 %v1838
    %2058 = vmatpush.bf16.msra.mxu0 %v1837
    %2059 = vmatpush.bf16.msra.mxu0 %v1836
    %2060 = vmatpush.bf16.msra.mxu0 %v1835
    %2061 = vmatpush.bf16.msra.mxu0 %v1834
    %2062 = vmatpush.bf16.msra.mxu0 %v1833
    %2063 = vmatpush.bf16.msra.mxu0 %v1832
    %2064 = vmatpush.bf16.msra.mxu0 %v1831
    %2065 = vmatmul.bf16.gmra.mxu0 %v1327
    %v2066 = vpop.f32.mrf.mxu0
    %v2067 = vadd.f32 %v2018, %v2066
    %v2068 = vpop.f32.mrf.mxu0
    %v2069 = vadd.f32 %v2020, %v2068
    %2070 = vmatmul.bf16.gmra.mxu0 %v1333
    %v2071 = vpop.f32.mrf.mxu0
    %v2072 = vadd.f32 %v2023, %v2071
    %v2073 = vpop.f32.mrf.mxu0
    %v2074 = vadd.f32 %v2025, %v2073
    %2075 = vmatmul.bf16.gmra.mxu0 %v1339
    %v2076 = vpop.f32.mrf.mxu0
    %v2077 = vadd.f32 %v2028, %v2076
    %v2078 = vpop.f32.mrf.mxu0
    %v2079 = vadd.f32 %v2030, %v2078
    %2080 = vmatmul.bf16.gmra.mxu0 %v1345
    %v2081 = vpop.f32.mrf.mxu0
    %v2082 = vadd.f32 %v2033, %v2081
    %v2083 = vpop.f32.mrf.mxu0
    %v2084 = vadd.f32 %v2035, %v2083
    %2085 = vmatmul.bf16.gmra.mxu0 %v1354
    %v2086 = vpop.f32.mrf.mxu0
    %v2087 = vadd.f32 %v2038, %v2086
    %v2088 = vpop.f32.mrf.mxu0
    %v2089 = vadd.f32 %v2040, %v2088
    %2090 = vmatmul.bf16.gmra.mxu0 %v1360
    %v2091 = vpop.f32.mrf.mxu0
    %v2092 = vadd.f32 %v2043, %v2091
    %v2093 = vpop.f32.mrf.mxu0
    %v2094 = vadd.f32 %v2045, %v2093
    %2095 = vmatmul.bf16.gmra.mxu0 %v1366
    %v2096 = vpop.f32.mrf.mxu0
    %v2097 = vadd.f32 %v2048, %v2096
    %v2098 = vpop.f32.mrf.mxu0
    %v2099 = vadd.f32 %v2050, %v2098
    %2100 = vmatmul.bf16.gmra.mxu0 %v1372
    %v2101 = vpop.f32.mrf.mxu0
    %v2102 = vadd.f32 %v2053, %v2101
    %v2103 = vpop.f32.mrf.mxu0
    %v2104 = vadd.f32 %v2055, %v2103
    %2105 = vdwg.mxu0
    %2106 = vmatpush.bf16.msra.mxu0 %v1846
    %2107 = vmatpush.bf16.msra.mxu0 %v1845
    %2108 = vmatpush.bf16.msra.mxu0 %v1844
    %2109 = vmatpush.bf16.msra.mxu0 %v1843
    %2110 = vmatpush.bf16.msra.mxu0 %v1842
    %2111 = vmatpush.bf16.msra.mxu0 %v1841
    %2112 = vmatpush.bf16.msra.mxu0 %v1840
    %2113 = vmatpush.bf16.msra.mxu0 %v1839
    %2114 = vmatmul.bf16.gmra.mxu0 %v1328
    %v2115 = vpop.f32.mrf.mxu0
    %v2116 = vadd.f32 %v2067, %v2115
    %v2117 = vpop.f32.mrf.mxu0
    %v2118 = vadd.f32 %v2069, %v2117
    %2119 = vmatmul.bf16.gmra.mxu0 %v1334
    %v2120 = vpop.f32.mrf.mxu0
    %v2121 = vadd.f32 %v2072, %v2120
    %v2122 = vpop.f32.mrf.mxu0
    %v2123 = vadd.f32 %v2074, %v2122
    %2124 = vmatmul.bf16.gmra.mxu0 %v1340
    %v2125 = vpop.f32.mrf.mxu0
    %v2126 = vadd.f32 %v2077, %v2125
    %v2127 = vpop.f32.mrf.mxu0
    %v2128 = vadd.f32 %v2079, %v2127
    %2129 = vmatmul.bf16.gmra.mxu0 %v1346
    %v2130 = vpop.f32.mrf.mxu0
    %v2131 = vadd.f32 %v2082, %v2130
    %v2132 = vpop.f32.mrf.mxu0
    %v2133 = vadd.f32 %v2084, %v2132
    %2134 = vmatmul.bf16.gmra.mxu0 %v1355
    %v2135 = vpop.f32.mrf.mxu0
    %v2136 = vadd.f32 %v2087, %v2135
    %v2137 = vpop.f32.mrf.mxu0
    %v2138 = vadd.f32 %v2089, %v2137
    %2139 = vmatmul.bf16.gmra.mxu0 %v1361
    %v2140 = vpop.f32.mrf.mxu0
    %v2141 = vadd.f32 %v2092, %v2140
    %v2142 = vpop.f32.mrf.mxu0
    %v2143 = vadd.f32 %v2094, %v2142
    %2144 = vmatmul.bf16.gmra.mxu0 %v1367
    %v2145 = vpop.f32.mrf.mxu0
    %v2146 = vadd.f32 %v2097, %v2145
    %v2147 = vpop.f32.mrf.mxu0
    %v2148 = vadd.f32 %v2099, %v2147
    %2149 = vmatmul.bf16.gmra.mxu0 %v1373
    %v2150 = vpop.f32.mrf.mxu0
    %v2151 = vadd.f32 %v2102, %v2150
    %v2152 = vpop.f32.mrf.mxu0
    %v2153 = vadd.f32 %v2104, %v2152
    %2154 = vdwg.mxu0
    %2155 = vmatpush.bf16.msra.mxu0 %v1854
    %2156 = vmatpush.bf16.msra.mxu0 %v1853
    %2157 = vmatpush.bf16.msra.mxu0 %v1852
    %2158 = vmatpush.bf16.msra.mxu0 %v1851
    %2159 = vmatpush.bf16.msra.mxu0 %v1850
    %2160 = vmatpush.bf16.msra.mxu0 %v1849
    %2161 = vmatpush.bf16.msra.mxu0 %v1848
    %2162 = vmatpush.bf16.msra.mxu0 %v1847
    %2163 = vmatmul.bf16.gmra.mxu0 %v1329
    %v2164 = vpop.f32.mrf.mxu0
    %v2165 = vadd.f32 %v2116, %v2164
    %v2166 = vpop.f32.mrf.mxu0
    %v2167 = vadd.f32 %v2118, %v2166
    %2168 = vmatmul.bf16.gmra.mxu0 %v1335
    %v2169 = vpop.f32.mrf.mxu0
    %v2170 = vadd.f32 %v2121, %v2169
    %v2171 = vpop.f32.mrf.mxu0
    %v2172 = vadd.f32 %v2123, %v2171
    %2173 = vmatmul.bf16.gmra.mxu0 %v1341
    %v2174 = vpop.f32.mrf.mxu0
    %v2175 = vadd.f32 %v2126, %v2174
    %v2176 = vpop.f32.mrf.mxu0
    %v2177 = vadd.f32 %v2128, %v2176
    %2178 = vmatmul.bf16.gmra.mxu0 %v1347
    %v2179 = vpop.f32.mrf.mxu0
    %v2180 = vadd.f32 %v2131, %v2179
    %v2181 = vpop.f32.mrf.mxu0
    %v2182 = vadd.f32 %v2133, %v2181
    %2183 = vmatmul.bf16.gmra.mxu0 %v1356
    %v2184 = vpop.f32.mrf.mxu0
    %v2185 = vadd.f32 %v2136, %v2184
    %v2186 = vpop.f32.mrf.mxu0
    %v2187 = vadd.f32 %v2138, %v2186
    %2188 = vmatmul.bf16.gmra.mxu0 %v1362
    %v2189 = vpop.f32.mrf.mxu0
    %v2190 = vadd.f32 %v2141, %v2189
    %v2191 = vpop.f32.mrf.mxu0
    %v2192 = vadd.f32 %v2143, %v2191
    %2193 = vmatmul.bf16.gmra.mxu0 %v1368
    %v2194 = vpop.f32.mrf.mxu0
    %v2195 = vadd.f32 %v2146, %v2194
    %v2196 = vpop.f32.mrf.mxu0
    %v2197 = vadd.f32 %v2148, %v2196
    %2198 = vmatmul.bf16.gmra.mxu0 %v1374
    %v2199 = vpop.f32.mrf.mxu0
    %v2200 = vadd.f32 %v2151, %v2199
    %v2201 = vpop.f32.mrf.mxu0
    %v2202 = vadd.f32 %v2153, %v2201
    %2203 = vdwg.mxu0
    %2204 = vmatpush.bf16.msra.mxu0 %v1862
    %2205 = vmatpush.bf16.msra.mxu0 %v1861
    %2206 = vmatpush.bf16.msra.mxu0 %v1860
    %2207 = vmatpush.bf16.msra.mxu0 %v1859
    %2208 = vmatpush.bf16.msra.mxu0 %v1858
    %2209 = vmatpush.bf16.msra.mxu0 %v1857
    %2210 = vmatpush.bf16.msra.mxu0 %v1856
    %2211 = vmatpush.bf16.msra.mxu0 %v1855
    %2212 = vmatmul.bf16.gmra.mxu0 %v1330
    %v2213 = vpop.f32.mrf.mxu0
    %v2214 = vadd.f32 %v2165, %v2213
    %v2215 = vpop.f32.mrf.mxu0
    %v2216 = vadd.f32 %v2167, %v2215
    %2217 = vmatmul.bf16.gmra.mxu0 %v1336
    %v2218 = vpop.f32.mrf.mxu0
    %v2219 = vadd.f32 %v2170, %v2218
    %v2220 = vpop.f32.mrf.mxu0
    %v2221 = vadd.f32 %v2172, %v2220
    %2222 = vmatmul.bf16.gmra.mxu0 %v1342
    %v2223 = vpop.f32.mrf.mxu0
    %v2224 = vadd.f32 %v2175, %v2223
    %v2225 = vpop.f32.mrf.mxu0
    %v2226 = vadd.f32 %v2177, %v2225
    %2227 = vmatmul.bf16.gmra.mxu0 %v1348
    %v2228 = vpop.f32.mrf.mxu0
    %v2229 = vadd.f32 %v2180, %v2228
    %v2230 = vpop.f32.mrf.mxu0
    %v2231 = vadd.f32 %v2182, %v2230
    %2232 = vmatmul.bf16.gmra.mxu0 %v1357
    %v2233 = vpop.f32.mrf.mxu0
    %v2234 = vadd.f32 %v2185, %v2233
    %v2235 = vpop.f32.mrf.mxu0
    %v2236 = vadd.f32 %v2187, %v2235
    %2237 = vmatmul.bf16.gmra.mxu0 %v1363
    %v2238 = vpop.f32.mrf.mxu0
    %v2239 = vadd.f32 %v2190, %v2238
    %v2240 = vpop.f32.mrf.mxu0
    %v2241 = vadd.f32 %v2192, %v2240
    %2242 = vmatmul.bf16.gmra.mxu0 %v1369
    %v2243 = vpop.f32.mrf.mxu0
    %v2244 = vadd.f32 %v2195, %v2243
    %v2245 = vpop.f32.mrf.mxu0
    %v2246 = vadd.f32 %v2197, %v2245
    %2247 = vmatmul.bf16.gmra.mxu0 %v1375
    %v2248 = vpop.f32.mrf.mxu0
    %v2249 = vadd.f32 %v2200, %v2248
    %v2250 = vpop.f32.mrf.mxu0
    %v2251 = vadd.f32 %v2202, %v2250
    %2252 = vdwg.mxu0
    %2253 = vmatpush.bf16.msra.mxu0 %v1870
    %2254 = vmatpush.bf16.msra.mxu0 %v1869
    %2255 = vmatpush.bf16.msra.mxu0 %v1868
    %2256 = vmatpush.bf16.msra.mxu0 %v1867
    %2257 = vmatpush.bf16.msra.mxu0 %v1866
    %2258 = vmatpush.bf16.msra.mxu0 %v1865
    %2259 = vmatpush.bf16.msra.mxu0 %v1864
    %2260 = vmatpush.bf16.msra.mxu0 %v1863
    %2261 = vmatmul.bf16.gmra.mxu0 %v1331
    %v2262 = vpop.f32.mrf.mxu0
    %v2263 = vadd.f32 %v2214, %v2262
    %v2264 = vpop.f32.mrf.mxu0
    %v2265 = vadd.f32 %v2216, %v2264
    %2266 = vmatmul.bf16.gmra.mxu0 %v1337
    %v2267 = vpop.f32.mrf.mxu0
    %v2268 = vadd.f32 %v2219, %v2267
    %v2269 = vpop.f32.mrf.mxu0
    %v2270 = vadd.f32 %v2221, %v2269
    %2271 = vmatmul.bf16.gmra.mxu0 %v1343
    %v2272 = vpop.f32.mrf.mxu0
    %v2273 = vadd.f32 %v2224, %v2272
    %v2274 = vpop.f32.mrf.mxu0
    %v2275 = vadd.f32 %v2226, %v2274
    %2276 = vmatmul.bf16.gmra.mxu0 %v1349
    %v2277 = vpop.f32.mrf.mxu0
    %v2278 = vadd.f32 %v2229, %v2277
    %v2279 = vpop.f32.mrf.mxu0
    %v2280 = vadd.f32 %v2231, %v2279
    %2281 = vmatmul.bf16.gmra.mxu0 %v1358
    %v2282 = vpop.f32.mrf.mxu0
    %v2283 = vadd.f32 %v2234, %v2282
    %v2284 = vpop.f32.mrf.mxu0
    %v2285 = vadd.f32 %v2236, %v2284
    %2286 = vmatmul.bf16.gmra.mxu0 %v1364
    %v2287 = vpop.f32.mrf.mxu0
    %v2288 = vadd.f32 %v2239, %v2287
    %v2289 = vpop.f32.mrf.mxu0
    %v2290 = vadd.f32 %v2241, %v2289
    %2291 = vmatmul.bf16.gmra.mxu0 %v1370
    %v2292 = vpop.f32.mrf.mxu0
    %v2293 = vadd.f32 %v2244, %v2292
    %v2294 = vpop.f32.mrf.mxu0
    %v2295 = vadd.f32 %v2246, %v2294
    %2296 = vmatmul.bf16.gmra.mxu0 %v1376
    %v2297 = vpop.f32.mrf.mxu0
    %v2298 = vadd.f32 %v2249, %v2297
    %v2299 = vpop.f32.mrf.mxu0
    %v2300 = vadd.f32 %v2251, %v2299
    %2301 = vdwg.mxu0
    %2302 = vmatpush.bf16.msra.mxu0 %v1878
    %2303 = vmatpush.bf16.msra.mxu0 %v1877
    %2304 = vmatpush.bf16.msra.mxu0 %v1876
    %2305 = vmatpush.bf16.msra.mxu0 %v1875
    %2306 = vmatpush.bf16.msra.mxu0 %v1874
    %2307 = vmatpush.bf16.msra.mxu0 %v1873
    %2308 = vmatpush.bf16.msra.mxu0 %v1872
    %2309 = vmatpush.bf16.msra.mxu0 %v1871
    %2310 = vmatmul.bf16.gmra.mxu0 %v1332
    %v2311 = vpop.f32.mrf.mxu0
    %v2312 = vadd.f32 %v2263, %v2311
    %v2313 = vpop.f32.mrf.mxu0
    %v2314 = vadd.f32 %v2265, %v2313
    %2315 = vmatmul.bf16.gmra.mxu0 %v1338
    %v2316 = vpop.f32.mrf.mxu0
    %v2317 = vadd.f32 %v2268, %v2316
    %v2318 = vpop.f32.mrf.mxu0
    %v2319 = vadd.f32 %v2270, %v2318
    %2320 = vmatmul.bf16.gmra.mxu0 %v1344
    %v2321 = vpop.f32.mrf.mxu0
    %v2322 = vadd.f32 %v2273, %v2321
    %v2323 = vpop.f32.mrf.mxu0
    %v2324 = vadd.f32 %v2275, %v2323
    %2325 = vmatmul.bf16.gmra.mxu0 %v1350
    %v2326 = vpop.f32.mrf.mxu0
    %v2327 = vadd.f32 %v2278, %v2326
    %v2328 = vpop.f32.mrf.mxu0
    %v2329 = vadd.f32 %v2280, %v2328
    %2330 = vmatmul.bf16.gmra.mxu0 %v1359
    %v2331 = vpop.f32.mrf.mxu0
    %v2332 = vadd.f32 %v2283, %v2331
    %v2333 = vpop.f32.mrf.mxu0
    %v2334 = vadd.f32 %v2285, %v2333
    %2335 = vmatmul.bf16.gmra.mxu0 %v1365
    %v2336 = vpop.f32.mrf.mxu0
    %v2337 = vadd.f32 %v2288, %v2336
    %v2338 = vpop.f32.mrf.mxu0
    %v2339 = vadd.f32 %v2290, %v2338
    %2340 = vmatmul.bf16.gmra.mxu0 %v1371
    %v2341 = vpop.f32.mrf.mxu0
    %v2342 = vadd.f32 %v2293, %v2341
    %v2343 = vpop.f32.mrf.mxu0
    %v2344 = vadd.f32 %v2295, %v2343
    %2345 = vmatmul.bf16.gmra.mxu0 %v1377
    %v2346 = vpop.f32.mrf.mxu0
    %v2347 = vadd.f32 %v2298, %v2346
    %v2348 = vpop.f32.mrf.mxu0
    %v2349 = vadd.f32 %v2300, %v2348
    %2350 = vdwg.mxu0
    %2351 = vmatpush.bf16.msra.mxu0 %v1886
    %2352 = vmatpush.bf16.msra.mxu0 %v1885
    %2353 = vmatpush.bf16.msra.mxu0 %v1884
    %2354 = vmatpush.bf16.msra.mxu0 %v1883
    %2355 = vmatpush.bf16.msra.mxu0 %v1882
    %2356 = vmatpush.bf16.msra.mxu0 %v1881
    %2357 = vmatpush.bf16.msra.mxu0 %v1880
    %2358 = vmatpush.bf16.msra.mxu0 %v1879
    %2359 = vmatmul.bf16.gmra.mxu0 %v1333
    %v2360 = vpop.f32.mrf.mxu0
    %v2361 = vadd.f32 %v2312, %v2360
    %v2362 = vpop.f32.mrf.mxu0
    %v2363 = vadd.f32 %v2314, %v2362
    %2364 = vmatmul.bf16.gmra.mxu0 %v1339
    %v2365 = vpop.f32.mrf.mxu0
    %v2366 = vadd.f32 %v2317, %v2365
    %v2367 = vpop.f32.mrf.mxu0
    %v2368 = vadd.f32 %v2319, %v2367
    %2369 = vmatmul.bf16.gmra.mxu0 %v1345
    %v2370 = vpop.f32.mrf.mxu0
    %v2371 = vadd.f32 %v2322, %v2370
    %v2372 = vpop.f32.mrf.mxu0
    %v2373 = vadd.f32 %v2324, %v2372
    %2374 = vmatmul.bf16.gmra.mxu0 %v1351
    %v2375 = vpop.f32.mrf.mxu0
    %v2376 = vadd.f32 %v2327, %v2375
    %v2377 = vpop.f32.mrf.mxu0
    %v2378 = vadd.f32 %v2329, %v2377
    %2379 = vmatmul.bf16.gmra.mxu0 %v1360
    %v2380 = vpop.f32.mrf.mxu0
    %v2381 = vadd.f32 %v2332, %v2380
    %v2382 = vpop.f32.mrf.mxu0
    %v2383 = vadd.f32 %v2334, %v2382
    %2384 = vmatmul.bf16.gmra.mxu0 %v1366
    %v2385 = vpop.f32.mrf.mxu0
    %v2386 = vadd.f32 %v2337, %v2385
    %v2387 = vpop.f32.mrf.mxu0
    %v2388 = vadd.f32 %v2339, %v2387
    %2389 = vmatmul.bf16.gmra.mxu0 %v1372
    %v2390 = vpop.f32.mrf.mxu0
    %v2391 = vadd.f32 %v2342, %v2390
    %v2392 = vpop.f32.mrf.mxu0
    %v2393 = vadd.f32 %v2344, %v2392
    %2394 = vmatmul.bf16.gmra.mxu0 %v1378
    %v2395 = vpop.f32.mrf.mxu0
    %v2396 = vadd.f32 %v2347, %v2395
    %v2397 = vpop.f32.mrf.mxu0
    %v2398 = vadd.f32 %v2349, %v2397
    %2399 = vdwg.mxu0
    %v2400 = vadd.f32 %v2361, %v1204
    %v2401 = vadd.f32 %v2363, %v1206
    %v2402 = vadd.f32 %v2366, %v1209
    %v2403 = vadd.f32 %v2368, %v1211
    %v2404 = vadd.f32 %v2371, %v1214
    %v2405 = vadd.f32 %v2373, %v1216
    %v2406 = vadd.f32 %v2376, %v1219
    %v2407 = vadd.f32 %v2378, %v1221
    %v2408 = vadd.f32 %v2381, %v1224
    %v2409 = vadd.f32 %v2383, %v1226
    %v2410 = vadd.f32 %v2386, %v1229
    %v2411 = vadd.f32 %v2388, %v1231
    %v2412 = vadd.f32 %v2391, %v1234
    %v2413 = vadd.f32 %v2393, %v1236
    %v2414 = vadd.f32 %v2396, %v1239
    %v2415 = vadd.f32 %v2398, %v1241
    %v2416 = vmax.f32 %v2400, 0.0
    %v2417 = vmax.f32 %v2401, 0.0
    %v2418 = vmax.f32 %v2402, 0.0
    %v2419 = vmax.f32 %v2403, 0.0
    %v2420 = vmax.f32 %v2404, 0.0
    %v2421 = vmax.f32 %v2405, 0.0
    %v2422 = vmax.f32 %v2406, 0.0
    %v2423 = vmax.f32 %v2407, 0.0
    %v2424 = vmax.f32 %v2408, 0.0
    %v2425 = vmax.f32 %v2409, 0.0
    %v2426 = vmax.f32 %v2410, 0.0
    %v2427 = vmax.f32 %v2411, 0.0
    %v2428 = vmax.f32 %v2412, 0.0
    %v2429 = vmax.f32 %v2413, 0.0
    %v2430 = vmax.f32 %v2414, 0.0
    %v2431 = vmax.f32 %v2415, 0.0
    %v2432 = vrot.slane %v2416, 7
    %v2433 = vrot.slane %v2417, 7
    %v2434 = vrot.slane %v2418, 7
    %v2435 = vrot.slane %v2419, 7
    %v2436 = vrot.slane %v2420, 7
    %v2437 = vrot.slane %v2421, 7
    %v2438 = vrot.slane %v2422, 7
    %v2439 = vrot.slane %v2423, 7
    %v2440 = vrot.slane %v2424, 7
    %v2441 = vrot.slane %v2425, 7
    %v2442 = vrot.slane %v2426, 7
    %v2443 = vrot.slane %v2427, 7
    %v2444 = vrot.slane %v2428, 7
    %v2445 = vrot.slane %v2429, 7
    %v2446 = vrot.slane %v2430, 7
    %v2447 = vrot.slane %v2431, 7
    %v2448 = vmul.f32 %v2432, %v38
    %v2449 = vmul.f32 %v2433, %v38
    %v2450 = vmul.f32 %v2434, %v38
    %v2451 = vmul.f32 %v2435, %v38
    %v2452 = vmul.f32 %v2436, %v38
    %v2453 = vmul.f32 %v2437, %v38
    %v2454 = vmul.f32 %v2438, %v38
    %v2455 = vmul.f32 %v2439, %v38
    %v2456 = vmul.f32 %v2440, %v38
    %v2457 = vmul.f32 %v2441, %v38
    %v2458 = vmul.f32 %v2442, %v38
    %v2459 = vmul.f32 %v2443, %v38
    %v2460 = vmul.f32 %v2444, %v38
    %v2461 = vmul.f32 %v2445, %v38
    %v2462 = vmul.f32 %v2446, %v38
    %v2463 = vmul.f32 %v2447, %v38
    %v2464 = vrot.slane %v2416, 1
    %v2465 = vrot.slane %v2417, 1
    %v2466 = vrot.slane %v2418, 1
    %v2467 = vrot.slane %v2419, 1
    %v2468 = vrot.slane %v2420, 1
    %v2469 = vrot.slane %v2421, 1
    %v2470 = vrot.slane %v2422, 1
    %v2471 = vrot.slane %v2423, 1
    %v2472 = vrot.slane %v2424, 1
    %v2473 = vrot.slane %v2425, 1
    %v2474 = vrot.slane %v2426, 1
    %v2475 = vrot.slane %v2427, 1
    %v2476 = vrot.slane %v2428, 1
    %v2477 = vrot.slane %v2429, 1
    %v2478 = vrot.slane %v2430, 1
    %v2479 = vrot.slane %v2431, 1
    %v2480 = vmul.f32 %v2464, %v41
    %v2481 = vmul.f32 %v2465, %v41
    %v2482 = vmul.f32 %v2466, %v41
    %v2483 = vmul.f32 %v2467, %v41
    %v2484 = vmul.f32 %v2468, %v41
    %v2485 = vmul.f32 %v2469, %v41
    %v2486 = vmul.f32 %v2470, %v41
    %v2487 = vmul.f32 %v2471, %v41
    %v2488 = vmul.f32 %v2472, %v41
    %v2489 = vmul.f32 %v2473, %v41
    %v2490 = vmul.f32 %v2474, %v41
    %v2491 = vmul.f32 %v2475, %v41
    %v2492 = vmul.f32 %v2476, %v41
    %v2493 = vmul.f32 %v2477, %v41
    %v2494 = vmul.f32 %v2478, %v41
    %v2495 = vmul.f32 %v2479, %v41
    %v2496 = vpack.c.bf16 %v2448, %v1275
    %v2497 = vpack.c.bf16 %v2416, 0.0
    %v2498 = vpack.c.bf16 %v2480, %v1308
    %v2499 = vpack.c.bf16 %v2449, %v2448
    %v2500 = vpack.c.bf16 %v2417, %v2416
    %v2501 = vpack.c.bf16 %v2481, %v2480
    %v2502 = vpack.c.bf16 %v2450, %v2449
    %v2503 = vpack.c.bf16 %v2418, %v2417
    %v2504 = vpack.c.bf16 %v2482, %v2481
    %v2505 = vpack.c.bf16 %v2451, %v2450
    %v2506 = vpack.c.bf16 %v2419, %v2418
    %v2507 = vpack.c.bf16 %v2483, %v2482
    %v2508 = vpack.c.bf16 %v2452, %v2451
    %v2509 = vpack.c.bf16 %v2420, %v2419
    %v2510 = vpack.c.bf16 %v2484, %v2483
    %v2511 = vpack.c.bf16 %v2453, %v2452
    %v2512 = vpack.c.bf16 %v2421, %v2420
    %v2513 = vpack.c.bf16 %v2485, %v2484
    %v2514 = vpack.c.bf16 %v2454, %v2453
    %v2515 = vpack.c.bf16 %v2422, %v2421
    %v2516 = vpack.c.bf16 %v2486, %v2485
    %v2517 = vpack.c.bf16 %v2455, %v2454
    %v2518 = vpack.c.bf16 %v2423, %v2422
    %v2519 = vpack.c.bf16 %v2487, %v2486
    %v2520 = vpack.c.bf16 %v1275, %v2455
    %v2521 = vpack.c.bf16 0.0, %v2423
    %v2522 = vpack.c.bf16 %v1308, %v2487
    %v2523 = vpack.c.bf16 %v2456, %v1275
    %v2524 = vpack.c.bf16 %v2424, 0.0
    %v2525 = vpack.c.bf16 %v2488, %v1308
    %v2526 = vpack.c.bf16 %v2457, %v2456
    %v2527 = vpack.c.bf16 %v2425, %v2424
    %v2528 = vpack.c.bf16 %v2489, %v2488
    %v2529 = vpack.c.bf16 %v2458, %v2457
    %v2530 = vpack.c.bf16 %v2426, %v2425
    %v2531 = vpack.c.bf16 %v2490, %v2489
    %v2532 = vpack.c.bf16 %v2459, %v2458
    %v2533 = vpack.c.bf16 %v2427, %v2426
    %v2534 = vpack.c.bf16 %v2491, %v2490
    %v2535 = vpack.c.bf16 %v2460, %v2459
    %v2536 = vpack.c.bf16 %v2428, %v2427
    %v2537 = vpack.c.bf16 %v2492, %v2491
    %v2538 = vpack.c.bf16 %v2461, %v2460
    %v2539 = vpack.c.bf16 %v2429, %v2428
    %v2540 = vpack.c.bf16 %v2493, %v2492
    %v2541 = vpack.c.bf16 %v2462, %v2461
    %v2542 = vpack.c.bf16 %v2430, %v2429
    %v2543 = vpack.c.bf16 %v2494, %v2493
    %v2544 = vpack.c.bf16 %v2463, %v2462
    %v2545 = vpack.c.bf16 %v2431, %v2430
    %v2546 = vpack.c.bf16 %v2495, %v2494
    %v2547 = vpack.c.bf16 %v1275, %v2463
    %v2548 = vpack.c.bf16 0.0, %v2431
    %v2549 = vpack.c.bf16 %v1308, %v2495
    %v2550 = vld [vmem:[%s5] sm:$0xf]
    %v2551 = vld [vmem:[%s5 + $0x4] sm:$0xf]
    %v2552 = vld [vmem:[%s5 + $0x8] sm:$0xf]
    %v2553 = vld [vmem:[%s5 + $0xc] sm:$0xf]
    %v2554 = vld [vmem:[%s5 + $0x10] sm:$0xf]
    %v2555 = vld [vmem:[%s5 + $0x14] sm:$0xf]
    %v2556 = vld [vmem:[%s5 + $0x18] sm:$0xf]
    %v2557 = vld [vmem:[%s5 + $0x1c] sm:$0xf]
    %v2558 = vld [vmem:[%s5 + $0x20] sm:$0xf]
    %v2559 = vld [vmem:[%s5 + $0x24] sm:$0xf]
    %v2560 = vld [vmem:[%s5 + $0x28] sm:$0xf]
    %v2561 = vld [vmem:[%s5 + $0x2c] sm:$0xf]
    %v2562 = vld [vmem:[%s5 + $0x30] sm:$0xf]
    %v2563 = vld [vmem:[%s5 + $0x34] sm:$0xf]
    %v2564 = vld [vmem:[%s5 + $0x38] sm:$0xf]
    %v2565 = vld [vmem:[%s5 + $0x3c] sm:$0xf]
    %v2566 = vld [vmem:[%s5 + $0x40] sm:$0xf]
    %v2567 = vld [vmem:[%s5 + $0x44] sm:$0xf]
    %v2568 = vld [vmem:[%s5 + $0x48] sm:$0xf]
    %v2569 = vld [vmem:[%s5 + $0x4c] sm:$0xf]
    %v2570 = vld [vmem:[%s5 + $0x50] sm:$0xf]
    %v2571 = vld [vmem:[%s5 + $0x54] sm:$0xf]
    %v2572 = vld [vmem:[%s5 + $0x58] sm:$0xf]
    %v2573 = vld [vmem:[%s5 + $0x5c] sm:$0xf]
    %v2574 = vld [vmem:[%s5 + $0x60] sm:$0xf]
    %v2575 = vld [vmem:[%s5 + $0x64] sm:$0xf]
    %v2576 = vld [vmem:[%s5 + $0x68] sm:$0xf]
    %v2577 = vld [vmem:[%s5 + $0x6c] sm:$0xf]
    %v2578 = vld [vmem:[%s5 + $0x70] sm:$0xf]
    %v2579 = vld [vmem:[%s5 + $0x74] sm:$0xf]
    %v2580 = vld [vmem:[%s5 + $0x78] sm:$0xf]
    %v2581 = vld [vmem:[%s5 + $0x7c] sm:$0xf]
    %v2582 = vld [vmem:[%s5 + $0x80] sm:$0xf]
    %v2583 = vld [vmem:[%s5 + $0x84] sm:$0xf]
    %v2584 = vld [vmem:[%s5 + $0x88] sm:$0xf]
    %v2585 = vld [vmem:[%s5 + $0x8c] sm:$0xf]
    %v2586 = vld [vmem:[%s5 + $0x90] sm:$0xf]
    %v2587 = vld [vmem:[%s5 + $0x94] sm:$0xf]
    %v2588 = vld [vmem:[%s5 + $0x98] sm:$0xf]
    %v2589 = vld [vmem:[%s5 + $0x9c] sm:$0xf]
    %v2590 = vld [vmem:[%s5 + $0xa0] sm:$0xf]
    %v2591 = vld [vmem:[%s5 + $0xa4] sm:$0xf]
    %v2592 = vld [vmem:[%s5 + $0xa8] sm:$0xf]
    %v2593 = vld [vmem:[%s5 + $0xac] sm:$0xf]
    %v2594 = vld [vmem:[%s5 + $0xb0] sm:$0xf]
    %v2595 = vld [vmem:[%s5 + $0xb4] sm:$0xf]
    %v2596 = vld [vmem:[%s5 + $0xb8] sm:$0xf]
    %v2597 = vld [vmem:[%s5 + $0xbc] sm:$0xf]
    %v2598 = vld [vmem:[%s5 + $0xc0] sm:$0xf]
    %v2599 = vld [vmem:[%s5 + $0xc4] sm:$0xf]
    %v2600 = vld [vmem:[%s5 + $0xc8] sm:$0xf]
    %v2601 = vld [vmem:[%s5 + $0xcc] sm:$0xf]
    %v2602 = vld [vmem:[%s5 + $0xd0] sm:$0xf]
    %v2603 = vld [vmem:[%s5 + $0xd4] sm:$0xf]
    %v2604 = vld [vmem:[%s5 + $0xd8] sm:$0xf]
    %v2605 = vld [vmem:[%s5 + $0xdc] sm:$0xf]
    %v2606 = vld [vmem:[%s5 + $0xe0] sm:$0xf]
    %v2607 = vld [vmem:[%s5 + $0xe4] sm:$0xf]
    %v2608 = vld [vmem:[%s5 + $0xe8] sm:$0xf]
    %v2609 = vld [vmem:[%s5 + $0xec] sm:$0xf]
    %v2610 = vld [vmem:[%s5 + $0xf0] sm:$0xf]
    %v2611 = vld [vmem:[%s5 + $0xf4] sm:$0xf]
    %v2612 = vld [vmem:[%s5 + $0xf8] sm:$0xf]
    %v2613 = vld [vmem:[%s5 + $0xfc] sm:$0xf]
    %v2614 = vld [vmem:[%s5 + $0x100] sm:$0xf]
    %v2615 = vld [vmem:[%s5 + $0x104] sm:$0xf]
    %v2616 = vld [vmem:[%s5 + $0x108] sm:$0xf]
    %v2617 = vld [vmem:[%s5 + $0x10c] sm:$0xf]
    %v2618 = vld [vmem:[%s5 + $0x110] sm:$0xf]
    %v2619 = vld [vmem:[%s5 + $0x114] sm:$0xf]
    %v2620 = vld [vmem:[%s5 + $0x118] sm:$0xf]
    %v2621 = vld [vmem:[%s5 + $0x11c] sm:$0xf]
    %v2622 = vld [vmem:[%s5 + $0x120] sm:$0xf]
    %v2623 = vld [vmem:[%s5 + $0x124] sm:$0xf]
    %v2624 = vld [vmem:[%s5 + $0x128] sm:$0xf]
    %v2625 = vld [vmem:[%s5 + $0x12c] sm:$0xf]
    %v2626 = vld [vmem:[%s5 + $0x130] sm:$0xf]
    %v2627 = vld [vmem:[%s5 + $0x134] sm:$0xf]
    %v2628 = vld [vmem:[%s5 + $0x138] sm:$0xf]
    %v2629 = vld [vmem:[%s5 + $0x13c] sm:$0xf]
    %v2630 = vld [vmem:[%s5 + $0x140] sm:$0xf]
    %v2631 = vld [vmem:[%s5 + $0x144] sm:$0xf]
    %v2632 = vld [vmem:[%s5 + $0x148] sm:$0xf]
    %v2633 = vld [vmem:[%s5 + $0x14c] sm:$0xf]
    %v2634 = vld [vmem:[%s5 + $0x150] sm:$0xf]
    %v2635 = vld [vmem:[%s5 + $0x154] sm:$0xf]
    %v2636 = vld [vmem:[%s5 + $0x158] sm:$0xf]
    %v2637 = vld [vmem:[%s5 + $0x15c] sm:$0xf]
    %v2638 = vld [vmem:[%s5 + $0x160] sm:$0xf]
    %v2639 = vld [vmem:[%s5 + $0x164] sm:$0xf]
    %v2640 = vld [vmem:[%s5 + $0x168] sm:$0xf]
    %v2641 = vld [vmem:[%s5 + $0x16c] sm:$0xf]
    %v2642 = vld [vmem:[%s5 + $0x170] sm:$0xf]
    %v2643 = vld [vmem:[%s5 + $0x174] sm:$0xf]
    %v2644 = vld [vmem:[%s5 + $0x178] sm:$0xf]
    %v2645 = vld [vmem:[%s5 + $0x17c] sm:$0xf]
    %v2646 = vld [vmem:[%s5 + $0x180] sm:$0xf]
    %v2647 = vld [vmem:[%s5 + $0x184] sm:$0xf]
    %v2648 = vld [vmem:[%s5 + $0x188] sm:$0xf]
    %v2649 = vld [vmem:[%s5 + $0x18c] sm:$0xf]
    %v2650 = vld [vmem:[%s5 + $0x190] sm:$0xf]
    %v2651 = vld [vmem:[%s5 + $0x194] sm:$0xf]
    %v2652 = vld [vmem:[%s5 + $0x198] sm:$0xf]
    %v2653 = vld [vmem:[%s5 + $0x19c] sm:$0xf]
    %v2654 = vld [vmem:[%s5 + $0x1a0] sm:$0xf]
    %v2655 = vld [vmem:[%s5 + $0x1a4] sm:$0xf]
    %v2656 = vld [vmem:[%s5 + $0x1a8] sm:$0xf]
    %v2657 = vld [vmem:[%s5 + $0x1ac] sm:$0xf]
    %v2658 = vld [vmem:[%s5 + $0x1b0] sm:$0xf]
    %v2659 = vld [vmem:[%s5 + $0x1b4] sm:$0xf]
    %v2660 = vld [vmem:[%s5 + $0x1b8] sm:$0xf]
    %v2661 = vld [vmem:[%s5 + $0x1bc] sm:$0xf]
    %v2662 = vld [vmem:[%s5 + $0x1c0] sm:$0xf]
    %v2663 = vld [vmem:[%s5 + $0x1c4] sm:$0xf]
    %v2664 = vld [vmem:[%s5 + $0x1c8] sm:$0xf]
    %v2665 = vld [vmem:[%s5 + $0x1cc] sm:$0xf]
    %v2666 = vld [vmem:[%s5 + $0x1d0] sm:$0xf]
    %v2667 = vld [vmem:[%s5 + $0x1d4] sm:$0xf]
    %v2668 = vld [vmem:[%s5 + $0x1d8] sm:$0xf]
    %v2669 = vld [vmem:[%s5 + $0x1dc] sm:$0xf]
    %v2670 = vld [vmem:[%s5 + $0x1e0] sm:$0xf]
    %v2671 = vld [vmem:[%s5 + $0x1e4] sm:$0xf]
    %v2672 = vld [vmem:[%s5 + $0x1e8] sm:$0xf]
    %v2673 = vld [vmem:[%s5 + $0x1ec] sm:$0xf]
    %v2674 = vld [vmem:[%s5 + $0x1f0] sm:$0xf]
    %v2675 = vld [vmem:[%s5 + $0x1f4] sm:$0xf]
    %v2676 = vld [vmem:[%s5 + $0x1f8] sm:$0xf]
    %v2677 = vld [vmem:[%s5 + $0x1fc] sm:$0xf]
    %v2678 = vld [vmem:[%s5 + $0x200] sm:$0xf]
    %v2679 = vld [vmem:[%s5 + $0x204] sm:$0xf]
    %v2680 = vld [vmem:[%s5 + $0x208] sm:$0xf]
    %v2681 = vld [vmem:[%s5 + $0x20c] sm:$0xf]
    %v2682 = vld [vmem:[%s5 + $0x210] sm:$0xf]
    %v2683 = vld [vmem:[%s5 + $0x214] sm:$0xf]
    %v2684 = vld [vmem:[%s5 + $0x218] sm:$0xf]
    %v2685 = vld [vmem:[%s5 + $0x21c] sm:$0xf]
    %v2686 = vld [vmem:[%s5 + $0x220] sm:$0xf]
    %v2687 = vld [vmem:[%s5 + $0x224] sm:$0xf]
    %v2688 = vld [vmem:[%s5 + $0x228] sm:$0xf]
    %v2689 = vld [vmem:[%s5 + $0x22c] sm:$0xf]
    %v2690 = vld [vmem:[%s5 + $0x230] sm:$0xf]
    %v2691 = vld [vmem:[%s5 + $0x234] sm:$0xf]
    %v2692 = vld [vmem:[%s5 + $0x238] sm:$0xf]
    %v2693 = vld [vmem:[%s5 + $0x23c] sm:$0xf]
    %v2694 = vld [vmem:[%s6] sm:$0x1]
    %v2696 = vperm.slane %v2694, 0
    %v2842 = vunpack.c.l.b16 %v2550
    %v2843 = vunpack.c.l.b16 %v2551
    %v2844 = vunpack.c.l.b16 %v2552
    %v2845 = vunpack.c.l.b16 %v2553
    %v2846 = vunpack.c.l.b16 %v2554
    %v2847 = vunpack.c.l.b16 %v2555
    %v2848 = vunpack.c.l.b16 %v2556
    %v2849 = vunpack.c.l.b16 %v2557
    %v2850 = vunpack.c.l.b16 %v2558
    %v2851 = vunpack.c.l.b16 %v2559
    %v2852 = vunpack.c.l.b16 %v2560
    %v2853 = vunpack.c.l.b16 %v2561
    %v2854 = vunpack.c.l.b16 %v2562
    %v2855 = vunpack.c.l.b16 %v2563
    %v2856 = vunpack.c.l.b16 %v2564
    %v2857 = vunpack.c.l.b16 %v2565
    %v2858 = vunpack.c.l.b16 %v2566
    %v2859 = vunpack.c.l.b16 %v2567
    %v2860 = vunpack.c.l.b16 %v2568
    %v2861 = vunpack.c.l.b16 %v2569
    %v2862 = vunpack.c.l.b16 %v2570
    %v2863 = vunpack.c.l.b16 %v2571
    %v2864 = vunpack.c.l.b16 %v2572
    %v2865 = vunpack.c.l.b16 %v2573
    %v2866 = vunpack.c.l.b16 %v2574
    %v2867 = vunpack.c.l.b16 %v2575
    %v2868 = vunpack.c.l.b16 %v2576
    %v2869 = vunpack.c.l.b16 %v2577
    %v2870 = vunpack.c.l.b16 %v2578
    %v2871 = vunpack.c.l.b16 %v2579
    %v2872 = vunpack.c.l.b16 %v2580
    %v2873 = vunpack.c.l.b16 %v2581
    %v2874 = vunpack.c.l.b16 %v2582
    %v2875 = vunpack.c.l.b16 %v2583
    %v2876 = vunpack.c.l.b16 %v2584
    %v2877 = vunpack.c.l.b16 %v2585
    %v2878 = vunpack.c.l.b16 %v2586
    %v2879 = vunpack.c.l.b16 %v2587
    %v2880 = vunpack.c.l.b16 %v2588
    %v2881 = vunpack.c.l.b16 %v2589
    %v2882 = vunpack.c.l.b16 %v2590
    %v2883 = vunpack.c.l.b16 %v2591
    %v2884 = vunpack.c.l.b16 %v2592
    %v2885 = vunpack.c.l.b16 %v2593
    %v2886 = vunpack.c.l.b16 %v2594
    %v2887 = vunpack.c.l.b16 %v2595
    %v2888 = vunpack.c.l.b16 %v2596
    %v2889 = vunpack.c.l.b16 %v2597
    %v2890 = vunpack.c.l.b16 %v2598
    %v2891 = vunpack.c.l.b16 %v2599
    %v2892 = vunpack.c.l.b16 %v2600
    %v2893 = vunpack.c.l.b16 %v2601
    %v2894 = vunpack.c.l.b16 %v2602
    %v2895 = vunpack.c.l.b16 %v2603
    %v2896 = vunpack.c.l.b16 %v2604
    %v2897 = vunpack.c.l.b16 %v2605
    %v2898 = vunpack.c.l.b16 %v2606
    %v2899 = vunpack.c.l.b16 %v2607
    %v2900 = vunpack.c.l.b16 %v2608
    %v2901 = vunpack.c.l.b16 %v2609
    %v2902 = vunpack.c.l.b16 %v2610
    %v2903 = vunpack.c.l.b16 %v2611
    %v2904 = vunpack.c.l.b16 %v2612
    %v2905 = vunpack.c.l.b16 %v2613
    %v2906 = vunpack.c.l.b16 %v2614
    %v2907 = vunpack.c.l.b16 %v2615
    %v2908 = vunpack.c.l.b16 %v2616
    %v2909 = vunpack.c.l.b16 %v2617
    %v2910 = vunpack.c.l.b16 %v2618
    %v2911 = vunpack.c.l.b16 %v2619
    %v2912 = vunpack.c.l.b16 %v2620
    %v2913 = vunpack.c.l.b16 %v2621
    %v2914 = vunpack.c.l.b16 %v2622
    %v2915 = vunpack.c.l.b16 %v2623
    %v2916 = vunpack.c.l.b16 %v2624
    %v2917 = vunpack.c.l.b16 %v2625
    %v2918 = vunpack.c.l.b16 %v2626
    %v2919 = vunpack.c.l.b16 %v2627
    %v2920 = vunpack.c.l.b16 %v2628
    %v2921 = vunpack.c.l.b16 %v2629
    %v2922 = vunpack.c.l.b16 %v2630
    %v2923 = vunpack.c.l.b16 %v2631
    %v2924 = vunpack.c.l.b16 %v2632
    %v2925 = vunpack.c.l.b16 %v2633
    %v2926 = vunpack.c.l.b16 %v2634
    %v2927 = vunpack.c.l.b16 %v2635
    %v2928 = vunpack.c.l.b16 %v2636
    %v2929 = vunpack.c.l.b16 %v2637
    %v2930 = vunpack.c.l.b16 %v2638
    %v2931 = vunpack.c.l.b16 %v2639
    %v2932 = vunpack.c.l.b16 %v2640
    %v2933 = vunpack.c.l.b16 %v2641
    %v2934 = vunpack.c.l.b16 %v2642
    %v2935 = vunpack.c.l.b16 %v2643
    %v2936 = vunpack.c.l.b16 %v2644
    %v2937 = vunpack.c.l.b16 %v2645
    %v2938 = vunpack.c.l.b16 %v2646
    %v2939 = vunpack.c.l.b16 %v2647
    %v2940 = vunpack.c.l.b16 %v2648
    %v2941 = vunpack.c.l.b16 %v2649
    %v2942 = vunpack.c.l.b16 %v2650
    %v2943 = vunpack.c.l.b16 %v2651
    %v2944 = vunpack.c.l.b16 %v2652
    %v2945 = vunpack.c.l.b16 %v2653
    %v2946 = vunpack.c.l.b16 %v2654
    %v2947 = vunpack.c.l.b16 %v2655
    %v2948 = vunpack.c.l.b16 %v2656
    %v2949 = vunpack.c.l.b16 %v2657
    %v2950 = vunpack.c.l.b16 %v2658
    %v2951 = vunpack.c.l.b16 %v2659
    %v2952 = vunpack.c.l.b16 %v2660
    %v2953 = vunpack.c.l.b16 %v2661
    %v2954 = vunpack.c.l.b16 %v2662
    %v2955 = vunpack.c.l.b16 %v2663
    %v2956 = vunpack.c.l.b16 %v2664
    %v2957 = vunpack.c.l.b16 %v2665
    %v2958 = vunpack.c.l.b16 %v2666
    %v2959 = vunpack.c.l.b16 %v2667
    %v2960 = vunpack.c.l.b16 %v2668
    %v2961 = vunpack.c.l.b16 %v2669
    %v2962 = vunpack.c.l.b16 %v2670
    %v2963 = vunpack.c.l.b16 %v2671
    %v2964 = vunpack.c.l.b16 %v2672
    %v2965 = vunpack.c.l.b16 %v2673
    %v2966 = vunpack.c.l.b16 %v2674
    %v2967 = vunpack.c.l.b16 %v2675
    %v2968 = vunpack.c.l.b16 %v2676
    %v2969 = vunpack.c.l.b16 %v2677
    %v2970 = vunpack.c.l.b16 %v2678
    %v2971 = vunpack.c.l.b16 %v2679
    %v2972 = vunpack.c.l.b16 %v2680
    %v2973 = vunpack.c.l.b16 %v2681
    %v2974 = vunpack.c.l.b16 %v2682
    %v2975 = vunpack.c.l.b16 %v2683
    %v2976 = vunpack.c.l.b16 %v2684
    %v2977 = vunpack.c.l.b16 %v2685
    %v2978 = vunpack.c.l.b16 %v2686
    %v2979 = vunpack.c.l.b16 %v2687
    %v2980 = vunpack.c.l.b16 %v2688
    %v2981 = vunpack.c.l.b16 %v2689
    %v2982 = vunpack.c.l.b16 %v2690
    %v2983 = vunpack.c.l.b16 %v2691
    %v2984 = vunpack.c.l.b16 %v2692
    %v2985 = vunpack.c.l.b16 %v2693
    %v2986 = vpack.c.b16 %v2843, %v2842
    %v2987 = vpack.c.b16 %v2845, %v2844
    %v2988 = vpack.c.b16 %v2847, %v2846
    %v2989 = vpack.c.b16 %v2849, %v2848
    %v2990 = vpack.c.b16 %v2851, %v2850
    %v2991 = vpack.c.b16 %v2853, %v2852
    %v2992 = vpack.c.b16 %v2855, %v2854
    %v2993 = vpack.c.b16 %v2857, %v2856
    %v2994 = vpack.c.b16 %v2859, %v2858
    %v2995 = vpack.c.b16 %v2861, %v2860
    %v2996 = vpack.c.b16 %v2863, %v2862
    %v2997 = vpack.c.b16 %v2865, %v2864
    %v2998 = vpack.c.b16 %v2867, %v2866
    %v2999 = vpack.c.b16 %v2869, %v2868
    %v3000 = vpack.c.b16 %v2871, %v2870
    %v3001 = vpack.c.b16 %v2873, %v2872
    %v3002 = vpack.c.b16 %v2875, %v2874
    %v3003 = vpack.c.b16 %v2877, %v2876
    %v3004 = vpack.c.b16 %v2879, %v2878
    %v3005 = vpack.c.b16 %v2881, %v2880
    %v3006 = vpack.c.b16 %v2883, %v2882
    %v3007 = vpack.c.b16 %v2885, %v2884
    %v3008 = vpack.c.b16 %v2887, %v2886
    %v3009 = vpack.c.b16 %v2889, %v2888
    %v3010 = vpack.c.b16 %v2891, %v2890
    %v3011 = vpack.c.b16 %v2893, %v2892
    %v3012 = vpack.c.b16 %v2895, %v2894
    %v3013 = vpack.c.b16 %v2897, %v2896
    %v3014 = vpack.c.b16 %v2899, %v2898
    %v3015 = vpack.c.b16 %v2901, %v2900
    %v3016 = vpack.c.b16 %v2903, %v2902
    %v3017 = vpack.c.b16 %v2905, %v2904
    %v3018 = vpack.c.b16 %v2907, %v2906
    %v3019 = vpack.c.b16 %v2909, %v2908
    %v3020 = vpack.c.b16 %v2911, %v2910
    %v3021 = vpack.c.b16 %v2913, %v2912
    %v3022 = vpack.c.b16 %v2915, %v2914
    %v3023 = vpack.c.b16 %v2917, %v2916
    %v3024 = vpack.c.b16 %v2919, %v2918
    %v3025 = vpack.c.b16 %v2921, %v2920
    %v3026 = vpack.c.b16 %v2923, %v2922
    %v3027 = vpack.c.b16 %v2925, %v2924
    %v3028 = vpack.c.b16 %v2927, %v2926
    %v3029 = vpack.c.b16 %v2929, %v2928
    %v3030 = vpack.c.b16 %v2931, %v2930
    %v3031 = vpack.c.b16 %v2933, %v2932
    %v3032 = vpack.c.b16 %v2935, %v2934
    %v3033 = vpack.c.b16 %v2937, %v2936
    %v3034 = vpack.c.b16 %v2939, %v2938
    %v3035 = vpack.c.b16 %v2941, %v2940
    %v3036 = vpack.c.b16 %v2943, %v2942
    %v3037 = vpack.c.b16 %v2945, %v2944
    %v3038 = vpack.c.b16 %v2947, %v2946
    %v3039 = vpack.c.b16 %v2949, %v2948
    %v3040 = vpack.c.b16 %v2951, %v2950
    %v3041 = vpack.c.b16 %v2953, %v2952
    %v3042 = vpack.c.b16 %v2955, %v2954
    %v3043 = vpack.c.b16 %v2957, %v2956
    %v3044 = vpack.c.b16 %v2959, %v2958
    %v3045 = vpack.c.b16 %v2961, %v2960
    %v3046 = vpack.c.b16 %v2963, %v2962
    %v3047 = vpack.c.b16 %v2965, %v2964
    %v3048 = vpack.c.b16 %v2967, %v2966
    %v3049 = vpack.c.b16 %v2969, %v2968
    %v3050 = vpack.c.b16 %v2971, %v2970
    %v3051 = vpack.c.b16 %v2973, %v2972
    %v3052 = vpack.c.b16 %v2975, %v2974
    %v3053 = vpack.c.b16 %v2977, %v2976
    %v3054 = vpack.c.b16 %v2979, %v2978
    %v3055 = vpack.c.b16 %v2981, %v2980
    %v3056 = vpack.c.b16 %v2983, %v2982
    %v3057 = vpack.c.b16 %v2985, %v2984
    %3130 = vmatpush.bf16.msra.mxu0 %v2993
    %3131 = vmatpush.bf16.msra.mxu0 %v2992
    %3132 = vmatpush.bf16.msra.mxu0 %v2991
    %3133 = vmatpush.bf16.msra.mxu0 %v2990
    %3134 = vmatpush.bf16.msra.mxu0 %v2989
    %3135 = vmatpush.bf16.msra.mxu0 %v2988
    %3136 = vmatpush.bf16.msra.mxu0 %v2987
    %3137 = vmatpush.bf16.msra.mxu0 %v2986
    %3138 = vmatmul.bf16.gmra.mxu0 %v2496
    %v3139 = vpop.f32.mrf.mxu0
    %v3140 = vadd.f32 %v2696, %v3139
    %v3141 = vpop.f32.mrf.mxu0
    %v3142 = vadd.f32 %v2696, %v3141
    %3143 = vmatmul.bf16.gmra.mxu0 %v2502
    %v3144 = vpop.f32.mrf.mxu0
    %v3145 = vadd.f32 %v2696, %v3144
    %v3146 = vpop.f32.mrf.mxu0
    %v3147 = vadd.f32 %v2696, %v3146
    %3148 = vmatmul.bf16.gmra.mxu0 %v2508
    %v3149 = vpop.f32.mrf.mxu0
    %v3150 = vadd.f32 %v2696, %v3149
    %v3151 = vpop.f32.mrf.mxu0
    %v3152 = vadd.f32 %v2696, %v3151
    %3153 = vmatmul.bf16.gmra.mxu0 %v2514
    %v3154 = vpop.f32.mrf.mxu0
    %v3155 = vadd.f32 %v2696, %v3154
    %v3156 = vpop.f32.mrf.mxu0
    %v3157 = vadd.f32 %v2696, %v3156
    %3158 = vmatmul.bf16.gmra.mxu0 %v2523
    %v3159 = vpop.f32.mrf.mxu0
    %v3160 = vadd.f32 %v2696, %v3159
    %v3161 = vpop.f32.mrf.mxu0
    %v3162 = vadd.f32 %v2696, %v3161
    %3163 = vmatmul.bf16.gmra.mxu0 %v2529
    %v3164 = vpop.f32.mrf.mxu0
    %v3165 = vadd.f32 %v2696, %v3164
    %v3166 = vpop.f32.mrf.mxu0
    %v3167 = vadd.f32 %v2696, %v3166
    %3168 = vmatmul.bf16.gmra.mxu0 %v2535
    %v3169 = vpop.f32.mrf.mxu0
    %v3170 = vadd.f32 %v2696, %v3169
    %v3171 = vpop.f32.mrf.mxu0
    %v3172 = vadd.f32 %v2696, %v3171
    %3173 = vmatmul.bf16.gmra.mxu0 %v2541
    %v3174 = vpop.f32.mrf.mxu0
    %v3175 = vadd.f32 %v2696, %v3174
    %v3176 = vpop.f32.mrf.mxu0
    %v3177 = vadd.f32 %v2696, %v3176
    %3178 = vdwg.mxu0
    %3179 = vmatpush.bf16.msra.mxu0 %v3001
    %3180 = vmatpush.bf16.msra.mxu0 %v3000
    %3181 = vmatpush.bf16.msra.mxu0 %v2999
    %3182 = vmatpush.bf16.msra.mxu0 %v2998
    %3183 = vmatpush.bf16.msra.mxu0 %v2997
    %3184 = vmatpush.bf16.msra.mxu0 %v2996
    %3185 = vmatpush.bf16.msra.mxu0 %v2995
    %3186 = vmatpush.bf16.msra.mxu0 %v2994
    %3187 = vmatmul.bf16.gmra.mxu0 %v2497
    %v3188 = vpop.f32.mrf.mxu0
    %v3189 = vadd.f32 %v3140, %v3188
    %v3190 = vpop.f32.mrf.mxu0
    %v3191 = vadd.f32 %v3142, %v3190
    %3192 = vmatmul.bf16.gmra.mxu0 %v2503
    %v3193 = vpop.f32.mrf.mxu0
    %v3194 = vadd.f32 %v3145, %v3193
    %v3195 = vpop.f32.mrf.mxu0
    %v3196 = vadd.f32 %v3147, %v3195
    %3197 = vmatmul.bf16.gmra.mxu0 %v2509
    %v3198 = vpop.f32.mrf.mxu0
    %v3199 = vadd.f32 %v3150, %v3198
    %v3200 = vpop.f32.mrf.mxu0
    %v3201 = vadd.f32 %v3152, %v3200
    %3202 = vmatmul.bf16.gmra.mxu0 %v2515
    %v3203 = vpop.f32.mrf.mxu0
    %v3204 = vadd.f32 %v3155, %v3203
    %v3205 = vpop.f32.mrf.mxu0
    %v3206 = vadd.f32 %v3157, %v3205
    %3207 = vmatmul.bf16.gmra.mxu0 %v2524
    %v3208 = vpop.f32.mrf.mxu0
    %v3209 = vadd.f32 %v3160, %v3208
    %v3210 = vpop.f32.mrf.mxu0
    %v3211 = vadd.f32 %v3162, %v3210
    %3212 = vmatmul.bf16.gmra.mxu0 %v2530
    %v3213 = vpop.f32.mrf.mxu0
    %v3214 = vadd.f32 %v3165, %v3213
    %v3215 = vpop.f32.mrf.mxu0
    %v3216 = vadd.f32 %v3167, %v3215
    %3217 = vmatmul.bf16.gmra.mxu0 %v2536
    %v3218 = vpop.f32.mrf.mxu0
    %v3219 = vadd.f32 %v3170, %v3218
    %v3220 = vpop.f32.mrf.mxu0
    %v3221 = vadd.f32 %v3172, %v3220
    %3222 = vmatmul.bf16.gmra.mxu0 %v2542
    %v3223 = vpop.f32.mrf.mxu0
    %v3224 = vadd.f32 %v3175, %v3223
    %v3225 = vpop.f32.mrf.mxu0
    %v3226 = vadd.f32 %v3177, %v3225
    %3227 = vdwg.mxu0
    %3228 = vmatpush.bf16.msra.mxu0 %v3009
    %3229 = vmatpush.bf16.msra.mxu0 %v3008
    %3230 = vmatpush.bf16.msra.mxu0 %v3007
    %3231 = vmatpush.bf16.msra.mxu0 %v3006
    %3232 = vmatpush.bf16.msra.mxu0 %v3005
    %3233 = vmatpush.bf16.msra.mxu0 %v3004
    %3234 = vmatpush.bf16.msra.mxu0 %v3003
    %3235 = vmatpush.bf16.msra.mxu0 %v3002
    %3236 = vmatmul.bf16.gmra.mxu0 %v2498
    %v3237 = vpop.f32.mrf.mxu0
    %v3238 = vadd.f32 %v3189, %v3237
    %v3239 = vpop.f32.mrf.mxu0
    %v3240 = vadd.f32 %v3191, %v3239
    %3241 = vmatmul.bf16.gmra.mxu0 %v2504
    %v3242 = vpop.f32.mrf.mxu0
    %v3243 = vadd.f32 %v3194, %v3242
    %v3244 = vpop.f32.mrf.mxu0
    %v3245 = vadd.f32 %v3196, %v3244
    %3246 = vmatmul.bf16.gmra.mxu0 %v2510
    %v3247 = vpop.f32.mrf.mxu0
    %v3248 = vadd.f32 %v3199, %v3247
    %v3249 = vpop.f32.mrf.mxu0
    %v3250 = vadd.f32 %v3201, %v3249
    %3251 = vmatmul.bf16.gmra.mxu0 %v2516
    %v3252 = vpop.f32.mrf.mxu0
    %v3253 = vadd.f32 %v3204, %v3252
    %v3254 = vpop.f32.mrf.mxu0
    %v3255 = vadd.f32 %v3206, %v3254
    %3256 = vmatmul.bf16.gmra.mxu0 %v2525
    %v3257 = vpop.f32.mrf.mxu0
    %v3258 = vadd.f32 %v3209, %v3257
    %v3259 = vpop.f32.mrf.mxu0
    %v3260 = vadd.f32 %v3211, %v3259
    %3261 = vmatmul.bf16.gmra.mxu0 %v2531
    %v3262 = vpop.f32.mrf.mxu0
    %v3263 = vadd.f32 %v3214, %v3262
    %v3264 = vpop.f32.mrf.mxu0
    %v3265 = vadd.f32 %v3216, %v3264
    %3266 = vmatmul.bf16.gmra.mxu0 %v2537
    %v3267 = vpop.f32.mrf.mxu0
    %v3268 = vadd.f32 %v3219, %v3267
    %v3269 = vpop.f32.mrf.mxu0
    %v3270 = vadd.f32 %v3221, %v3269
    %3271 = vmatmul.bf16.gmra.mxu0 %v2543
    %v3272 = vpop.f32.mrf.mxu0
    %v3273 = vadd.f32 %v3224, %v3272
    %v3274 = vpop.f32.mrf.mxu0
    %v3275 = vadd.f32 %v3226, %v3274
    %3276 = vdwg.mxu0
    %3277 = vmatpush.bf16.msra.mxu0 %v3017
    %3278 = vmatpush.bf16.msra.mxu0 %v3016
    %3279 = vmatpush.bf16.msra.mxu0 %v3015
    %3280 = vmatpush.bf16.msra.mxu0 %v3014
    %3281 = vmatpush.bf16.msra.mxu0 %v3013
    %3282 = vmatpush.bf16.msra.mxu0 %v3012
    %3283 = vmatpush.bf16.msra.mxu0 %v3011
    %3284 = vmatpush.bf16.msra.mxu0 %v3010
    %3285 = vmatmul.bf16.gmra.mxu0 %v2499
    %v3286 = vpop.f32.mrf.mxu0
    %v3287 = vadd.f32 %v3238, %v3286
    %v3288 = vpop.f32.mrf.mxu0
    %v3289 = vadd.f32 %v3240, %v3288
    %3290 = vmatmul.bf16.gmra.mxu0 %v2505
    %v3291 = vpop.f32.mrf.mxu0
    %v3292 = vadd.f32 %v3243, %v3291
    %v3293 = vpop.f32.mrf.mxu0
    %v3294 = vadd.f32 %v3245, %v3293
    %3295 = vmatmul.bf16.gmra.mxu0 %v2511
    %v3296 = vpop.f32.mrf.mxu0
    %v3297 = vadd.f32 %v3248, %v3296
    %v3298 = vpop.f32.mrf.mxu0
    %v3299 = vadd.f32 %v3250, %v3298
    %3300 = vmatmul.bf16.gmra.mxu0 %v2517
    %v3301 = vpop.f32.mrf.mxu0
    %v3302 = vadd.f32 %v3253, %v3301
    %v3303 = vpop.f32.mrf.mxu0
    %v3304 = vadd.f32 %v3255, %v3303
    %3305 = vmatmul.bf16.gmra.mxu0 %v2526
    %v3306 = vpop.f32.mrf.mxu0
    %v3307 = vadd.f32 %v3258, %v3306
    %v3308 = vpop.f32.mrf.mxu0
    %v3309 = vadd.f32 %v3260, %v3308
    %3310 = vmatmul.bf16.gmra.mxu0 %v2532
    %v3311 = vpop.f32.mrf.mxu0
    %v3312 = vadd.f32 %v3263, %v3311
    %v3313 = vpop.f32.mrf.mxu0
    %v3314 = vadd.f32 %v3265, %v3313
    %3315 = vmatmul.bf16.gmra.mxu0 %v2538
    %v3316 = vpop.f32.mrf.mxu0
    %v3317 = vadd.f32 %v3268, %v3316
    %v3318 = vpop.f32.mrf.mxu0
    %v3319 = vadd.f32 %v3270, %v3318
    %3320 = vmatmul.bf16.gmra.mxu0 %v2544
    %v3321 = vpop.f32.mrf.mxu0
    %v3322 = vadd.f32 %v3273, %v3321
    %v3323 = vpop.f32.mrf.mxu0
    %v3324 = vadd.f32 %v3275, %v3323
    %3325 = vdwg.mxu0
    %3326 = vmatpush.bf16.msra.mxu0 %v3025
    %3327 = vmatpush.bf16.msra.mxu0 %v3024
    %3328 = vmatpush.bf16.msra.mxu0 %v3023
    %3329 = vmatpush.bf16.msra.mxu0 %v3022
    %3330 = vmatpush.bf16.msra.mxu0 %v3021
    %3331 = vmatpush.bf16.msra.mxu0 %v3020
    %3332 = vmatpush.bf16.msra.mxu0 %v3019
    %3333 = vmatpush.bf16.msra.mxu0 %v3018
    %3334 = vmatmul.bf16.gmra.mxu0 %v2500
    %v3335 = vpop.f32.mrf.mxu0
    %v3336 = vadd.f32 %v3287, %v3335
    %v3337 = vpop.f32.mrf.mxu0
    %v3338 = vadd.f32 %v3289, %v3337
    %3339 = vmatmul.bf16.gmra.mxu0 %v2506
    %v3340 = vpop.f32.mrf.mxu0
    %v3341 = vadd.f32 %v3292, %v3340
    %v3342 = vpop.f32.mrf.mxu0
    %v3343 = vadd.f32 %v3294, %v3342
    %3344 = vmatmul.bf16.gmra.mxu0 %v2512
    %v3345 = vpop.f32.mrf.mxu0
    %v3346 = vadd.f32 %v3297, %v3345
    %v3347 = vpop.f32.mrf.mxu0
    %v3348 = vadd.f32 %v3299, %v3347
    %3349 = vmatmul.bf16.gmra.mxu0 %v2518
    %v3350 = vpop.f32.mrf.mxu0
    %v3351 = vadd.f32 %v3302, %v3350
    %v3352 = vpop.f32.mrf.mxu0
    %v3353 = vadd.f32 %v3304, %v3352
    %3354 = vmatmul.bf16.gmra.mxu0 %v2527
    %v3355 = vpop.f32.mrf.mxu0
    %v3356 = vadd.f32 %v3307, %v3355
    %v3357 = vpop.f32.mrf.mxu0
    %v3358 = vadd.f32 %v3309, %v3357
    %3359 = vmatmul.bf16.gmra.mxu0 %v2533
    %v3360 = vpop.f32.mrf.mxu0
    %v3361 = vadd.f32 %v3312, %v3360
    %v3362 = vpop.f32.mrf.mxu0
    %v3363 = vadd.f32 %v3314, %v3362
    %3364 = vmatmul.bf16.gmra.mxu0 %v2539
    %v3365 = vpop.f32.mrf.mxu0
    %v3366 = vadd.f32 %v3317, %v3365
    %v3367 = vpop.f32.mrf.mxu0
    %v3368 = vadd.f32 %v3319, %v3367
    %3369 = vmatmul.bf16.gmra.mxu0 %v2545
    %v3370 = vpop.f32.mrf.mxu0
    %v3371 = vadd.f32 %v3322, %v3370
    %v3372 = vpop.f32.mrf.mxu0
    %v3373 = vadd.f32 %v3324, %v3372
    %3374 = vdwg.mxu0
    %3375 = vmatpush.bf16.msra.mxu0 %v3033
    %3376 = vmatpush.bf16.msra.mxu0 %v3032
    %3377 = vmatpush.bf16.msra.mxu0 %v3031
    %3378 = vmatpush.bf16.msra.mxu0 %v3030
    %3379 = vmatpush.bf16.msra.mxu0 %v3029
    %3380 = vmatpush.bf16.msra.mxu0 %v3028
    %3381 = vmatpush.bf16.msra.mxu0 %v3027
    %3382 = vmatpush.bf16.msra.mxu0 %v3026
    %3383 = vmatmul.bf16.gmra.mxu0 %v2501
    %v3384 = vpop.f32.mrf.mxu0
    %v3385 = vadd.f32 %v3336, %v3384
    %v3386 = vpop.f32.mrf.mxu0
    %v3387 = vadd.f32 %v3338, %v3386
    %3388 = vmatmul.bf16.gmra.mxu0 %v2507
    %v3389 = vpop.f32.mrf.mxu0
    %v3390 = vadd.f32 %v3341, %v3389
    %v3391 = vpop.f32.mrf.mxu0
    %v3392 = vadd.f32 %v3343, %v3391
    %3393 = vmatmul.bf16.gmra.mxu0 %v2513
    %v3394 = vpop.f32.mrf.mxu0
    %v3395 = vadd.f32 %v3346, %v3394
    %v3396 = vpop.f32.mrf.mxu0
    %v3397 = vadd.f32 %v3348, %v3396
    %3398 = vmatmul.bf16.gmra.mxu0 %v2519
    %v3399 = vpop.f32.mrf.mxu0
    %v3400 = vadd.f32 %v3351, %v3399
    %v3401 = vpop.f32.mrf.mxu0
    %v3402 = vadd.f32 %v3353, %v3401
    %3403 = vmatmul.bf16.gmra.mxu0 %v2528
    %v3404 = vpop.f32.mrf.mxu0
    %v3405 = vadd.f32 %v3356, %v3404
    %v3406 = vpop.f32.mrf.mxu0
    %v3407 = vadd.f32 %v3358, %v3406
    %3408 = vmatmul.bf16.gmra.mxu0 %v2534
    %v3409 = vpop.f32.mrf.mxu0
    %v3410 = vadd.f32 %v3361, %v3409
    %v3411 = vpop.f32.mrf.mxu0
    %v3412 = vadd.f32 %v3363, %v3411
    %3413 = vmatmul.bf16.gmra.mxu0 %v2540
    %v3414 = vpop.f32.mrf.mxu0
    %v3415 = vadd.f32 %v3366, %v3414
    %v3416 = vpop.f32.mrf.mxu0
    %v3417 = vadd.f32 %v3368, %v3416
    %3418 = vmatmul.bf16.gmra.mxu0 %v2546
    %v3419 = vpop.f32.mrf.mxu0
    %v3420 = vadd.f32 %v3371, %v3419
    %v3421 = vpop.f32.mrf.mxu0
    %v3422 = vadd.f32 %v3373, %v3421
    %3423 = vdwg.mxu0
    %3424 = vmatpush.bf16.msra.mxu0 %v3041
    %3425 = vmatpush.bf16.msra.mxu0 %v3040
    %3426 = vmatpush.bf16.msra.mxu0 %v3039
    %3427 = vmatpush.bf16.msra.mxu0 %v3038
    %3428 = vmatpush.bf16.msra.mxu0 %v3037
    %3429 = vmatpush.bf16.msra.mxu0 %v3036
    %3430 = vmatpush.bf16.msra.mxu0 %v3035
    %3431 = vmatpush.bf16.msra.mxu0 %v3034
    %3432 = vmatmul.bf16.gmra.mxu0 %v2502
    %v3433 = vpop.f32.mrf.mxu0
    %v3434 = vadd.f32 %v3385, %v3433
    %v3435 = vpop.f32.mrf.mxu0
    %v3436 = vadd.f32 %v3387, %v3435
    %3437 = vmatmul.bf16.gmra.mxu0 %v2508
    %v3438 = vpop.f32.mrf.mxu0
    %v3439 = vadd.f32 %v3390, %v3438
    %v3440 = vpop.f32.mrf.mxu0
    %v3441 = vadd.f32 %v3392, %v3440
    %3442 = vmatmul.bf16.gmra.mxu0 %v2514
    %v3443 = vpop.f32.mrf.mxu0
    %v3444 = vadd.f32 %v3395, %v3443
    %v3445 = vpop.f32.mrf.mxu0
    %v3446 = vadd.f32 %v3397, %v3445
    %3447 = vmatmul.bf16.gmra.mxu0 %v2520
    %v3448 = vpop.f32.mrf.mxu0
    %v3449 = vadd.f32 %v3400, %v3448
    %v3450 = vpop.f32.mrf.mxu0
    %v3451 = vadd.f32 %v3402, %v3450
    %3452 = vmatmul.bf16.gmra.mxu0 %v2529
    %v3453 = vpop.f32.mrf.mxu0
    %v3454 = vadd.f32 %v3405, %v3453
    %v3455 = vpop.f32.mrf.mxu0
    %v3456 = vadd.f32 %v3407, %v3455
    %3457 = vmatmul.bf16.gmra.mxu0 %v2535
    %v3458 = vpop.f32.mrf.mxu0
    %v3459 = vadd.f32 %v3410, %v3458
    %v3460 = vpop.f32.mrf.mxu0
    %v3461 = vadd.f32 %v3412, %v3460
    %3462 = vmatmul.bf16.gmra.mxu0 %v2541
    %v3463 = vpop.f32.mrf.mxu0
    %v3464 = vadd.f32 %v3415, %v3463
    %v3465 = vpop.f32.mrf.mxu0
    %v3466 = vadd.f32 %v3417, %v3465
    %3467 = vmatmul.bf16.gmra.mxu0 %v2547
    %v3468 = vpop.f32.mrf.mxu0
    %v3469 = vadd.f32 %v3420, %v3468
    %v3470 = vpop.f32.mrf.mxu0
    %v3471 = vadd.f32 %v3422, %v3470
    %3472 = vdwg.mxu0
    %3473 = vmatpush.bf16.msra.mxu0 %v3049
    %3474 = vmatpush.bf16.msra.mxu0 %v3048
    %3475 = vmatpush.bf16.msra.mxu0 %v3047
    %3476 = vmatpush.bf16.msra.mxu0 %v3046
    %3477 = vmatpush.bf16.msra.mxu0 %v3045
    %3478 = vmatpush.bf16.msra.mxu0 %v3044
    %3479 = vmatpush.bf16.msra.mxu0 %v3043
    %3480 = vmatpush.bf16.msra.mxu0 %v3042
    %3481 = vmatmul.bf16.gmra.mxu0 %v2503
    %v3482 = vpop.f32.mrf.mxu0
    %v3483 = vadd.f32 %v3434, %v3482
    %v3484 = vpop.f32.mrf.mxu0
    %v3485 = vadd.f32 %v3436, %v3484
    %3486 = vmatmul.bf16.gmra.mxu0 %v2509
    %v3487 = vpop.f32.mrf.mxu0
    %v3488 = vadd.f32 %v3439, %v3487
    %v3489 = vpop.f32.mrf.mxu0
    %v3490 = vadd.f32 %v3441, %v3489
    %3491 = vmatmul.bf16.gmra.mxu0 %v2515
    %v3492 = vpop.f32.mrf.mxu0
    %v3493 = vadd.f32 %v3444, %v3492
    %v3494 = vpop.f32.mrf.mxu0
    %v3495 = vadd.f32 %v3446, %v3494
    %3496 = vmatmul.bf16.gmra.mxu0 %v2521
    %v3497 = vpop.f32.mrf.mxu0
    %v3498 = vadd.f32 %v3449, %v3497
    %v3499 = vpop.f32.mrf.mxu0
    %v3500 = vadd.f32 %v3451, %v3499
    %3501 = vmatmul.bf16.gmra.mxu0 %v2530
    %v3502 = vpop.f32.mrf.mxu0
    %v3503 = vadd.f32 %v3454, %v3502
    %v3504 = vpop.f32.mrf.mxu0
    %v3505 = vadd.f32 %v3456, %v3504
    %3506 = vmatmul.bf16.gmra.mxu0 %v2536
    %v3507 = vpop.f32.mrf.mxu0
    %v3508 = vadd.f32 %v3459, %v3507
    %v3509 = vpop.f32.mrf.mxu0
    %v3510 = vadd.f32 %v3461, %v3509
    %3511 = vmatmul.bf16.gmra.mxu0 %v2542
    %v3512 = vpop.f32.mrf.mxu0
    %v3513 = vadd.f32 %v3464, %v3512
    %v3514 = vpop.f32.mrf.mxu0
    %v3515 = vadd.f32 %v3466, %v3514
    %3516 = vmatmul.bf16.gmra.mxu0 %v2548
    %v3517 = vpop.f32.mrf.mxu0
    %v3518 = vadd.f32 %v3469, %v3517
    %v3519 = vpop.f32.mrf.mxu0
    %v3520 = vadd.f32 %v3471, %v3519
    %3521 = vdwg.mxu0
    %3522 = vmatpush.bf16.msra.mxu0 %v3057
    %3523 = vmatpush.bf16.msra.mxu0 %v3056
    %3524 = vmatpush.bf16.msra.mxu0 %v3055
    %3525 = vmatpush.bf16.msra.mxu0 %v3054
    %3526 = vmatpush.bf16.msra.mxu0 %v3053
    %3527 = vmatpush.bf16.msra.mxu0 %v3052
    %3528 = vmatpush.bf16.msra.mxu0 %v3051
    %3529 = vmatpush.bf16.msra.mxu0 %v3050
    %3530 = vmatmul.bf16.gmra.mxu0 %v2504
    %v3531 = vpop.f32.mrf.mxu0
    %v3532 = vadd.f32 %v3483, %v3531
    %v3533 = vpop.f32.mrf.mxu0
    %v3534 = vadd.f32 %v3485, %v3533
    %3535 = vmatmul.bf16.gmra.mxu0 %v2510
    %v3536 = vpop.f32.mrf.mxu0
    %v3537 = vadd.f32 %v3488, %v3536
    %v3538 = vpop.f32.mrf.mxu0
    %v3539 = vadd.f32 %v3490, %v3538
    %3540 = vmatmul.bf16.gmra.mxu0 %v2516
    %v3541 = vpop.f32.mrf.mxu0
    %v3542 = vadd.f32 %v3493, %v3541
    %v3543 = vpop.f32.mrf.mxu0
    %v3544 = vadd.f32 %v3495, %v3543
    %3545 = vmatmul.bf16.gmra.mxu0 %v2522
    %v3546 = vpop.f32.mrf.mxu0
    %v3547 = vadd.f32 %v3498, %v3546
    %v3548 = vpop.f32.mrf.mxu0
    %v3549 = vadd.f32 %v3500, %v3548
    %3550 = vmatmul.bf16.gmra.mxu0 %v2531
    %v3551 = vpop.f32.mrf.mxu0
    %v3552 = vadd.f32 %v3503, %v3551
    %v3553 = vpop.f32.mrf.mxu0
    %v3554 = vadd.f32 %v3505, %v3553
    %3555 = vmatmul.bf16.gmra.mxu0 %v2537
    %v3556 = vpop.f32.mrf.mxu0
    %v3557 = vadd.f32 %v3508, %v3556
    %v3558 = vpop.f32.mrf.mxu0
    %v3559 = vadd.f32 %v3510, %v3558
    %3560 = vmatmul.bf16.gmra.mxu0 %v2543
    %v3561 = vpop.f32.mrf.mxu0
    %v3562 = vadd.f32 %v3513, %v3561
    %v3563 = vpop.f32.mrf.mxu0
    %v3564 = vadd.f32 %v3515, %v3563
    %3565 = vmatmul.bf16.gmra.mxu0 %v2549
    %v3566 = vpop.f32.mrf.mxu0
    %v3567 = vadd.f32 %v3518, %v3566
    %v3568 = vpop.f32.mrf.mxu0
    %v3569 = vadd.f32 %v3520, %v3568
    %3570 = vdwg.mxu0
    %v3571 = vmax.f32 %v3532, 0.0
    %v3572 = vmax.f32 %v3534, 0.0
    %v3573 = vmax.f32 %v3537, 0.0
    %v3574 = vmax.f32 %v3539, 0.0
    %v3575 = vmax.f32 %v3542, 0.0
    %v3576 = vmax.f32 %v3544, 0.0
    %v3577 = vmax.f32 %v3547, 0.0
    %v3578 = vmax.f32 %v3549, 0.0
    %v3579 = vmax.f32 %v3552, 0.0
    %v3580 = vmax.f32 %v3554, 0.0
    %v3581 = vmax.f32 %v3557, 0.0
    %v3582 = vmax.f32 %v3559, 0.0
    %v3583 = vmax.f32 %v3562, 0.0
    %v3584 = vmax.f32 %v3564, 0.0
    %v3585 = vmax.f32 %v3567, 0.0
    %v3586 = vmax.f32 %v3569, 0.0
    %v3587 = vrot.slane %v3571, 7
    %v3588 = vrot.slane %v3572, 7
    %v3589 = vrot.slane %v3573, 7
    %v3590 = vrot.slane %v3574, 7
    %v3591 = vrot.slane %v3575, 7
    %v3592 = vrot.slane %v3576, 7
    %v3593 = vrot.slane %v3577, 7
    %v3594 = vrot.slane %v3578, 7
    %v3595 = vrot.slane %v3579, 7
    %v3596 = vrot.slane %v3580, 7
    %v3597 = vrot.slane %v3581, 7
    %v3598 = vrot.slane %v3582, 7
    %v3599 = vrot.slane %v3583, 7
    %v3600 = vrot.slane %v3584, 7
    %v3601 = vrot.slane %v3585, 7
    %v3602 = vrot.slane %v3586, 7
    %v3603 = vmul.f32 %v3587, %v38
    %v3604 = vmul.f32 %v3588, %v38
    %v3605 = vmul.f32 %v3589, %v38
    %v3606 = vmul.f32 %v3590, %v38
    %v3607 = vmul.f32 %v3591, %v38
    %v3608 = vmul.f32 %v3592, %v38
    %v3609 = vmul.f32 %v3593, %v38
    %v3610 = vmul.f32 %v3594, %v38
    %v3611 = vmul.f32 %v3595, %v38
    %v3612 = vmul.f32 %v3596, %v38
    %v3613 = vmul.f32 %v3597, %v38
    %v3614 = vmul.f32 %v3598, %v38
    %v3615 = vmul.f32 %v3599, %v38
    %v3616 = vmul.f32 %v3600, %v38
    %v3617 = vmul.f32 %v3601, %v38
    %v3618 = vmul.f32 %v3602, %v38
    %v3619 = vrot.slane %v3571, 1
    %v3620 = vrot.slane %v3572, 1
    %v3621 = vrot.slane %v3573, 1
    %v3622 = vrot.slane %v3574, 1
    %v3623 = vrot.slane %v3575, 1
    %v3624 = vrot.slane %v3576, 1
    %v3625 = vrot.slane %v3577, 1
    %v3626 = vrot.slane %v3578, 1
    %v3627 = vrot.slane %v3579, 1
    %v3628 = vrot.slane %v3580, 1
    %v3629 = vrot.slane %v3581, 1
    %v3630 = vrot.slane %v3582, 1
    %v3631 = vrot.slane %v3583, 1
    %v3632 = vrot.slane %v3584, 1
    %v3633 = vrot.slane %v3585, 1
    %v3634 = vrot.slane %v3586, 1
    %v3635 = vmul.f32 %v3619, %v41
    %v3636 = vmul.f32 %v3620, %v41
    %v3637 = vmul.f32 %v3621, %v41
    %v3638 = vmul.f32 %v3622, %v41
    %v3639 = vmul.f32 %v3623, %v41
    %v3640 = vmul.f32 %v3624, %v41
    %v3641 = vmul.f32 %v3625, %v41
    %v3642 = vmul.f32 %v3626, %v41
    %v3643 = vmul.f32 %v3627, %v41
    %v3644 = vmul.f32 %v3628, %v41
    %v3645 = vmul.f32 %v3629, %v41
    %v3646 = vmul.f32 %v3630, %v41
    %v3647 = vmul.f32 %v3631, %v41
    %v3648 = vmul.f32 %v3632, %v41
    %v3649 = vmul.f32 %v3633, %v41
    %v3650 = vmul.f32 %v3634, %v41
    %v3651 = vpack.c.bf16 %v3603, %v1275
    %v3652 = vpack.c.bf16 %v3571, 0.0
    %v3653 = vpack.c.bf16 %v3635, %v1308
    %v3654 = vpack.c.bf16 %v3604, %v3603
    %v3655 = vpack.c.bf16 %v3572, %v3571
    %v3656 = vpack.c.bf16 %v3636, %v3635
    %v3657 = vpack.c.bf16 %v3605, %v3604
    %v3658 = vpack.c.bf16 %v3573, %v3572
    %v3659 = vpack.c.bf16 %v3637, %v3636
    %v3660 = vpack.c.bf16 %v3606, %v3605
    %v3661 = vpack.c.bf16 %v3574, %v3573
    %v3662 = vpack.c.bf16 %v3638, %v3637
    %v3663 = vpack.c.bf16 %v3607, %v3606
    %v3664 = vpack.c.bf16 %v3575, %v3574
    %v3665 = vpack.c.bf16 %v3639, %v3638
    %v3666 = vpack.c.bf16 %v3608, %v3607
    %v3667 = vpack.c.bf16 %v3576, %v3575
    %v3668 = vpack.c.bf16 %v3640, %v3639
    %v3669 = vpack.c.bf16 %v3609, %v3608
    %v3670 = vpack.c.bf16 %v3577, %v3576
    %v3671 = vpack.c.bf16 %v3641, %v3640
    %v3672 = vpack.c.bf16 %v3610, %v3609
    %v3673 = vpack.c.bf16 %v3578, %v3577
    %v3674 = vpack.c.bf16 %v3642, %v3641
    %v3675 = vpack.c.bf16 %v1275, %v3610
    %v3676 = vpack.c.bf16 0.0, %v3578
    %v3677 = vpack.c.bf16 %v1308, %v3642
    %v3678 = vpack.c.bf16 %v3611, %v1275
    %v3679 = vpack.c.bf16 %v3579, 0.0
    %v3680 = vpack.c.bf16 %v3643, %v1308
    %v3681 = vpack.c.bf16 %v3612, %v3611
    %v3682 = vpack.c.bf16 %v3580, %v3579
    %v3683 = vpack.c.bf16 %v3644, %v3643
    %v3684 = vpack.c.bf16 %v3613, %v3612
    %v3685 = vpack.c.bf16 %v3581, %v3580
    %v3686 = vpack.c.bf16 %v3645, %v3644
    %v3687 = vpack.c.bf16 %v3614, %v3613
    %v3688 = vpack.c.bf16 %v3582, %v3581
    %v3689 = vpack.c.bf16 %v3646, %v3645
    %v3690 = vpack.c.bf16 %v3615, %v3614
    %v3691 = vpack.c.bf16 %v3583, %v3582
    %v3692 = vpack.c.bf16 %v3647, %v3646
    %v3693 = vpack.c.bf16 %v3616, %v3615
    %v3694 = vpack.c.bf16 %v3584, %v3583
    %v3695 = vpack.c.bf16 %v3648, %v3647
    %v3696 = vpack.c.bf16 %v3617, %v3616
    %v3697 = vpack.c.bf16 %v3585, %v3584
    %v3698 = vpack.c.bf16 %v3649, %v3648
    %v3699 = vpack.c.bf16 %v3618, %v3617
    %v3700 = vpack.c.bf16 %v3586, %v3585
    %v3701 = vpack.c.bf16 %v3650, %v3649
    %v3702 = vpack.c.bf16 %v1275, %v3618
    %v3703 = vpack.c.bf16 0.0, %v3586
    %v3704 = vpack.c.bf16 %v1308, %v3650
    %v3705 = vld [vmem:[%s7] sm:$0xf]
    %v3706 = vld [vmem:[%s7 + $0x4] sm:$0xf]
    %v3707 = vld [vmem:[%s7 + $0x8] sm:$0xf]
    %v3708 = vld [vmem:[%s7 + $0xc] sm:$0xf]
    %v3709 = vld [vmem:[%s7 + $0x10] sm:$0xf]
    %v3710 = vld [vmem:[%s7 + $0x14] sm:$0xf]
    %v3711 = vld [vmem:[%s7 + $0x18] sm:$0xf]
    %v3712 = vld [vmem:[%s7 + $0x1c] sm:$0xf]
    %v3713 = vld [vmem:[%s7 + $0x20] sm:$0xf]
    %v3714 = vld [vmem:[%s7 + $0x24] sm:$0xf]
    %v3715 = vld [vmem:[%s7 + $0x28] sm:$0xf]
    %v3716 = vld [vmem:[%s7 + $0x2c] sm:$0xf]
    %v3717 = vld [vmem:[%s7 + $0x30] sm:$0xf]
    %v3718 = vld [vmem:[%s7 + $0x34] sm:$0xf]
    %v3719 = vld [vmem:[%s7 + $0x38] sm:$0xf]
    %v3720 = vld [vmem:[%s7 + $0x3c] sm:$0xf]
    %v3721 = vld [vmem:[%s7 + $0x40] sm:$0xf]
    %v3722 = vld [vmem:[%s7 + $0x44] sm:$0xf]
    %v3723 = vld [vmem:[%s7 + $0x48] sm:$0xf]
    %v3724 = vld [vmem:[%s7 + $0x4c] sm:$0xf]
    %v3725 = vld [vmem:[%s7 + $0x50] sm:$0xf]
    %v3726 = vld [vmem:[%s7 + $0x54] sm:$0xf]
    %v3727 = vld [vmem:[%s7 + $0x58] sm:$0xf]
    %v3728 = vld [vmem:[%s7 + $0x5c] sm:$0xf]
    %v3729 = vld [vmem:[%s7 + $0x60] sm:$0xf]
    %v3730 = vld [vmem:[%s7 + $0x64] sm:$0xf]
    %v3731 = vld [vmem:[%s7 + $0x68] sm:$0xf]
    %v3732 = vld [vmem:[%s7 + $0x6c] sm:$0xf]
    %v3733 = vld [vmem:[%s7 + $0x70] sm:$0xf]
    %v3734 = vld [vmem:[%s7 + $0x74] sm:$0xf]
    %v3735 = vld [vmem:[%s7 + $0x78] sm:$0xf]
    %v3736 = vld [vmem:[%s7 + $0x7c] sm:$0xf]
    %v3737 = vld [vmem:[%s7 + $0x80] sm:$0xf]
    %v3738 = vld [vmem:[%s7 + $0x84] sm:$0xf]
    %v3739 = vld [vmem:[%s7 + $0x88] sm:$0xf]
    %v3740 = vld [vmem:[%s7 + $0x8c] sm:$0xf]
    %v3741 = vld [vmem:[%s7 + $0x90] sm:$0xf]
    %v3742 = vld [vmem:[%s7 + $0x94] sm:$0xf]
    %v3743 = vld [vmem:[%s7 + $0x98] sm:$0xf]
    %v3744 = vld [vmem:[%s7 + $0x9c] sm:$0xf]
    %v3745 = vld [vmem:[%s7 + $0xa0] sm:$0xf]
    %v3746 = vld [vmem:[%s7 + $0xa4] sm:$0xf]
    %v3747 = vld [vmem:[%s7 + $0xa8] sm:$0xf]
    %v3748 = vld [vmem:[%s7 + $0xac] sm:$0xf]
    %v3749 = vld [vmem:[%s7 + $0xb0] sm:$0xf]
    %v3750 = vld [vmem:[%s7 + $0xb4] sm:$0xf]
    %v3751 = vld [vmem:[%s7 + $0xb8] sm:$0xf]
    %v3752 = vld [vmem:[%s7 + $0xbc] sm:$0xf]
    %v3753 = vld [vmem:[%s7 + $0xc0] sm:$0xf]
    %v3754 = vld [vmem:[%s7 + $0xc4] sm:$0xf]
    %v3755 = vld [vmem:[%s7 + $0xc8] sm:$0xf]
    %v3756 = vld [vmem:[%s7 + $0xcc] sm:$0xf]
    %v3757 = vld [vmem:[%s7 + $0xd0] sm:$0xf]
    %v3758 = vld [vmem:[%s7 + $0xd4] sm:$0xf]
    %v3759 = vld [vmem:[%s7 + $0xd8] sm:$0xf]
    %v3760 = vld [vmem:[%s7 + $0xdc] sm:$0xf]
    %v3761 = vld [vmem:[%s7 + $0xe0] sm:$0xf]
    %v3762 = vld [vmem:[%s7 + $0xe4] sm:$0xf]
    %v3763 = vld [vmem:[%s7 + $0xe8] sm:$0xf]
    %v3764 = vld [vmem:[%s7 + $0xec] sm:$0xf]
    %v3765 = vld [vmem:[%s7 + $0xf0] sm:$0xf]
    %v3766 = vld [vmem:[%s7 + $0xf4] sm:$0xf]
    %v3767 = vld [vmem:[%s7 + $0xf8] sm:$0xf]
    %v3768 = vld [vmem:[%s7 + $0xfc] sm:$0xf]
    %v3769 = vld [vmem:[%s7 + $0x100] sm:$0xf]
    %v3770 = vld [vmem:[%s7 + $0x104] sm:$0xf]
    %v3771 = vld [vmem:[%s7 + $0x108] sm:$0xf]
    %v3772 = vld [vmem:[%s7 + $0x10c] sm:$0xf]
    %v3773 = vld [vmem:[%s7 + $0x110] sm:$0xf]
    %v3774 = vld [vmem:[%s7 + $0x114] sm:$0xf]
    %v3775 = vld [vmem:[%s7 + $0x118] sm:$0xf]
    %v3776 = vld [vmem:[%s7 + $0x11c] sm:$0xf]
    %v3777 = vld [vmem:[%s7 + $0x120] sm:$0xf]
    %v3778 = vld [vmem:[%s7 + $0x124] sm:$0xf]
    %v3779 = vld [vmem:[%s7 + $0x128] sm:$0xf]
    %v3780 = vld [vmem:[%s7 + $0x12c] sm:$0xf]
    %v3781 = vld [vmem:[%s7 + $0x130] sm:$0xf]
    %v3782 = vld [vmem:[%s7 + $0x134] sm:$0xf]
    %v3783 = vld [vmem:[%s7 + $0x138] sm:$0xf]
    %v3784 = vld [vmem:[%s7 + $0x13c] sm:$0xf]
    %v3785 = vld [vmem:[%s7 + $0x140] sm:$0xf]
    %v3786 = vld [vmem:[%s7 + $0x144] sm:$0xf]
    %v3787 = vld [vmem:[%s7 + $0x148] sm:$0xf]
    %v3788 = vld [vmem:[%s7 + $0x14c] sm:$0xf]
    %v3789 = vld [vmem:[%s7 + $0x150] sm:$0xf]
    %v3790 = vld [vmem:[%s7 + $0x154] sm:$0xf]
    %v3791 = vld [vmem:[%s7 + $0x158] sm:$0xf]
    %v3792 = vld [vmem:[%s7 + $0x15c] sm:$0xf]
    %v3793 = vld [vmem:[%s7 + $0x160] sm:$0xf]
    %v3794 = vld [vmem:[%s7 + $0x164] sm:$0xf]
    %v3795 = vld [vmem:[%s7 + $0x168] sm:$0xf]
    %v3796 = vld [vmem:[%s7 + $0x16c] sm:$0xf]
    %v3797 = vld [vmem:[%s7 + $0x170] sm:$0xf]
    %v3798 = vld [vmem:[%s7 + $0x174] sm:$0xf]
    %v3799 = vld [vmem:[%s7 + $0x178] sm:$0xf]
    %v3800 = vld [vmem:[%s7 + $0x17c] sm:$0xf]
    %v3801 = vld [vmem:[%s7 + $0x180] sm:$0xf]
    %v3802 = vld [vmem:[%s7 + $0x184] sm:$0xf]
    %v3803 = vld [vmem:[%s7 + $0x188] sm:$0xf]
    %v3804 = vld [vmem:[%s7 + $0x18c] sm:$0xf]
    %v3805 = vld [vmem:[%s7 + $0x190] sm:$0xf]
    %v3806 = vld [vmem:[%s7 + $0x194] sm:$0xf]
    %v3807 = vld [vmem:[%s7 + $0x198] sm:$0xf]
    %v3808 = vld [vmem:[%s7 + $0x19c] sm:$0xf]
    %v3809 = vld [vmem:[%s7 + $0x1a0] sm:$0xf]
    %v3810 = vld [vmem:[%s7 + $0x1a4] sm:$0xf]
    %v3811 = vld [vmem:[%s7 + $0x1a8] sm:$0xf]
    %v3812 = vld [vmem:[%s7 + $0x1ac] sm:$0xf]
    %v3813 = vld [vmem:[%s7 + $0x1b0] sm:$0xf]
    %v3814 = vld [vmem:[%s7 + $0x1b4] sm:$0xf]
    %v3815 = vld [vmem:[%s7 + $0x1b8] sm:$0xf]
    %v3816 = vld [vmem:[%s7 + $0x1bc] sm:$0xf]
    %v3817 = vld [vmem:[%s7 + $0x1c0] sm:$0xf]
    %v3818 = vld [vmem:[%s7 + $0x1c4] sm:$0xf]
    %v3819 = vld [vmem:[%s7 + $0x1c8] sm:$0xf]
    %v3820 = vld [vmem:[%s7 + $0x1cc] sm:$0xf]
    %v3821 = vld [vmem:[%s7 + $0x1d0] sm:$0xf]
    %v3822 = vld [vmem:[%s7 + $0x1d4] sm:$0xf]
    %v3823 = vld [vmem:[%s7 + $0x1d8] sm:$0xf]
    %v3824 = vld [vmem:[%s7 + $0x1dc] sm:$0xf]
    %v3825 = vld [vmem:[%s7 + $0x1e0] sm:$0xf]
    %v3826 = vld [vmem:[%s7 + $0x1e4] sm:$0xf]
    %v3827 = vld [vmem:[%s7 + $0x1e8] sm:$0xf]
    %v3828 = vld [vmem:[%s7 + $0x1ec] sm:$0xf]
    %v3829 = vld [vmem:[%s7 + $0x1f0] sm:$0xf]
    %v3830 = vld [vmem:[%s7 + $0x1f4] sm:$0xf]
    %v3831 = vld [vmem:[%s7 + $0x1f8] sm:$0xf]
    %v3832 = vld [vmem:[%s7 + $0x1fc] sm:$0xf]
    %v3833 = vld [vmem:[%s7 + $0x200] sm:$0xf]
    %v3834 = vld [vmem:[%s7 + $0x204] sm:$0xf]
    %v3835 = vld [vmem:[%s7 + $0x208] sm:$0xf]
    %v3836 = vld [vmem:[%s7 + $0x20c] sm:$0xf]
    %v3837 = vld [vmem:[%s7 + $0x210] sm:$0xf]
    %v3838 = vld [vmem:[%s7 + $0x214] sm:$0xf]
    %v3839 = vld [vmem:[%s7 + $0x218] sm:$0xf]
    %v3840 = vld [vmem:[%s7 + $0x21c] sm:$0xf]
    %v3841 = vld [vmem:[%s7 + $0x220] sm:$0xf]
    %v3842 = vld [vmem:[%s7 + $0x224] sm:$0xf]
    %v3843 = vld [vmem:[%s7 + $0x228] sm:$0xf]
    %v3844 = vld [vmem:[%s7 + $0x22c] sm:$0xf]
    %v3845 = vld [vmem:[%s7 + $0x230] sm:$0xf]
    %v3846 = vld [vmem:[%s7 + $0x234] sm:$0xf]
    %v3847 = vld [vmem:[%s7 + $0x238] sm:$0xf]
    %v3848 = vld [vmem:[%s7 + $0x23c] sm:$0xf]
    %v3849 = vld [vmem:[%s8] sm:$0x1]
    %v3851 = vperm.slane %v3849, 0
    %v3997 = vunpack.c.l.b16 %v3705
    %v3998 = vunpack.c.l.b16 %v3706
    %v3999 = vunpack.c.l.b16 %v3707
    %v4000 = vunpack.c.l.b16 %v3708
    %v4001 = vunpack.c.l.b16 %v3709
    %v4002 = vunpack.c.l.b16 %v3710
    %v4003 = vunpack.c.l.b16 %v3711
    %v4004 = vunpack.c.l.b16 %v3712
    %v4005 = vunpack.c.l.b16 %v3713
    %v4006 = vunpack.c.l.b16 %v3714
    %v4007 = vunpack.c.l.b16 %v3715
    %v4008 = vunpack.c.l.b16 %v3716
    %v4009 = vunpack.c.l.b16 %v3717
    %v4010 = vunpack.c.l.b16 %v3718
    %v4011 = vunpack.c.l.b16 %v3719
    %v4012 = vunpack.c.l.b16 %v3720
    %v4013 = vunpack.c.l.b16 %v3721
    %v4014 = vunpack.c.l.b16 %v3722
    %v4015 = vunpack.c.l.b16 %v3723
    %v4016 = vunpack.c.l.b16 %v3724
    %v4017 = vunpack.c.l.b16 %v3725
    %v4018 = vunpack.c.l.b16 %v3726
    %v4019 = vunpack.c.l.b16 %v3727
    %v4020 = vunpack.c.l.b16 %v3728
    %v4021 = vunpack.c.l.b16 %v3729
    %v4022 = vunpack.c.l.b16 %v3730
    %v4023 = vunpack.c.l.b16 %v3731
    %v4024 = vunpack.c.l.b16 %v3732
    %v4025 = vunpack.c.l.b16 %v3733
    %v4026 = vunpack.c.l.b16 %v3734
    %v4027 = vunpack.c.l.b16 %v3735
    %v4028 = vunpack.c.l.b16 %v3736
    %v4029 = vunpack.c.l.b16 %v3737
    %v4030 = vunpack.c.l.b16 %v3738
    %v4031 = vunpack.c.l.b16 %v3739
    %v4032 = vunpack.c.l.b16 %v3740
    %v4033 = vunpack.c.l.b16 %v3741
    %v4034 = vunpack.c.l.b16 %v3742
    %v4035 = vunpack.c.l.b16 %v3743
    %v4036 = vunpack.c.l.b16 %v3744
    %v4037 = vunpack.c.l.b16 %v3745
    %v4038 = vunpack.c.l.b16 %v3746
    %v4039 = vunpack.c.l.b16 %v3747
    %v4040 = vunpack.c.l.b16 %v3748
    %v4041 = vunpack.c.l.b16 %v3749
    %v4042 = vunpack.c.l.b16 %v3750
    %v4043 = vunpack.c.l.b16 %v3751
    %v4044 = vunpack.c.l.b16 %v3752
    %v4045 = vunpack.c.l.b16 %v3753
    %v4046 = vunpack.c.l.b16 %v3754
    %v4047 = vunpack.c.l.b16 %v3755
    %v4048 = vunpack.c.l.b16 %v3756
    %v4049 = vunpack.c.l.b16 %v3757
    %v4050 = vunpack.c.l.b16 %v3758
    %v4051 = vunpack.c.l.b16 %v3759
    %v4052 = vunpack.c.l.b16 %v3760
    %v4053 = vunpack.c.l.b16 %v3761
    %v4054 = vunpack.c.l.b16 %v3762
    %v4055 = vunpack.c.l.b16 %v3763
    %v4056 = vunpack.c.l.b16 %v3764
    %v4057 = vunpack.c.l.b16 %v3765
    %v4058 = vunpack.c.l.b16 %v3766
    %v4059 = vunpack.c.l.b16 %v3767
    %v4060 = vunpack.c.l.b16 %v3768
    %v4061 = vunpack.c.l.b16 %v3769
    %v4062 = vunpack.c.l.b16 %v3770
    %v4063 = vunpack.c.l.b16 %v3771
    %v4064 = vunpack.c.l.b16 %v3772
    %v4065 = vunpack.c.l.b16 %v3773
    %v4066 = vunpack.c.l.b16 %v3774
    %v4067 = vunpack.c.l.b16 %v3775
    %v4068 = vunpack.c.l.b16 %v3776
    %v4069 = vunpack.c.l.b16 %v3777
    %v4070 = vunpack.c.l.b16 %v3778
    %v4071 = vunpack.c.l.b16 %v3779
    %v4072 = vunpack.c.l.b16 %v3780
    %v4073 = vunpack.c.l.b16 %v3781
    %v4074 = vunpack.c.l.b16 %v3782
    %v4075 = vunpack.c.l.b16 %v3783
    %v4076 = vunpack.c.l.b16 %v3784
    %v4077 = vunpack.c.l.b16 %v3785
    %v4078 = vunpack.c.l.b16 %v3786
    %v4079 = vunpack.c.l.b16 %v3787
    %v4080 = vunpack.c.l.b16 %v3788
    %v4081 = vunpack.c.l.b16 %v3789
    %v4082 = vunpack.c.l.b16 %v3790
    %v4083 = vunpack.c.l.b16 %v3791
    %v4084 = vunpack.c.l.b16 %v3792
    %v4085 = vunpack.c.l.b16 %v3793
    %v4086 = vunpack.c.l.b16 %v3794
    %v4087 = vunpack.c.l.b16 %v3795
    %v4088 = vunpack.c.l.b16 %v3796
    %v4089 = vunpack.c.l.b16 %v3797
    %v4090 = vunpack.c.l.b16 %v3798
    %v4091 = vunpack.c.l.b16 %v3799
    %v4092 = vunpack.c.l.b16 %v3800
    %v4093 = vunpack.c.l.b16 %v3801
    %v4094 = vunpack.c.l.b16 %v3802
    %v4095 = vunpack.c.l.b16 %v3803
    %v4096 = vunpack.c.l.b16 %v3804
    %v4097 = vunpack.c.l.b16 %v3805
    %v4098 = vunpack.c.l.b16 %v3806
    %v4099 = vunpack.c.l.b16 %v3807
    %v4100 = vunpack.c.l.b16 %v3808
    %v4101 = vunpack.c.l.b16 %v3809
    %v4102 = vunpack.c.l.b16 %v3810
    %v4103 = vunpack.c.l.b16 %v3811
    %v4104 = vunpack.c.l.b16 %v3812
    %v4105 = vunpack.c.l.b16 %v3813
    %v4106 = vunpack.c.l.b16 %v3814
    %v4107 = vunpack.c.l.b16 %v3815
    %v4108 = vunpack.c.l.b16 %v3816
    %v4109 = vunpack.c.l.b16 %v3817
    %v4110 = vunpack.c.l.b16 %v3818
    %v4111 = vunpack.c.l.b16 %v3819
    %v4112 = vunpack.c.l.b16 %v3820
    %v4113 = vunpack.c.l.b16 %v3821
    %v4114 = vunpack.c.l.b16 %v3822
    %v4115 = vunpack.c.l.b16 %v3823
    %v4116 = vunpack.c.l.b16 %v3824
    %v4117 = vunpack.c.l.b16 %v3825
    %v4118 = vunpack.c.l.b16 %v3826
    %v4119 = vunpack.c.l.b16 %v3827
    %v4120 = vunpack.c.l.b16 %v3828
    %v4121 = vunpack.c.l.b16 %v3829
    %v4122 = vunpack.c.l.b16 %v3830
    %v4123 = vunpack.c.l.b16 %v3831
    %v4124 = vunpack.c.l.b16 %v3832
    %v4125 = vunpack.c.l.b16 %v3833
    %v4126 = vunpack.c.l.b16 %v3834
    %v4127 = vunpack.c.l.b16 %v3835
    %v4128 = vunpack.c.l.b16 %v3836
    %v4129 = vunpack.c.l.b16 %v3837
    %v4130 = vunpack.c.l.b16 %v3838
    %v4131 = vunpack.c.l.b16 %v3839
    %v4132 = vunpack.c.l.b16 %v3840
    %v4133 = vunpack.c.l.b16 %v3841
    %v4134 = vunpack.c.l.b16 %v3842
    %v4135 = vunpack.c.l.b16 %v3843
    %v4136 = vunpack.c.l.b16 %v3844
    %v4137 = vunpack.c.l.b16 %v3845
    %v4138 = vunpack.c.l.b16 %v3846
    %v4139 = vunpack.c.l.b16 %v3847
    %v4140 = vunpack.c.l.b16 %v3848
    %v4141 = vpack.c.b16 %v3998, %v3997
    %v4142 = vpack.c.b16 %v4000, %v3999
    %v4143 = vpack.c.b16 %v4002, %v4001
    %v4144 = vpack.c.b16 %v4004, %v4003
    %v4145 = vpack.c.b16 %v4006, %v4005
    %v4146 = vpack.c.b16 %v4008, %v4007
    %v4147 = vpack.c.b16 %v4010, %v4009
    %v4148 = vpack.c.b16 %v4012, %v4011
    %v4149 = vpack.c.b16 %v4014, %v4013
    %v4150 = vpack.c.b16 %v4016, %v4015
    %v4151 = vpack.c.b16 %v4018, %v4017
    %v4152 = vpack.c.b16 %v4020, %v4019
    %v4153 = vpack.c.b16 %v4022, %v4021
    %v4154 = vpack.c.b16 %v4024, %v4023
    %v4155 = vpack.c.b16 %v4026, %v4025
    %v4156 = vpack.c.b16 %v4028, %v4027
    %v4157 = vpack.c.b16 %v4030, %v4029
    %v4158 = vpack.c.b16 %v4032, %v4031
    %v4159 = vpack.c.b16 %v4034, %v4033
    %v4160 = vpack.c.b16 %v4036, %v4035
    %v4161 = vpack.c.b16 %v4038, %v4037
    %v4162 = vpack.c.b16 %v4040, %v4039
    %v4163 = vpack.c.b16 %v4042, %v4041
    %v4164 = vpack.c.b16 %v4044, %v4043
    %v4165 = vpack.c.b16 %v4046, %v4045
    %v4166 = vpack.c.b16 %v4048, %v4047
    %v4167 = vpack.c.b16 %v4050, %v4049
    %v4168 = vpack.c.b16 %v4052, %v4051
    %v4169 = vpack.c.b16 %v4054, %v4053
    %v4170 = vpack.c.b16 %v4056, %v4055
    %v4171 = vpack.c.b16 %v4058, %v4057
    %v4172 = vpack.c.b16 %v4060, %v4059
    %v4173 = vpack.c.b16 %v4062, %v4061
    %v4174 = vpack.c.b16 %v4064, %v4063
    %v4175 = vpack.c.b16 %v4066, %v4065
    %v4176 = vpack.c.b16 %v4068, %v4067
    %v4177 = vpack.c.b16 %v4070, %v4069
    %v4178 = vpack.c.b16 %v4072, %v4071
    %v4179 = vpack.c.b16 %v4074, %v4073
    %v4180 = vpack.c.b16 %v4076, %v4075
    %v4181 = vpack.c.b16 %v4078, %v4077
    %v4182 = vpack.c.b16 %v4080, %v4079
    %v4183 = vpack.c.b16 %v4082, %v4081
    %v4184 = vpack.c.b16 %v4084, %v4083
    %v4185 = vpack.c.b16 %v4086, %v4085
    %v4186 = vpack.c.b16 %v4088, %v4087
    %v4187 = vpack.c.b16 %v4090, %v4089
    %v4188 = vpack.c.b16 %v4092, %v4091
    %v4189 = vpack.c.b16 %v4094, %v4093
    %v4190 = vpack.c.b16 %v4096, %v4095
    %v4191 = vpack.c.b16 %v4098, %v4097
    %v4192 = vpack.c.b16 %v4100, %v4099
    %v4193 = vpack.c.b16 %v4102, %v4101
    %v4194 = vpack.c.b16 %v4104, %v4103
    %v4195 = vpack.c.b16 %v4106, %v4105
    %v4196 = vpack.c.b16 %v4108, %v4107
    %v4197 = vpack.c.b16 %v4110, %v4109
    %v4198 = vpack.c.b16 %v4112, %v4111
    %v4199 = vpack.c.b16 %v4114, %v4113
    %v4200 = vpack.c.b16 %v4116, %v4115
    %v4201 = vpack.c.b16 %v4118, %v4117
    %v4202 = vpack.c.b16 %v4120, %v4119
    %v4203 = vpack.c.b16 %v4122, %v4121
    %v4204 = vpack.c.b16 %v4124, %v4123
    %v4205 = vpack.c.b16 %v4126, %v4125
    %v4206 = vpack.c.b16 %v4128, %v4127
    %v4207 = vpack.c.b16 %v4130, %v4129
    %v4208 = vpack.c.b16 %v4132, %v4131
    %v4209 = vpack.c.b16 %v4134, %v4133
    %v4210 = vpack.c.b16 %v4136, %v4135
    %v4211 = vpack.c.b16 %v4138, %v4137
    %v4212 = vpack.c.b16 %v4140, %v4139
    %4285 = vmatpush.bf16.msra.mxu0 %v4148
    %4286 = vmatpush.bf16.msra.mxu0 %v4147
    %4287 = vmatpush.bf16.msra.mxu0 %v4146
    %4288 = vmatpush.bf16.msra.mxu0 %v4145
    %4289 = vmatpush.bf16.msra.mxu0 %v4144
    %4290 = vmatpush.bf16.msra.mxu0 %v4143
    %4291 = vmatpush.bf16.msra.mxu0 %v4142
    %4292 = vmatpush.bf16.msra.mxu0 %v4141
    %4293 = vmatmul.bf16.gmra.mxu0 %v3651
    %v4294 = vpop.f32.mrf.mxu0
    %v4295 = vadd.f32 %v3851, %v4294
    %v4296 = vpop.f32.mrf.mxu0
    %v4297 = vadd.f32 %v3851, %v4296
    %4298 = vmatmul.bf16.gmra.mxu0 %v3657
    %v4299 = vpop.f32.mrf.mxu0
    %v4300 = vadd.f32 %v3851, %v4299
    %v4301 = vpop.f32.mrf.mxu0
    %v4302 = vadd.f32 %v3851, %v4301
    %4303 = vmatmul.bf16.gmra.mxu0 %v3663
    %v4304 = vpop.f32.mrf.mxu0
    %v4305 = vadd.f32 %v3851, %v4304
    %v4306 = vpop.f32.mrf.mxu0
    %v4307 = vadd.f32 %v3851, %v4306
    %4308 = vmatmul.bf16.gmra.mxu0 %v3669
    %v4309 = vpop.f32.mrf.mxu0
    %v4310 = vadd.f32 %v3851, %v4309
    %v4311 = vpop.f32.mrf.mxu0
    %v4312 = vadd.f32 %v3851, %v4311
    %4313 = vmatmul.bf16.gmra.mxu0 %v3678
    %v4314 = vpop.f32.mrf.mxu0
    %v4315 = vadd.f32 %v3851, %v4314
    %v4316 = vpop.f32.mrf.mxu0
    %v4317 = vadd.f32 %v3851, %v4316
    %4318 = vmatmul.bf16.gmra.mxu0 %v3684
    %v4319 = vpop.f32.mrf.mxu0
    %v4320 = vadd.f32 %v3851, %v4319
    %v4321 = vpop.f32.mrf.mxu0
    %v4322 = vadd.f32 %v3851, %v4321
    %4323 = vmatmul.bf16.gmra.mxu0 %v3690
    %v4324 = vpop.f32.mrf.mxu0
    %v4325 = vadd.f32 %v3851, %v4324
    %v4326 = vpop.f32.mrf.mxu0
    %v4327 = vadd.f32 %v3851, %v4326
    %4328 = vmatmul.bf16.gmra.mxu0 %v3696
    %v4329 = vpop.f32.mrf.mxu0
    %v4330 = vadd.f32 %v3851, %v4329
    %v4331 = vpop.f32.mrf.mxu0
    %v4332 = vadd.f32 %v3851, %v4331
    %4333 = vdwg.mxu0
    %4334 = vmatpush.bf16.msra.mxu0 %v4156
    %4335 = vmatpush.bf16.msra.mxu0 %v4155
    %4336 = vmatpush.bf16.msra.mxu0 %v4154
    %4337 = vmatpush.bf16.msra.mxu0 %v4153
    %4338 = vmatpush.bf16.msra.mxu0 %v4152
    %4339 = vmatpush.bf16.msra.mxu0 %v4151
    %4340 = vmatpush.bf16.msra.mxu0 %v4150
    %4341 = vmatpush.bf16.msra.mxu0 %v4149
    %4342 = vmatmul.bf16.gmra.mxu0 %v3652
    %v4343 = vpop.f32.mrf.mxu0
    %v4344 = vadd.f32 %v4295, %v4343
    %v4345 = vpop.f32.mrf.mxu0
    %v4346 = vadd.f32 %v4297, %v4345
    %4347 = vmatmul.bf16.gmra.mxu0 %v3658
    %v4348 = vpop.f32.mrf.mxu0
    %v4349 = vadd.f32 %v4300, %v4348
    %v4350 = vpop.f32.mrf.mxu0
    %v4351 = vadd.f32 %v4302, %v4350
    %4352 = vmatmul.bf16.gmra.mxu0 %v3664
    %v4353 = vpop.f32.mrf.mxu0
    %v4354 = vadd.f32 %v4305, %v4353
    %v4355 = vpop.f32.mrf.mxu0
    %v4356 = vadd.f32 %v4307, %v4355
    %4357 = vmatmul.bf16.gmra.mxu0 %v3670
    %v4358 = vpop.f32.mrf.mxu0
    %v4359 = vadd.f32 %v4310, %v4358
    %v4360 = vpop.f32.mrf.mxu0
    %v4361 = vadd.f32 %v4312, %v4360
    %4362 = vmatmul.bf16.gmra.mxu0 %v3679
    %v4363 = vpop.f32.mrf.mxu0
    %v4364 = vadd.f32 %v4315, %v4363
    %v4365 = vpop.f32.mrf.mxu0
    %v4366 = vadd.f32 %v4317, %v4365
    %4367 = vmatmul.bf16.gmra.mxu0 %v3685
    %v4368 = vpop.f32.mrf.mxu0
    %v4369 = vadd.f32 %v4320, %v4368
    %v4370 = vpop.f32.mrf.mxu0
    %v4371 = vadd.f32 %v4322, %v4370
    %4372 = vmatmul.bf16.gmra.mxu0 %v3691
    %v4373 = vpop.f32.mrf.mxu0
    %v4374 = vadd.f32 %v4325, %v4373
    %v4375 = vpop.f32.mrf.mxu0
    %v4376 = vadd.f32 %v4327, %v4375
    %4377 = vmatmul.bf16.gmra.mxu0 %v3697
    %v4378 = vpop.f32.mrf.mxu0
    %v4379 = vadd.f32 %v4330, %v4378
    %v4380 = vpop.f32.mrf.mxu0
    %v4381 = vadd.f32 %v4332, %v4380
    %4382 = vdwg.mxu0
    %4383 = vmatpush.bf16.msra.mxu0 %v4164
    %4384 = vmatpush.bf16.msra.mxu0 %v4163
    %4385 = vmatpush.bf16.msra.mxu0 %v4162
    %4386 = vmatpush.bf16.msra.mxu0 %v4161
    %4387 = vmatpush.bf16.msra.mxu0 %v4160
    %4388 = vmatpush.bf16.msra.mxu0 %v4159
    %4389 = vmatpush.bf16.msra.mxu0 %v4158
    %4390 = vmatpush.bf16.msra.mxu0 %v4157
    %4391 = vmatmul.bf16.gmra.mxu0 %v3653
    %v4392 = vpop.f32.mrf.mxu0
    %v4393 = vadd.f32 %v4344, %v4392
    %v4394 = vpop.f32.mrf.mxu0
    %v4395 = vadd.f32 %v4346, %v4394
    %4396 = vmatmul.bf16.gmra.mxu0 %v3659
    %v4397 = vpop.f32.mrf.mxu0
    %v4398 = vadd.f32 %v4349, %v4397
    %v4399 = vpop.f32.mrf.mxu0
    %v4400 = vadd.f32 %v4351, %v4399
    %4401 = vmatmul.bf16.gmra.mxu0 %v3665
    %v4402 = vpop.f32.mrf.mxu0
    %v4403 = vadd.f32 %v4354, %v4402
    %v4404 = vpop.f32.mrf.mxu0
    %v4405 = vadd.f32 %v4356, %v4404
    %4406 = vmatmul.bf16.gmra.mxu0 %v3671
    %v4407 = vpop.f32.mrf.mxu0
    %v4408 = vadd.f32 %v4359, %v4407
    %v4409 = vpop.f32.mrf.mxu0
    %v4410 = vadd.f32 %v4361, %v4409
    %4411 = vmatmul.bf16.gmra.mxu0 %v3680
    %v4412 = vpop.f32.mrf.mxu0
    %v4413 = vadd.f32 %v4364, %v4412
    %v4414 = vpop.f32.mrf.mxu0
    %v4415 = vadd.f32 %v4366, %v4414
    %4416 = vmatmul.bf16.gmra.mxu0 %v3686
    %v4417 = vpop.f32.mrf.mxu0
    %v4418 = vadd.f32 %v4369, %v4417
    %v4419 = vpop.f32.mrf.mxu0
    %v4420 = vadd.f32 %v4371, %v4419
    %4421 = vmatmul.bf16.gmra.mxu0 %v3692
    %v4422 = vpop.f32.mrf.mxu0
    %v4423 = vadd.f32 %v4374, %v4422
    %v4424 = vpop.f32.mrf.mxu0
    %v4425 = vadd.f32 %v4376, %v4424
    %4426 = vmatmul.bf16.gmra.mxu0 %v3698
    %v4427 = vpop.f32.mrf.mxu0
    %v4428 = vadd.f32 %v4379, %v4427
    %v4429 = vpop.f32.mrf.mxu0
    %v4430 = vadd.f32 %v4381, %v4429
    %4431 = vdwg.mxu0
    %4432 = vmatpush.bf16.msra.mxu0 %v4172
    %4433 = vmatpush.bf16.msra.mxu0 %v4171
    %4434 = vmatpush.bf16.msra.mxu0 %v4170
    %4435 = vmatpush.bf16.msra.mxu0 %v4169
    %4436 = vmatpush.bf16.msra.mxu0 %v4168
    %4437 = vmatpush.bf16.msra.mxu0 %v4167
    %4438 = vmatpush.bf16.msra.mxu0 %v4166
    %4439 = vmatpush.bf16.msra.mxu0 %v4165
    %4440 = vmatmul.bf16.gmra.mxu0 %v3654
    %v4441 = vpop.f32.mrf.mxu0
    %v4442 = vadd.f32 %v4393, %v4441
    %v4443 = vpop.f32.mrf.mxu0
    %v4444 = vadd.f32 %v4395, %v4443
    %4445 = vmatmul.bf16.gmra.mxu0 %v3660
    %v4446 = vpop.f32.mrf.mxu0
    %v4447 = vadd.f32 %v4398, %v4446
    %v4448 = vpop.f32.mrf.mxu0
    %v4449 = vadd.f32 %v4400, %v4448
    %4450 = vmatmul.bf16.gmra.mxu0 %v3666
    %v4451 = vpop.f32.mrf.mxu0
    %v4452 = vadd.f32 %v4403, %v4451
    %v4453 = vpop.f32.mrf.mxu0
    %v4454 = vadd.f32 %v4405, %v4453
    %4455 = vmatmul.bf16.gmra.mxu0 %v3672
    %v4456 = vpop.f32.mrf.mxu0
    %v4457 = vadd.f32 %v4408, %v4456
    %v4458 = vpop.f32.mrf.mxu0
    %v4459 = vadd.f32 %v4410, %v4458
    %4460 = vmatmul.bf16.gmra.mxu0 %v3681
    %v4461 = vpop.f32.mrf.mxu0
    %v4462 = vadd.f32 %v4413, %v4461
    %v4463 = vpop.f32.mrf.mxu0
    %v4464 = vadd.f32 %v4415, %v4463
    %4465 = vmatmul.bf16.gmra.mxu0 %v3687
    %v4466 = vpop.f32.mrf.mxu0
    %v4467 = vadd.f32 %v4418, %v4466
    %v4468 = vpop.f32.mrf.mxu0
    %v4469 = vadd.f32 %v4420, %v4468
    %4470 = vmatmul.bf16.gmra.mxu0 %v3693
    %v4471 = vpop.f32.mrf.mxu0
    %v4472 = vadd.f32 %v4423, %v4471
    %v4473 = vpop.f32.mrf.mxu0
    %v4474 = vadd.f32 %v4425, %v4473
    %4475 = vmatmul.bf16.gmra.mxu0 %v3699
    %v4476 = vpop.f32.mrf.mxu0
    %v4477 = vadd.f32 %v4428, %v4476
    %v4478 = vpop.f32.mrf.mxu0
    %v4479 = vadd.f32 %v4430, %v4478
    %4480 = vdwg.mxu0
    %4481 = vmatpush.bf16.msra.mxu0 %v4180
    %4482 = vmatpush.bf16.msra.mxu0 %v4179
    %4483 = vmatpush.bf16.msra.mxu0 %v4178
    %4484 = vmatpush.bf16.msra.mxu0 %v4177
    %4485 = vmatpush.bf16.msra.mxu0 %v4176
    %4486 = vmatpush.bf16.msra.mxu0 %v4175
    %4487 = vmatpush.bf16.msra.mxu0 %v4174
    %4488 = vmatpush.bf16.msra.mxu0 %v4173
    %4489 = vmatmul.bf16.gmra.mxu0 %v3655
    %v4490 = vpop.f32.mrf.mxu0
    %v4491 = vadd.f32 %v4442, %v4490
    %v4492 = vpop.f32.mrf.mxu0
    %v4493 = vadd.f32 %v4444, %v4492
    %4494 = vmatmul.bf16.gmra.mxu0 %v3661
    %v4495 = vpop.f32.mrf.mxu0
    %v4496 = vadd.f32 %v4447, %v4495
    %v4497 = vpop.f32.mrf.mxu0
    %v4498 = vadd.f32 %v4449, %v4497
    %4499 = vmatmul.bf16.gmra.mxu0 %v3667
    %v4500 = vpop.f32.mrf.mxu0
    %v4501 = vadd.f32 %v4452, %v4500
    %v4502 = vpop.f32.mrf.mxu0
    %v4503 = vadd.f32 %v4454, %v4502
    %4504 = vmatmul.bf16.gmra.mxu0 %v3673
    %v4505 = vpop.f32.mrf.mxu0
    %v4506 = vadd.f32 %v4457, %v4505
    %v4507 = vpop.f32.mrf.mxu0
    %v4508 = vadd.f32 %v4459, %v4507
    %4509 = vmatmul.bf16.gmra.mxu0 %v3682
    %v4510 = vpop.f32.mrf.mxu0
    %v4511 = vadd.f32 %v4462, %v4510
    %v4512 = vpop.f32.mrf.mxu0
    %v4513 = vadd.f32 %v4464, %v4512
    %4514 = vmatmul.bf16.gmra.mxu0 %v3688
    %v4515 = vpop.f32.mrf.mxu0
    %v4516 = vadd.f32 %v4467, %v4515
    %v4517 = vpop.f32.mrf.mxu0
    %v4518 = vadd.f32 %v4469, %v4517
    %4519 = vmatmul.bf16.gmra.mxu0 %v3694
    %v4520 = vpop.f32.mrf.mxu0
    %v4521 = vadd.f32 %v4472, %v4520
    %v4522 = vpop.f32.mrf.mxu0
    %v4523 = vadd.f32 %v4474, %v4522
    %4524 = vmatmul.bf16.gmra.mxu0 %v3700
    %v4525 = vpop.f32.mrf.mxu0
    %v4526 = vadd.f32 %v4477, %v4525
    %v4527 = vpop.f32.mrf.mxu0
    %v4528 = vadd.f32 %v4479, %v4527
    %4529 = vdwg.mxu0
    %4530 = vmatpush.bf16.msra.mxu0 %v4188
    %4531 = vmatpush.bf16.msra.mxu0 %v4187
    %4532 = vmatpush.bf16.msra.mxu0 %v4186
    %4533 = vmatpush.bf16.msra.mxu0 %v4185
    %4534 = vmatpush.bf16.msra.mxu0 %v4184
    %4535 = vmatpush.bf16.msra.mxu0 %v4183
    %4536 = vmatpush.bf16.msra.mxu0 %v4182
    %4537 = vmatpush.bf16.msra.mxu0 %v4181
    %4538 = vmatmul.bf16.gmra.mxu0 %v3656
    %v4539 = vpop.f32.mrf.mxu0
    %v4540 = vadd.f32 %v4491, %v4539
    %v4541 = vpop.f32.mrf.mxu0
    %v4542 = vadd.f32 %v4493, %v4541
    %4543 = vmatmul.bf16.gmra.mxu0 %v3662
    %v4544 = vpop.f32.mrf.mxu0
    %v4545 = vadd.f32 %v4496, %v4544
    %v4546 = vpop.f32.mrf.mxu0
    %v4547 = vadd.f32 %v4498, %v4546
    %4548 = vmatmul.bf16.gmra.mxu0 %v3668
    %v4549 = vpop.f32.mrf.mxu0
    %v4550 = vadd.f32 %v4501, %v4549
    %v4551 = vpop.f32.mrf.mxu0
    %v4552 = vadd.f32 %v4503, %v4551
    %4553 = vmatmul.bf16.gmra.mxu0 %v3674
    %v4554 = vpop.f32.mrf.mxu0
    %v4555 = vadd.f32 %v4506, %v4554
    %v4556 = vpop.f32.mrf.mxu0
    %v4557 = vadd.f32 %v4508, %v4556
    %4558 = vmatmul.bf16.gmra.mxu0 %v3683
    %v4559 = vpop.f32.mrf.mxu0
    %v4560 = vadd.f32 %v4511, %v4559
    %v4561 = vpop.f32.mrf.mxu0
    %v4562 = vadd.f32 %v4513, %v4561
    %4563 = vmatmul.bf16.gmra.mxu0 %v3689
    %v4564 = vpop.f32.mrf.mxu0
    %v4565 = vadd.f32 %v4516, %v4564
    %v4566 = vpop.f32.mrf.mxu0
    %v4567 = vadd.f32 %v4518, %v4566
    %4568 = vmatmul.bf16.gmra.mxu0 %v3695
    %v4569 = vpop.f32.mrf.mxu0
    %v4570 = vadd.f32 %v4521, %v4569
    %v4571 = vpop.f32.mrf.mxu0
    %v4572 = vadd.f32 %v4523, %v4571
    %4573 = vmatmul.bf16.gmra.mxu0 %v3701
    %v4574 = vpop.f32.mrf.mxu0
    %v4575 = vadd.f32 %v4526, %v4574
    %v4576 = vpop.f32.mrf.mxu0
    %v4577 = vadd.f32 %v4528, %v4576
    %4578 = vdwg.mxu0
    %4579 = vmatpush.bf16.msra.mxu0 %v4196
    %4580 = vmatpush.bf16.msra.mxu0 %v4195
    %4581 = vmatpush.bf16.msra.mxu0 %v4194
    %4582 = vmatpush.bf16.msra.mxu0 %v4193
    %4583 = vmatpush.bf16.msra.mxu0 %v4192
    %4584 = vmatpush.bf16.msra.mxu0 %v4191
    %4585 = vmatpush.bf16.msra.mxu0 %v4190
    %4586 = vmatpush.bf16.msra.mxu0 %v4189
    %4587 = vmatmul.bf16.gmra.mxu0 %v3657
    %v4588 = vpop.f32.mrf.mxu0
    %v4589 = vadd.f32 %v4540, %v4588
    %v4590 = vpop.f32.mrf.mxu0
    %v4591 = vadd.f32 %v4542, %v4590
    %4592 = vmatmul.bf16.gmra.mxu0 %v3663
    %v4593 = vpop.f32.mrf.mxu0
    %v4594 = vadd.f32 %v4545, %v4593
    %v4595 = vpop.f32.mrf.mxu0
    %v4596 = vadd.f32 %v4547, %v4595
    %4597 = vmatmul.bf16.gmra.mxu0 %v3669
    %v4598 = vpop.f32.mrf.mxu0
    %v4599 = vadd.f32 %v4550, %v4598
    %v4600 = vpop.f32.mrf.mxu0
    %v4601 = vadd.f32 %v4552, %v4600
    %4602 = vmatmul.bf16.gmra.mxu0 %v3675
    %v4603 = vpop.f32.mrf.mxu0
    %v4604 = vadd.f32 %v4555, %v4603
    %v4605 = vpop.f32.mrf.mxu0
    %v4606 = vadd.f32 %v4557, %v4605
    %4607 = vmatmul.bf16.gmra.mxu0 %v3684
    %v4608 = vpop.f32.mrf.mxu0
    %v4609 = vadd.f32 %v4560, %v4608
    %v4610 = vpop.f32.mrf.mxu0
    %v4611 = vadd.f32 %v4562, %v4610
    %4612 = vmatmul.bf16.gmra.mxu0 %v3690
    %v4613 = vpop.f32.mrf.mxu0
    %v4614 = vadd.f32 %v4565, %v4613
    %v4615 = vpop.f32.mrf.mxu0
    %v4616 = vadd.f32 %v4567, %v4615
    %4617 = vmatmul.bf16.gmra.mxu0 %v3696
    %v4618 = vpop.f32.mrf.mxu0
    %v4619 = vadd.f32 %v4570, %v4618
    %v4620 = vpop.f32.mrf.mxu0
    %v4621 = vadd.f32 %v4572, %v4620
    %4622 = vmatmul.bf16.gmra.mxu0 %v3702
    %v4623 = vpop.f32.mrf.mxu0
    %v4624 = vadd.f32 %v4575, %v4623
    %v4625 = vpop.f32.mrf.mxu0
    %v4626 = vadd.f32 %v4577, %v4625
    %4627 = vdwg.mxu0
    %4628 = vmatpush.bf16.msra.mxu0 %v4204
    %4629 = vmatpush.bf16.msra.mxu0 %v4203
    %4630 = vmatpush.bf16.msra.mxu0 %v4202
    %4631 = vmatpush.bf16.msra.mxu0 %v4201
    %4632 = vmatpush.bf16.msra.mxu0 %v4200
    %4633 = vmatpush.bf16.msra.mxu0 %v4199
    %4634 = vmatpush.bf16.msra.mxu0 %v4198
    %4635 = vmatpush.bf16.msra.mxu0 %v4197
    %4636 = vmatmul.bf16.gmra.mxu0 %v3658
    %v4637 = vpop.f32.mrf.mxu0
    %v4638 = vadd.f32 %v4589, %v4637
    %v4639 = vpop.f32.mrf.mxu0
    %v4640 = vadd.f32 %v4591, %v4639
    %4641 = vmatmul.bf16.gmra.mxu0 %v3664
    %v4642 = vpop.f32.mrf.mxu0
    %v4643 = vadd.f32 %v4594, %v4642
    %v4644 = vpop.f32.mrf.mxu0
    %v4645 = vadd.f32 %v4596, %v4644
    %4646 = vmatmul.bf16.gmra.mxu0 %v3670
    %v4647 = vpop.f32.mrf.mxu0
    %v4648 = vadd.f32 %v4599, %v4647
    %v4649 = vpop.f32.mrf.mxu0
    %v4650 = vadd.f32 %v4601, %v4649
    %4651 = vmatmul.bf16.gmra.mxu0 %v3676
    %v4652 = vpop.f32.mrf.mxu0
    %v4653 = vadd.f32 %v4604, %v4652
    %v4654 = vpop.f32.mrf.mxu0
    %v4655 = vadd.f32 %v4606, %v4654
    %4656 = vmatmul.bf16.gmra.mxu0 %v3685
    %v4657 = vpop.f32.mrf.mxu0
    %v4658 = vadd.f32 %v4609, %v4657
    %v4659 = vpop.f32.mrf.mxu0
    %v4660 = vadd.f32 %v4611, %v4659
    %4661 = vmatmul.bf16.gmra.mxu0 %v3691
    %v4662 = vpop.f32.mrf.mxu0
    %v4663 = vadd.f32 %v4614, %v4662
    %v4664 = vpop.f32.mrf.mxu0
    %v4665 = vadd.f32 %v4616, %v4664
    %4666 = vmatmul.bf16.gmra.mxu0 %v3697
    %v4667 = vpop.f32.mrf.mxu0
    %v4668 = vadd.f32 %v4619, %v4667
    %v4669 = vpop.f32.mrf.mxu0
    %v4670 = vadd.f32 %v4621, %v4669
    %4671 = vmatmul.bf16.gmra.mxu0 %v3703
    %v4672 = vpop.f32.mrf.mxu0
    %v4673 = vadd.f32 %v4624, %v4672
    %v4674 = vpop.f32.mrf.mxu0
    %v4675 = vadd.f32 %v4626, %v4674
    %4676 = vdwg.mxu0
    %4677 = vmatpush.bf16.msra.mxu0 %v4212
    %4678 = vmatpush.bf16.msra.mxu0 %v4211
    %4679 = vmatpush.bf16.msra.mxu0 %v4210
    %4680 = vmatpush.bf16.msra.mxu0 %v4209
    %4681 = vmatpush.bf16.msra.mxu0 %v4208
    %4682 = vmatpush.bf16.msra.mxu0 %v4207
    %4683 = vmatpush.bf16.msra.mxu0 %v4206
    %4684 = vmatpush.bf16.msra.mxu0 %v4205
    %4685 = vmatmul.bf16.gmra.mxu0 %v3659
    %v4686 = vpop.f32.mrf.mxu0
    %v4687 = vadd.f32 %v4638, %v4686
    %v4688 = vpop.f32.mrf.mxu0
    %v4689 = vadd.f32 %v4640, %v4688
    %4690 = vmatmul.bf16.gmra.mxu0 %v3665
    %v4691 = vpop.f32.mrf.mxu0
    %v4692 = vadd.f32 %v4643, %v4691
    %v4693 = vpop.f32.mrf.mxu0
    %v4694 = vadd.f32 %v4645, %v4693
    %4695 = vmatmul.bf16.gmra.mxu0 %v3671
    %v4696 = vpop.f32.mrf.mxu0
    %v4697 = vadd.f32 %v4648, %v4696
    %v4698 = vpop.f32.mrf.mxu0
    %v4699 = vadd.f32 %v4650, %v4698
    %4700 = vmatmul.bf16.gmra.mxu0 %v3677
    %v4701 = vpop.f32.mrf.mxu0
    %v4702 = vadd.f32 %v4653, %v4701
    %v4703 = vpop.f32.mrf.mxu0
    %v4704 = vadd.f32 %v4655, %v4703
    %4705 = vmatmul.bf16.gmra.mxu0 %v3686
    %v4706 = vpop.f32.mrf.mxu0
    %v4707 = vadd.f32 %v4658, %v4706
    %v4708 = vpop.f32.mrf.mxu0
    %v4709 = vadd.f32 %v4660, %v4708
    %4710 = vmatmul.bf16.gmra.mxu0 %v3692
    %v4711 = vpop.f32.mrf.mxu0
    %v4712 = vadd.f32 %v4663, %v4711
    %v4713 = vpop.f32.mrf.mxu0
    %v4714 = vadd.f32 %v4665, %v4713
    %4715 = vmatmul.bf16.gmra.mxu0 %v3698
    %v4716 = vpop.f32.mrf.mxu0
    %v4717 = vadd.f32 %v4668, %v4716
    %v4718 = vpop.f32.mrf.mxu0
    %v4719 = vadd.f32 %v4670, %v4718
    %4720 = vmatmul.bf16.gmra.mxu0 %v3704
    %v4721 = vpop.f32.mrf.mxu0
    %v4722 = vadd.f32 %v4673, %v4721
    %v4723 = vpop.f32.mrf.mxu0
    %v4724 = vadd.f32 %v4675, %v4723
    %4725 = vdwg.mxu0
    %v4726 = vadd.f32 %v4687, %v2416
    %v4727 = vadd.f32 %v4689, %v2417
    %v4728 = vadd.f32 %v4692, %v2418
    %v4729 = vadd.f32 %v4694, %v2419
    %v4730 = vadd.f32 %v4697, %v2420
    %v4731 = vadd.f32 %v4699, %v2421
    %v4732 = vadd.f32 %v4702, %v2422
    %v4733 = vadd.f32 %v4704, %v2423
    %v4734 = vadd.f32 %v4707, %v2424
    %v4735 = vadd.f32 %v4709, %v2425
    %v4736 = vadd.f32 %v4712, %v2426
    %v4737 = vadd.f32 %v4714, %v2427
    %v4738 = vadd.f32 %v4717, %v2428
    %v4739 = vadd.f32 %v4719, %v2429
    %v4740 = vadd.f32 %v4722, %v2430
    %v4741 = vadd.f32 %v4724, %v2431
    %v4742 = vmax.f32 %v4726, 0.0
    %v4743 = vmax.f32 %v4727, 0.0
    %v4744 = vmax.f32 %v4728, 0.0
    %v4745 = vmax.f32 %v4729, 0.0
    %v4746 = vmax.f32 %v4730, 0.0
    %v4747 = vmax.f32 %v4731, 0.0
    %v4748 = vmax.f32 %v4732, 0.0
    %v4749 = vmax.f32 %v4733, 0.0
    %v4750 = vmax.f32 %v4734, 0.0
    %v4751 = vmax.f32 %v4735, 0.0
    %v4752 = vmax.f32 %v4736, 0.0
    %v4753 = vmax.f32 %v4737, 0.0
    %v4754 = vmax.f32 %v4738, 0.0
    %v4755 = vmax.f32 %v4739, 0.0
    %v4756 = vmax.f32 %v4740, 0.0
    %v4757 = vmax.f32 %v4741, 0.0
    %4758 = vst [vmem:[#allocation2] sm:$0xff] %v4742
    %4759 = vst [vmem:[#allocation2 + $0x8] sm:$0xff] %v4743
    %4760 = vst [vmem:[#allocation2 + $0x10] sm:$0xff] %v4744
    %4761 = vst [vmem:[#allocation2 + $0x18] sm:$0xff] %v4745
    %4762 = vst [vmem:[#allocation2 + $0x20] sm:$0xff] %v4746
    %4763 = vst [vmem:[#allocation2 + $0x28] sm:$0xff] %v4747
    %4764 = vst [vmem:[#allocation2 + $0x30] sm:$0xff] %v4748
    %4765 = vst [vmem:[#allocation2 + $0x38] sm:$0xff] %v4749
    %4766 = vst [vmem:[#allocation2 + $0x40] sm:$0xff] %v4750
    %4767 = vst [vmem:[#allocation2 + $0x48] sm:$0xff] %v4751
    %4768 = vst [vmem:[#allocation2 + $0x50] sm:$0xff] %v4752
    %4769 = vst [vmem:[#allocation2 + $0x58] sm:$0xff] %v4753
    %4770 = vst [vmem:[#allocation2 + $0x60] sm:$0xff] %v4754
    %4771 = vst [vmem:[#allocation2 + $0x68] sm:$0xff] %v4755
    %4772 = vst [vmem:[#allocation2 + $0x70] sm:$0xff] %v4756
    %4773 = vst [vmem:[#allocation2 + $0x78] sm:$0xff] %v4757
    // Predicated region
    $region38: #{feature_extractor_modified.1} parent=1 // pred_check
      _
    $region39: #{feature_extractor_modified.1} parent=1 // pred_check_branch
      %4775 = sbr.rel (0) target = $region41
    $region40: #{feature_extractor_modified.1} parent=1 // pred_region
      %4777 = vsyncadd [#allocation3], 0
      %s4778 = sshll.u32 [#allocation2], 4
      %s4779 = int_to_ptr.vmem [resolvable:$true] %s4778
      %s4780 = sshll.u32 %s9, 4
      %s4781 = int_to_ptr.hbm [resolvable:$true] %s4780
      %4786 = dma.vmem_to_hbm [thread:$0]  %s4779, 2048, %s4781, [#allocation3], 128, 128, 8
    $region41: #{feature_extractor_modified.1} parent=1 // pred_fallthru
      _
    // Predicated region
    $region42: #{feature_extractor_modified.1} parent=1 // pred_check
      _
    $region43: #{feature_extractor_modified.1} parent=1 // pred_check_branch
      %4788 = sbr.rel (0) target = $region45
    $region44: #{feature_extractor_modified.1} parent=1 // pred_region
      %4790 = dma.done [#allocation3], 2048
    $region45: #{feature_extractor_modified.1} parent=1 // pred_fallthru
      _
    %4791 = vsyncpa [#allocation3], 1

</llo_original>
